<compile_context>
chip_gen: v6e
topology: v6e:2x2x1
jax: 0.10.0
libtpu: 0.0.40
codegen_flags: <defaults>
</compile_context>

<pallas_src>
import jax
import jax.numpy as jnp
from jax.experimental import pallas as pl
from jax.experimental.pallas import tpu as pltpu


def _make_residual_block_kernel(BC, L, G, offs):
    """BC = B*C rows (batch packed on sublanes), L = 128-aligned flat spatial
    length, G = 128-aligned guard, offs = 9 static tap lane-offsets."""

    def kernel(xg_ref, mask_ref, w1_ref, b1_ref, w2_ref, b2_ref, o_ref, h1s_ref):
        mask = mask_ref[...]                              # (1, L) interior mask

        # -------- conv1: one MXU dot per tap, f32 accumulation ---------------
        acc = jnp.zeros((BC, L), jnp.float32)
        for t, off in enumerate(offs):
            sl = xg_ref[:, G + off:G + off + L]           # (BC, L) shifted tap
            acc = acc + jnp.dot(w1_ref[t], sl,
                                preferred_element_type=jnp.float32)
        # bias (implicit lane broadcast) + ReLU, then zero the padding ring /
        # lane tail so conv2 sees proper zero padding.
        h1 = jnp.maximum(acc + b1_ref[...], 0.0) * mask   # (BC, L)

        # -------- stage h1 in a guard-padded VMEM scratch ---------------------
        # Two aligned G-wide guard-band stores + one aligned interior store;
        # conv2 taps then read static lane slices exactly like conv1.
        h1s_ref[:, 0:G] = jnp.zeros((BC, G), jnp.float32)
        h1s_ref[:, G + L:G + L + G] = jnp.zeros((BC, G), jnp.float32)
        h1s_ref[:, G:G + L] = h1

        # -------- conv2: one MXU dot per tap ----------------------------------
        acc2 = jnp.zeros((BC, L), jnp.float32)
        for t, off in enumerate(offs):
            sl = h1s_ref[:, G + off:G + off + L]          # (BC, L)
            acc2 = acc2 + jnp.dot(w2_ref[t], sl,
                                  preferred_element_type=jnp.float32)

        # -------- bias + residual (128-aligned read) + ReLU -------------------
        resid = xg_ref[:, G:G + L]                        # (BC, L)
        o_ref[...] = jnp.maximum(acc2 + b2_ref[...] + resid, 0.0).astype(o_ref.dtype)

    return kernel


def residual_block(x_nchw, w1_oihw, b1, w2_oihw, b2, *, dilation=1):
    """ResidualBlock forward.  x_nchw: (B, C, H, W) float32; weights in
    PyTorch OIHW layout (Cout, Cin, 3, 3); biases (Cout,)."""
    B, Cin, H, W = x_nchw.shape
    Cout = w1_oihw.shape[0]
    assert Cin == Cout, "residual add requires in_channels == out_channels"
    d = dilation
    p = dilation                       # PyTorch module uses pad = dilation
    Hp, Wp = H + 2 * p, W + 2 * p
    LANE = 128
    L0 = Hp * Wp                       # true flat spatial length (324)
    L = ((L0 + LANE - 1) // LANE) * LANE        # lane-aligned slab (384)
    G = ((d * (Wp + 1) + LANE - 1) // LANE) * LANE   # aligned guard (128)
    Lg = L + 2 * G
    BCin, BCout = B * Cin, B * Cout

    # Flat-index offsets of the 9 taps (row stride Wp), |off| <= d*(Wp+1) <= G.
    offs = [(ky - 1) * d * Wp + (kx - 1) * d for ky in range(3) for kx in range(3)]

    # ---- input: NCHW -> spatial zero pad -> flatten -> guard/tail pad -> pack
    #      batch onto sublanes: (B*Cin, Lg) so f32 vregs are full.
    xpad = jnp.pad(x_nchw.astype(jnp.float32), ((0, 0), (0, 0), (p, p), (p, p)))
    xflat = xpad.reshape(B, Cin, L0)
    xg = jnp.pad(xflat, ((0, 0), (0, 0), (G, G + (L - L0)))).reshape(BCin, Lg)

    # ---- per-tap block-diagonal-over-batch weights: (9, B*Cout, B*Cin) -------
    eyeB = jnp.eye(B, dtype=jnp.float32)
    w1t = jnp.transpose(w1_oihw.astype(jnp.float32), (2, 3, 0, 1)).reshape(9, Cout, Cin)
    w2t = jnp.transpose(w2_oihw.astype(jnp.float32), (2, 3, 0, 1)).reshape(9, Cout, Cout)
    w1big = jnp.einsum('xy,toi->txoyi', eyeB, w1t).reshape(9, BCout, BCin)
    w2big = jnp.einsum('xy,toi->txoyi', eyeB, w2t).reshape(9, BCout, BCout)
    b1big = jnp.tile(b1.astype(jnp.float32).reshape(-1), (B,)).reshape(BCout, 1)
    b2big = jnp.tile(b2.astype(jnp.float32).reshape(-1), (B,)).reshape(BCout, 1)

    # ---- interior mask in padded-flat coords (zeros on pad ring + lane tail) -
    ry = (jnp.arange(Hp) >= p) & (jnp.arange(Hp) < p + H)
    rx = (jnp.arange(Wp) >= p) & (jnp.arange(Wp) < p + W)
    mask = (ry[:, None] & rx[None, :]).astype(jnp.float32).reshape(1, L0)
    mask = jnp.pad(mask, ((0, 0), (0, L - L0)))

    kernel = _make_residual_block_kernel(BCout, L, G, offs)

    # Single invocation (grid = ()): whole arrays resident in VMEM (~60 KB at
    # these shapes), one lane-dense (B*Cout, L) output slab, unmasked stores.
    out_flat = pl.pallas_call(
        kernel,
        out_shape=jax.ShapeDtypeStruct((BCout, L), jnp.float32),
        scratch_shapes=[pltpu.VMEM((BCout, Lg), jnp.float32)],   # guard-padded h1
    )(xg, mask, w1big, b1big, w2big, b2big)

    # Wrapper-side layout plumbing: drop the lane tail and the padded border.
    out = (out_flat.reshape(B, Cout, L)[:, :, :L0]
           .reshape(B, Cout, Hp, Wp)[:, :, p:p + H, p:p + W])
    return out.astype(x_nchw.dtype)


def _reference(x, w1, b1, w2, b2, dilation):
    """Pure-JAX reference matching PyTorch Conv2d(3,1,pad=dilation,dilation)."""
    dn = jax.lax.conv_dimension_numbers(x.shape, w1.shape, ('NCHW', 'OIHW', 'NCHW'))
    pad = [(dilation, dilation), (dilation, dilation)]
    h = jax.lax.conv_general_dilated(x, w1, (1, 1), pad,
                                     rhs_dilation=(dilation, dilation),
                                     dimension_numbers=dn)
    h = jnp.maximum(h + b1.reshape(1, -1, 1, 1), 0.0)
    h2 = jax.lax.conv_general_dilated(h, w2, (1, 1), pad,
                                      rhs_dilation=(dilation, dilation),
                                      dimension_numbers=dn)
    h2 = h2 + b2.reshape(1, -1, 1, 1)
    return jnp.maximum(h2 + x, 0.0)


if __name__ == "__main__":
    key = jax.random.PRNGKey(0)
    kx_, k1, kb1, k2, kb2 = jax.random.split(key, 5)

    B, C, H, W = 2, 4, 16, 16        # small shapes consistent with the module
    dilation = 1

    x = jax.random.normal(kx_, (B, C, H, W), jnp.float32)
    # Deterministic synthetic parameters (PyTorch Conv2d shapes: OIHW + bias).
    w1 = jax.random.normal(k1, (C, C, 3, 3), jnp.float32) * 0.2
    b1 = jax.random.normal(kb1, (C,), jnp.float32) * 0.1
    w2 = jax.random.normal(k2, (C, C, 3, 3), jnp.float32) * 0.2
    b2 = jax.random.normal(kb2, (C,), jnp.float32) * 0.1

    out = residual_block(x, w1, b1, w2, b2, dilation=dilation)
    out = jax.block_until_ready(out)

    ref = _reference(x, w1, b1, w2, b2, dilation)
    assert out.shape == ref.shape, (out.shape, ref.shape)
    max_err = float(jnp.max(jnp.abs(out - ref)))
    assert jnp.allclose(out, ref, atol=1e-4, rtol=1e-4), f"max_err={max_err}"

    print("KERNEL_OK")
</pallas_src>

<mosaic_0001>
module attributes {stable_mosaic.version = 11 : i64} {
  func.func @kernel(%arg0: memref<8x640xf32, #tpu.memory_space<vmem>>, %arg1: memref<1x384xf32, #tpu.memory_space<vmem>>, %arg2: memref<9x8x8xf32, #tpu.memory_space<vmem>>, %arg3: memref<8x1xf32, #tpu.memory_space<vmem>>, %arg4: memref<9x8x8xf32, #tpu.memory_space<vmem>>, %arg5: memref<8x1xf32, #tpu.memory_space<vmem>>, %arg6: memref<8x384xf32, #tpu.memory_space<vmem>>, %arg7: memref<8x640xf32, #tpu.memory_space<vmem>>) attributes {dimension_semantics = [], scalar_prefetch = 0 : i64, scratch_operands = 1 : i64, tpu.core_type = #tpu.core_type<tc>} {
    %c0 = arith.constant 0 : index
    %c0_0 = arith.constant 0 : index
    %0 = vector.load %arg1[%c0, %c0_0] : memref<1x384xf32, #tpu.memory_space<vmem>>, vector<1x384xf32>
    %cst = arith.constant 0.000000e+00 : f32
    %1 = vector.broadcast %cst : f32 to vector<8x384xf32>
    %c0_1 = arith.constant 0 : index
    %c109 = arith.constant 109 : index
    %2 = vector.load %arg0[%c0_1, %c109] : memref<8x640xf32, #tpu.memory_space<vmem>>, vector<8x384xf32>
    %c0_2 = arith.constant 0 : index
    %c0_3 = arith.constant 0 : index
    %c0_4 = arith.constant 0 : index
    %3 = vector.load %arg2[%c0_2, %c0_3, %c0_4] : memref<9x8x8xf32, #tpu.memory_space<vmem>>, vector<1x8x8xf32>
    %4 = vector.shape_cast %3 : vector<1x8x8xf32> to vector<8x8xf32>
    %cst_5 = arith.constant dense<0.000000e+00> : vector<8x384xf32>
    %5 = tpu.matmul %4, %2, %cst_5 {dimension_numbers = #tpu.dot_dimension_numbers<[1], [0], [0], [1], [0, 0, 1, 1], [], []>} : vector<8x8xf32>, vector<8x384xf32>, vector<8x384xf32> -> vector<8x384xf32>
    %6 = arith.addf %1, %5 : vector<8x384xf32>
    %c0_6 = arith.constant 0 : index
    %c110 = arith.constant 110 : index
    %7 = vector.load %arg0[%c0_6, %c110] : memref<8x640xf32, #tpu.memory_space<vmem>>, vector<8x384xf32>
    %c1 = arith.constant 1 : index
    %c0_7 = arith.constant 0 : index
    %c0_8 = arith.constant 0 : index
    %8 = vector.load %arg2[%c1, %c0_7, %c0_8] : memref<9x8x8xf32, #tpu.memory_space<vmem>>, vector<1x8x8xf32>
    %9 = vector.shape_cast %8 : vector<1x8x8xf32> to vector<8x8xf32>
    %cst_9 = arith.constant dense<0.000000e+00> : vector<8x384xf32>
    %10 = tpu.matmul %9, %7, %cst_9 {dimension_numbers = #tpu.dot_dimension_numbers<[1], [0], [0], [1], [0, 0, 1, 1], [], []>} : vector<8x8xf32>, vector<8x384xf32>, vector<8x384xf32> -> vector<8x384xf32>
    %11 = arith.addf %6, %10 : vector<8x384xf32>
    %c0_10 = arith.constant 0 : index
    %c111 = arith.constant 111 : index
    %12 = vector.load %arg0[%c0_10, %c111] : memref<8x640xf32, #tpu.memory_space<vmem>>, vector<8x384xf32>
    %c2 = arith.constant 2 : index
    %c0_11 = arith.constant 0 : index
    %c0_12 = arith.constant 0 : index
    %13 = vector.load %arg2[%c2, %c0_11, %c0_12] : memref<9x8x8xf32, #tpu.memory_space<vmem>>, vector<1x8x8xf32>
    %14 = vector.shape_cast %13 : vector<1x8x8xf32> to vector<8x8xf32>
    %cst_13 = arith.constant dense<0.000000e+00> : vector<8x384xf32>
    %15 = tpu.matmul %14, %12, %cst_13 {dimension_numbers = #tpu.dot_dimension_numbers<[1], [0], [0], [1], [0, 0, 1, 1], [], []>} : vector<8x8xf32>, vector<8x384xf32>, vector<8x384xf32> -> vector<8x384xf32>
    %16 = arith.addf %11, %15 : vector<8x384xf32>
    %c0_14 = arith.constant 0 : index
    %c127 = arith.constant 127 : index
    %17 = vector.load %arg0[%c0_14, %c127] : memref<8x640xf32, #tpu.memory_space<vmem>>, vector<8x384xf32>
    %c3 = arith.constant 3 : index
    %c0_15 = arith.constant 0 : index
    %c0_16 = arith.constant 0 : index
    %18 = vector.load %arg2[%c3, %c0_15, %c0_16] : memref<9x8x8xf32, #tpu.memory_space<vmem>>, vector<1x8x8xf32>
    %19 = vector.shape_cast %18 : vector<1x8x8xf32> to vector<8x8xf32>
    %cst_17 = arith.constant dense<0.000000e+00> : vector<8x384xf32>
    %20 = tpu.matmul %19, %17, %cst_17 {dimension_numbers = #tpu.dot_dimension_numbers<[1], [0], [0], [1], [0, 0, 1, 1], [], []>} : vector<8x8xf32>, vector<8x384xf32>, vector<8x384xf32> -> vector<8x384xf32>
    %21 = arith.addf %16, %20 : vector<8x384xf32>
    %c0_18 = arith.constant 0 : index
    %c128 = arith.constant 128 : index
    %22 = vector.load %arg0[%c0_18, %c128] : memref<8x640xf32, #tpu.memory_space<vmem>>, vector<8x384xf32>
    %c4 = arith.constant 4 : index
    %c0_19 = arith.constant 0 : index
    %c0_20 = arith.constant 0 : index
    %23 = vector.load %arg2[%c4, %c0_19, %c0_20] : memref<9x8x8xf32, #tpu.memory_space<vmem>>, vector<1x8x8xf32>
    %24 = vector.shape_cast %23 : vector<1x8x8xf32> to vector<8x8xf32>
    %cst_21 = arith.constant dense<0.000000e+00> : vector<8x384xf32>
    %25 = tpu.matmul %24, %22, %cst_21 {dimension_numbers = #tpu.dot_dimension_numbers<[1], [0], [0], [1], [0, 0, 1, 1], [], []>} : vector<8x8xf32>, vector<8x384xf32>, vector<8x384xf32> -> vector<8x384xf32>
    %26 = arith.addf %21, %25 : vector<8x384xf32>
    %c0_22 = arith.constant 0 : index
    %c129 = arith.constant 129 : index
    %27 = vector.load %arg0[%c0_22, %c129] : memref<8x640xf32, #tpu.memory_space<vmem>>, vector<8x384xf32>
    %c5 = arith.constant 5 : index
    %c0_23 = arith.constant 0 : index
    %c0_24 = arith.constant 0 : index
    %28 = vector.load %arg2[%c5, %c0_23, %c0_24] : memref<9x8x8xf32, #tpu.memory_space<vmem>>, vector<1x8x8xf32>
    %29 = vector.shape_cast %28 : vector<1x8x8xf32> to vector<8x8xf32>
    %cst_25 = arith.constant dense<0.000000e+00> : vector<8x384xf32>
    %30 = tpu.matmul %29, %27, %cst_25 {dimension_numbers = #tpu.dot_dimension_numbers<[1], [0], [0], [1], [0, 0, 1, 1], [], []>} : vector<8x8xf32>, vector<8x384xf32>, vector<8x384xf32> -> vector<8x384xf32>
    %31 = arith.addf %26, %30 : vector<8x384xf32>
    %c0_26 = arith.constant 0 : index
    %c145 = arith.constant 145 : index
    %32 = vector.load %arg0[%c0_26, %c145] : memref<8x640xf32, #tpu.memory_space<vmem>>, vector<8x384xf32>
    %c6 = arith.constant 6 : index
    %c0_27 = arith.constant 0 : index
    %c0_28 = arith.constant 0 : index
    %33 = vector.load %arg2[%c6, %c0_27, %c0_28] : memref<9x8x8xf32, #tpu.memory_space<vmem>>, vector<1x8x8xf32>
    %34 = vector.shape_cast %33 : vector<1x8x8xf32> to vector<8x8xf32>
    %cst_29 = arith.constant dense<0.000000e+00> : vector<8x384xf32>
    %35 = tpu.matmul %34, %32, %cst_29 {dimension_numbers = #tpu.dot_dimension_numbers<[1], [0], [0], [1], [0, 0, 1, 1], [], []>} : vector<8x8xf32>, vector<8x384xf32>, vector<8x384xf32> -> vector<8x384xf32>
    %36 = arith.addf %31, %35 : vector<8x384xf32>
    %c0_30 = arith.constant 0 : index
    %c146 = arith.constant 146 : index
    %37 = vector.load %arg0[%c0_30, %c146] : memref<8x640xf32, #tpu.memory_space<vmem>>, vector<8x384xf32>
    %c7 = arith.constant 7 : index
    %c0_31 = arith.constant 0 : index
    %c0_32 = arith.constant 0 : index
    %38 = vector.load %arg2[%c7, %c0_31, %c0_32] : memref<9x8x8xf32, #tpu.memory_space<vmem>>, vector<1x8x8xf32>
    %39 = vector.shape_cast %38 : vector<1x8x8xf32> to vector<8x8xf32>
    %cst_33 = arith.constant dense<0.000000e+00> : vector<8x384xf32>
    %40 = tpu.matmul %39, %37, %cst_33 {dimension_numbers = #tpu.dot_dimension_numbers<[1], [0], [0], [1], [0, 0, 1, 1], [], []>} : vector<8x8xf32>, vector<8x384xf32>, vector<8x384xf32> -> vector<8x384xf32>
    %41 = arith.addf %36, %40 : vector<8x384xf32>
    %c0_34 = arith.constant 0 : index
    %c147 = arith.constant 147 : index
    %42 = vector.load %arg0[%c0_34, %c147] : memref<8x640xf32, #tpu.memory_space<vmem>>, vector<8x384xf32>
    %c8 = arith.constant 8 : index
    %c0_35 = arith.constant 0 : index
    %c0_36 = arith.constant 0 : index
    %43 = vector.load %arg2[%c8, %c0_35, %c0_36] : memref<9x8x8xf32, #tpu.memory_space<vmem>>, vector<1x8x8xf32>
    %44 = vector.shape_cast %43 : vector<1x8x8xf32> to vector<8x8xf32>
    %cst_37 = arith.constant dense<0.000000e+00> : vector<8x384xf32>
    %45 = tpu.matmul %44, %42, %cst_37 {dimension_numbers = #tpu.dot_dimension_numbers<[1], [0], [0], [1], [0, 0, 1, 1], [], []>} : vector<8x8xf32>, vector<8x384xf32>, vector<8x384xf32> -> vector<8x384xf32>
    %46 = arith.addf %41, %45 : vector<8x384xf32>
    %c0_38 = arith.constant 0 : index
    %c0_39 = arith.constant 0 : index
    %47 = vector.load %arg3[%c0_38, %c0_39] : memref<8x1xf32, #tpu.memory_space<vmem>>, vector<8x1xf32>
    %48 = vector.broadcast %47 : vector<8x1xf32> to vector<8x384xf32>
    %49 = arith.addf %46, %48 : vector<8x384xf32>
    %cst_40 = arith.constant 0.000000e+00 : f32
    %50 = vector.broadcast %cst_40 : f32 to vector<8x384xf32>
    %51 = arith.maximumf %49, %50 : vector<8x384xf32>
    %52 = vector.broadcast %0 : vector<1x384xf32> to vector<8x384xf32>
    %53 = arith.mulf %51, %52 : vector<8x384xf32>
    %cst_41 = arith.constant 0.000000e+00 : f32
    %54 = vector.broadcast %cst_41 : f32 to vector<8x128xf32>
    %c0_42 = arith.constant 0 : index
    %c0_43 = arith.constant 0 : index
    %55 = vector.load %arg7[%c0_42, %c0_43] : memref<8x640xf32, #tpu.memory_space<vmem>>, vector<8x128xf32>
    tpu.vector_store %arg7[%c0_42, %c0_43], %54 {strides = array<i32>} : memref<8x640xf32, #tpu.memory_space<vmem>>, vector<8x128xf32>,
    %cst_44 = arith.constant 0.000000e+00 : f32
    %56 = vector.broadcast %cst_44 : f32 to vector<8x128xf32>
    %c0_45 = arith.constant 0 : index
    %c512 = arith.constant 512 : index
    %57 = vector.load %arg7[%c0_45, %c512] : memref<8x640xf32, #tpu.memory_space<vmem>>, vector<8x128xf32>
    tpu.vector_store %arg7[%c0_45, %c512], %56 {strides = array<i32>} : memref<8x640xf32, #tpu.memory_space<vmem>>, vector<8x128xf32>,
    %c0_46 = arith.constant 0 : index
    %c128_47 = arith.constant 128 : index
    %58 = vector.load %arg7[%c0_46, %c128_47] : memref<8x640xf32, #tpu.memory_space<vmem>>, vector<8x384xf32>
    tpu.vector_store %arg7[%c0_46, %c128_47], %53 {strides = array<i32>} : memref<8x640xf32, #tpu.memory_space<vmem>>, vector<8x384xf32>,
    %cst_48 = arith.constant 0.000000e+00 : f32
    %59 = vector.broadcast %cst_48 : f32 to vector<8x384xf32>
    %c0_49 = arith.constant 0 : index
    %c109_50 = arith.constant 109 : index
    %60 = vector.load %arg7[%c0_49, %c109_50] : memref<8x640xf32, #tpu.memory_space<vmem>>, vector<8x384xf32>
    %c0_51 = arith.constant 0 : index
    %c0_52 = arith.constant 0 : index
    %c0_53 = arith.constant 0 : index
    %61 = vector.load %arg4[%c0_51, %c0_52, %c0_53] : memref<9x8x8xf32, #tpu.memory_space<vmem>>, vector<1x8x8xf32>
    %62 = vector.shape_cast %61 : vector<1x8x8xf32> to vector<8x8xf32>
    %cst_54 = arith.constant dense<0.000000e+00> : vector<8x384xf32>
    %63 = tpu.matmul %62, %60, %cst_54 {dimension_numbers = #tpu.dot_dimension_numbers<[1], [0], [0], [1], [0, 0, 1, 1], [], []>} : vector<8x8xf32>, vector<8x384xf32>, vector<8x384xf32> -> vector<8x384xf32>
    %64 = arith.addf %59, %63 : vector<8x384xf32>
    %c0_55 = arith.constant 0 : index
    %c110_56 = arith.constant 110 : index
    %65 = vector.load %arg7[%c0_55, %c110_56] : memref<8x640xf32, #tpu.memory_space<vmem>>, vector<8x384xf32>
    %c1_57 = arith.constant 1 : index
    %c0_58 = arith.constant 0 : index
    %c0_59 = arith.constant 0 : index
    %66 = vector.load %arg4[%c1_57, %c0_58, %c0_59] : memref<9x8x8xf32, #tpu.memory_space<vmem>>, vector<1x8x8xf32>
    %67 = vector.shape_cast %66 : vector<1x8x8xf32> to vector<8x8xf32>
    %cst_60 = arith.constant dense<0.000000e+00> : vector<8x384xf32>
    %68 = tpu.matmul %67, %65, %cst_60 {dimension_numbers = #tpu.dot_dimension_numbers<[1], [0], [0], [1], [0, 0, 1, 1], [], []>} : vector<8x8xf32>, vector<8x384xf32>, vector<8x384xf32> -> vector<8x384xf32>
    %69 = arith.addf %64, %68 : vector<8x384xf32>
    %c0_61 = arith.constant 0 : index
    %c111_62 = arith.constant 111 : index
    %70 = vector.load %arg7[%c0_61, %c111_62] : memref<8x640xf32, #tpu.memory_space<vmem>>, vector<8x384xf32>
    %c2_63 = arith.constant 2 : index
    %c0_64 = arith.constant 0 : index
    %c0_65 = arith.constant 0 : index
    %71 = vector.load %arg4[%c2_63, %c0_64, %c0_65] : memref<9x8x8xf32, #tpu.memory_space<vmem>>, vector<1x8x8xf32>
    %72 = vector.shape_cast %71 : vector<1x8x8xf32> to vector<8x8xf32>
    %cst_66 = arith.constant dense<0.000000e+00> : vector<8x384xf32>
    %73 = tpu.matmul %72, %70, %cst_66 {dimension_numbers = #tpu.dot_dimension_numbers<[1], [0], [0], [1], [0, 0, 1, 1], [], []>} : vector<8x8xf32>, vector<8x384xf32>, vector<8x384xf32> -> vector<8x384xf32>
    %74 = arith.addf %69, %73 : vector<8x384xf32>
    %c0_67 = arith.constant 0 : index
    %c127_68 = arith.constant 127 : index
    %75 = vector.load %arg7[%c0_67, %c127_68] : memref<8x640xf32, #tpu.memory_space<vmem>>, vector<8x384xf32>
    %c3_69 = arith.constant 3 : index
    %c0_70 = arith.constant 0 : index
    %c0_71 = arith.constant 0 : index
    %76 = vector.load %arg4[%c3_69, %c0_70, %c0_71] : memref<9x8x8xf32, #tpu.memory_space<vmem>>, vector<1x8x8xf32>
    %77 = vector.shape_cast %76 : vector<1x8x8xf32> to vector<8x8xf32>
    %cst_72 = arith.constant dense<0.000000e+00> : vector<8x384xf32>
    %78 = tpu.matmul %77, %75, %cst_72 {dimension_numbers = #tpu.dot_dimension_numbers<[1], [0], [0], [1], [0, 0, 1, 1], [], []>} : vector<8x8xf32>, vector<8x384xf32>, vector<8x384xf32> -> vector<8x384xf32>
    %79 = arith.addf %74, %78 : vector<8x384xf32>
    %c0_73 = arith.constant 0 : index
    %c128_74 = arith.constant 128 : index
    %80 = vector.load %arg7[%c0_73, %c128_74] : memref<8x640xf32, #tpu.memory_space<vmem>>, vector<8x384xf32>
    %c4_75 = arith.constant 4 : index
    %c0_76 = arith.constant 0 : index
    %c0_77 = arith.constant 0 : index
    %81 = vector.load %arg4[%c4_75, %c0_76, %c0_77] : memref<9x8x8xf32, #tpu.memory_space<vmem>>, vector<1x8x8xf32>
    %82 = vector.shape_cast %81 : vector<1x8x8xf32> to vector<8x8xf32>
    %cst_78 = arith.constant dense<0.000000e+00> : vector<8x384xf32>
    %83 = tpu.matmul %82, %80, %cst_78 {dimension_numbers = #tpu.dot_dimension_numbers<[1], [0], [0], [1], [0, 0, 1, 1], [], []>} : vector<8x8xf32>, vector<8x384xf32>, vector<8x384xf32> -> vector<8x384xf32>
    %84 = arith.addf %79, %83 : vector<8x384xf32>
    %c0_79 = arith.constant 0 : index
    %c129_80 = arith.constant 129 : index
    %85 = vector.load %arg7[%c0_79, %c129_80] : memref<8x640xf32, #tpu.memory_space<vmem>>, vector<8x384xf32>
    %c5_81 = arith.constant 5 : index
    %c0_82 = arith.constant 0 : index
    %c0_83 = arith.constant 0 : index
    %86 = vector.load %arg4[%c5_81, %c0_82, %c0_83] : memref<9x8x8xf32, #tpu.memory_space<vmem>>, vector<1x8x8xf32>
    %87 = vector.shape_cast %86 : vector<1x8x8xf32> to vector<8x8xf32>
    %cst_84 = arith.constant dense<0.000000e+00> : vector<8x384xf32>
    %88 = tpu.matmul %87, %85, %cst_84 {dimension_numbers = #tpu.dot_dimension_numbers<[1], [0], [0], [1], [0, 0, 1, 1], [], []>} : vector<8x8xf32>, vector<8x384xf32>, vector<8x384xf32> -> vector<8x384xf32>
    %89 = arith.addf %84, %88 : vector<8x384xf32>
    %c0_85 = arith.constant 0 : index
    %c145_86 = arith.constant 145 : index
    %90 = vector.load %arg7[%c0_85, %c145_86] : memref<8x640xf32, #tpu.memory_space<vmem>>, vector<8x384xf32>
    %c6_87 = arith.constant 6 : index
    %c0_88 = arith.constant 0 : index
    %c0_89 = arith.constant 0 : index
    %91 = vector.load %arg4[%c6_87, %c0_88, %c0_89] : memref<9x8x8xf32, #tpu.memory_space<vmem>>, vector<1x8x8xf32>
    %92 = vector.shape_cast %91 : vector<1x8x8xf32> to vector<8x8xf32>
    %cst_90 = arith.constant dense<0.000000e+00> : vector<8x384xf32>
    %93 = tpu.matmul %92, %90, %cst_90 {dimension_numbers = #tpu.dot_dimension_numbers<[1], [0], [0], [1], [0, 0, 1, 1], [], []>} : vector<8x8xf32>, vector<8x384xf32>, vector<8x384xf32> -> vector<8x384xf32>
    %94 = arith.addf %89, %93 : vector<8x384xf32>
    %c0_91 = arith.constant 0 : index
    %c146_92 = arith.constant 146 : index
    %95 = vector.load %arg7[%c0_91, %c146_92] : memref<8x640xf32, #tpu.memory_space<vmem>>, vector<8x384xf32>
    %c7_93 = arith.constant 7 : index
    %c0_94 = arith.constant 0 : index
    %c0_95 = arith.constant 0 : index
    %96 = vector.load %arg4[%c7_93, %c0_94, %c0_95] : memref<9x8x8xf32, #tpu.memory_space<vmem>>, vector<1x8x8xf32>
    %97 = vector.shape_cast %96 : vector<1x8x8xf32> to vector<8x8xf32>
    %cst_96 = arith.constant dense<0.000000e+00> : vector<8x384xf32>
    %98 = tpu.matmul %97, %95, %cst_96 {dimension_numbers = #tpu.dot_dimension_numbers<[1], [0], [0], [1], [0, 0, 1, 1], [], []>} : vector<8x8xf32>, vector<8x384xf32>, vector<8x384xf32> -> vector<8x384xf32>
    %99 = arith.addf %94, %98 : vector<8x384xf32>
    %c0_97 = arith.constant 0 : index
    %c147_98 = arith.constant 147 : index
    %100 = vector.load %arg7[%c0_97, %c147_98] : memref<8x640xf32, #tpu.memory_space<vmem>>, vector<8x384xf32>
    %c8_99 = arith.constant 8 : index
    %c0_100 = arith.constant 0 : index
    %c0_101 = arith.constant 0 : index
    %101 = vector.load %arg4[%c8_99, %c0_100, %c0_101] : memref<9x8x8xf32, #tpu.memory_space<vmem>>, vector<1x8x8xf32>
    %102 = vector.shape_cast %101 : vector<1x8x8xf32> to vector<8x8xf32>
    %cst_102 = arith.constant dense<0.000000e+00> : vector<8x384xf32>
    %103 = tpu.matmul %102, %100, %cst_102 {dimension_numbers = #tpu.dot_dimension_numbers<[1], [0], [0], [1], [0, 0, 1, 1], [], []>} : vector<8x8xf32>, vector<8x384xf32>, vector<8x384xf32> -> vector<8x384xf32>
    %104 = arith.addf %99, %103 : vector<8x384xf32>
    %c0_103 = arith.constant 0 : index
    %c128_104 = arith.constant 128 : index
    %105 = vector.load %arg0[%c0_103, %c128_104] : memref<8x640xf32, #tpu.memory_space<vmem>>, vector<8x384xf32>
    %c0_105 = arith.constant 0 : index
    %c0_106 = arith.constant 0 : index
    %106 = vector.load %arg5[%c0_105, %c0_106] : memref<8x1xf32, #tpu.memory_space<vmem>>, vector<8x1xf32>
    %107 = vector.broadcast %106 : vector<8x1xf32> to vector<8x384xf32>
    %108 = arith.addf %104, %107 : vector<8x384xf32>
    %109 = arith.addf %108, %105 : vector<8x384xf32>
    %cst_107 = arith.constant 0.000000e+00 : f32
    %110 = vector.broadcast %cst_107 : f32 to vector<8x384xf32>
    %111 = arith.maximumf %109, %110 : vector<8x384xf32>
    %c0_108 = arith.constant 0 : index
    %c0_109 = arith.constant 0 : index
    %112 = vector.load %arg6[%c0_108, %c0_109] : memref<8x384xf32, #tpu.memory_space<vmem>>, vector<8x384xf32>
    tpu.vector_store %arg6[%c0_108, %c0_109], %111 {strides = array<i32>} : memref<8x384xf32, #tpu.memory_space<vmem>>, vector<8x384xf32>,
    return
  }
}

</mosaic_0001>

<llo_original>
// kernel: tpu_custom_call.1
$region0: #{tpu_custom_call.1}
  #allocation0 [shape = 'u32[]', space=smem, size = 0x4, offset = 0x4, fixed_abs, tag = 'smem constant byte address 0x4 - core index']
  #allocation1 [shape = 'u32[144,128]{1,0:T(1,128)}', space=vmem, size = 0x12000, scoped, tag = 'internal scratch']
  #allocation2 [shape = 'f32[8,640]{1,0:T(8,128)}', space=vmem, size = 0x5000, scoped, tag = 'scratch operand']
  %s0 = inlined_call_operand.vmem [shape: f32[8,640], index: 0, kind: input, shape index: {}]
  %s1 = inlined_call_operand.vmem [shape: f32[1,384], index: 1, kind: input, shape index: {}]
  %s2 = inlined_call_operand.vmem [shape: f32[9,8,8], index: 2, kind: input, shape index: {}]
  %s3 = inlined_call_operand.vmem [shape: f32[8,1], index: 3, kind: input, shape index: {}]
  %s4 = inlined_call_operand.vmem [shape: f32[9,8,8], index: 4, kind: input, shape index: {}]
  %s5 = inlined_call_operand.vmem [shape: f32[8,1], index: 5, kind: input, shape index: {}]
  %s6 = inlined_call_operand.hbm [shape: f32[8,384], index: 6, kind: output, shape index: {}]
  %s7 = sld [smem:[#allocation0]]
  $region34: #{tpu_custom_call.1} parent=0
    _
  %s9 = ssub.s32 1, %s7
  %s10 = scalar_select 0, %s9, %s7
  $region1: #{tpu_custom_call.1} parent=0
    #allocation3 [shape = 'u8[12288]{0}', space=vmem, size = 0x3000, scoped, tag = 'output window, operand 0, single buffered']
    #allocation4 [shape = 's32[1]{0}', space=sflag, size = 0x4, scoped, tag = 'scoped memory for tpu_custom_call.1']
    %11 = vsyncpa [#allocation4], 0
    // Predicated region
    $region2: #{tpu_custom_call.1} parent=1 // pred_check
      _
    $region3: #{tpu_custom_call.1} parent=1 // pred_check_branch
      %13 = sbr.rel (0) target = $region5
    $region4: #{tpu_custom_call.1} parent=1 // pred_region
      _
    $region5: #{tpu_custom_call.1} parent=1 // pred_fallthru
      _
    // Predicated region
    $region6: #{tpu_custom_call.1} parent=1 // pred_check
      _
    $region7: #{tpu_custom_call.1} parent=1 // pred_check_branch
      %15 = sbr.rel (0) target = $region9
    $region8: #{tpu_custom_call.1} parent=1 // pred_region
      _
    $region9: #{tpu_custom_call.1} parent=1 // pred_fallthru
      _
    // Predicated region
    $region10: #{tpu_custom_call.1} parent=1 // pred_check
      _
    $region11: #{tpu_custom_call.1} parent=1 // pred_check_branch
      %17 = sbr.rel (0) target = $region13
    $region12: #{tpu_custom_call.1} parent=1 // pred_region
      _
    $region13: #{tpu_custom_call.1} parent=1 // pred_fallthru
      _
    // Predicated region
    $region14: #{tpu_custom_call.1} parent=1 // pred_check
      _
    $region15: #{tpu_custom_call.1} parent=1 // pred_check_branch
      %19 = sbr.rel (0) target = $region17
    $region16: #{tpu_custom_call.1} parent=1 // pred_region
      _
    $region17: #{tpu_custom_call.1} parent=1 // pred_fallthru
      _
    // Predicated region
    $region18: #{tpu_custom_call.1} parent=1 // pred_check
      _
    $region19: #{tpu_custom_call.1} parent=1 // pred_check_branch
      %21 = sbr.rel (0) target = $region21
    $region20: #{tpu_custom_call.1} parent=1 // pred_region
      _
    $region21: #{tpu_custom_call.1} parent=1 // pred_fallthru
      _
    // Predicated region
    $region22: #{tpu_custom_call.1} parent=1 // pred_check
      _
    $region23: #{tpu_custom_call.1} parent=1 // pred_check_branch
      %23 = sbr.rel (0) target = $region25
    $region24: #{tpu_custom_call.1} parent=1 // pred_region
      _
    $region25: #{tpu_custom_call.1} parent=1 // pred_fallthru
      _
    %v24 = vld [vmem:[%s1] sm:$0x7]
    %v25 = vld [vmem:[%s0] sm:$0xff]
    %v26 = vld [vmem:[%s0 + $0x8] sm:$0xff]
    %v27 = vld [vmem:[%s0 + $0x10] sm:$0xff]
    %v28 = vld [vmem:[%s0 + $0x18] sm:$0xff]
    %v29 = vld [vmem:[%s2] sm:$0xff]
    %s30 = scalar_lea.vmem %s2, 8
    %v31 = vld [vmem:[%s30] sm:$0xff]
    %36 = vrot.lane.b32.xlu0 %v25, 18
    %v37 = vpop.permute.xlu0 %36
    %38 = vrot.lane.b32.xlu0 %v26, 18
    %v39 = vpop.permute.xlu0 %38
    %40 = vrot.lane.b32.xlu0 %v27, 18
    %v41 = vpop.permute.xlu0 %40
    %42 = vrot.lane.b32.xlu0 %v28, 18
    %v43 = vpop.permute.xlu0 %42
    %vm44 = vcmask 146432
    %v45 = vsel %vm44, %v37, %v39
    %v46 = vsel %vm44, %v39, %v41
    %v47 = vsel %vm44, %v41, %v43
    %vm51 = vcmask 64512
    %v53 = vsel %vm51, %v31, 0
    %55 = vmatprep.subr.mxu0 0.0
    %56 = vmatpush1.msra.mxu0 0.0
    %57 = vmatprep.subr.mxu0 0.0
    %58 = vmatpush1.msra.mxu0 0.0
    %59 = vmatprep.subr.mxu0 0.0
    %60 = vmatpush1.msra.mxu0 0.0
    %61 = vmatprep.subr.mxu0 0.0
    %62 = vmatpush1.msra.mxu0 0.0
    %63 = vmatprep.subr.mxu0 0.0
    %64 = vmatpush1.msra.mxu0 0.0
    %65 = vmatprep.subr.mxu0 0.0
    %66 = vmatpush1.msra.mxu0 0.0
    %67 = vmatprep.subr.mxu0 0.0
    %68 = vmatpush1.msra.mxu0 0.0
    %69 = vmatprep.subr.mxu0 0.0
    %70 = vmatpush1.msra.mxu0 0.0
    %71 = vmatprep.subr.mxu0 0.0
    %72 = vmatpush1.msra.mxu0 0.0
    %73 = vmatprep.subr.mxu0 0.0
    %74 = vmatpush1.msra.mxu0 0.0
    %75 = vmatprep.subr.mxu0 0.0
    %76 = vmatpush1.msra.mxu0 0.0
    %77 = vmatprep.subr.mxu0 0.0
    %78 = vmatpush1.msra.mxu0 0.0
    %79 = vmatprep.subr.mxu0 0.0
    %80 = vmatpush1.msra.mxu0 0.0
    %81 = vmatprep.subr.mxu0 0.0
    %82 = vmatpush1.msra.mxu0 0.0
    %83 = vmatprep.subr.mxu0 0.0
    %84 = vmatpush1.msra.mxu0 0.0
    %85 = vmatprep.subr.mxu0 %v46
    %86 = vmatpush1.msra.mxu0 %v45
    %87 = vmatprep.subr.mxu0 0.0
    %88 = vmatpush2.msra.mxu0 0.0
    %89 = vmatprep.subr.mxu0 0.0
    %90 = vmatpush2.msra.mxu0 0.0
    %91 = vmatprep.subr.mxu0 0.0
    %92 = vmatpush2.msra.mxu0 0.0
    %93 = vmatprep.subr.mxu0 0.0
    %94 = vmatpush2.msra.mxu0 0.0
    %95 = vmatprep.subr.mxu0 0.0
    %96 = vmatpush2.msra.mxu0 0.0
    %97 = vmatprep.subr.mxu0 0.0
    %98 = vmatpush2.msra.mxu0 0.0
    %99 = vmatprep.subr.mxu0 0.0
    %100 = vmatpush2.msra.mxu0 0.0
    %101 = vmatprep.subr.mxu0 0.0
    %102 = vmatpush2.msra.mxu0 0.0
    %103 = vmatprep.subr.mxu0 0.0
    %104 = vmatpush2.msra.mxu0 0.0
    %105 = vmatprep.subr.mxu0 0.0
    %106 = vmatpush2.msra.mxu0 0.0
    %107 = vmatprep.subr.mxu0 0.0
    %108 = vmatpush2.msra.mxu0 0.0
    %109 = vmatprep.subr.mxu0 0.0
    %110 = vmatpush2.msra.mxu0 0.0
    %111 = vmatprep.subr.mxu0 0.0
    %112 = vmatpush2.msra.mxu0 0.0
    %113 = vmatprep.subr.mxu0 0.0
    %114 = vmatpush2.msra.mxu0 0.0
    %115 = vmatprep.subr.mxu0 0.0
    %116 = vmatpush2.msra.mxu0 0.0
    %117 = vmatprep.subr.mxu0 0.0
    %118 = vmatpush2.msra.mxu0 0.0
    %119 = vmatprep.mubr.f32.mxu0 0.0
    %120 = vmatmul.mubr.f32.gmra.mxu0 %v53
    %v121 = vpop.f32.mrf.mxu0
    %v122 = vadd.f32 0.0, %v121
    %v123 = vpop.f32.mrf.mxu0
    %v124 = vadd.f32 0.0, %v123
    %125 = vdwg.mxu0
    %126 = vmatprep.subr.mxu0 0.0
    %127 = vmatpush1.msra.mxu0 0.0
    %128 = vmatprep.subr.mxu0 0.0
    %129 = vmatpush1.msra.mxu0 0.0
    %130 = vmatprep.subr.mxu0 0.0
    %131 = vmatpush1.msra.mxu0 0.0
    %132 = vmatprep.subr.mxu0 0.0
    %133 = vmatpush1.msra.mxu0 0.0
    %134 = vmatprep.subr.mxu0 0.0
    %135 = vmatpush1.msra.mxu0 0.0
    %136 = vmatprep.subr.mxu0 0.0
    %137 = vmatpush1.msra.mxu0 0.0
    %138 = vmatprep.subr.mxu0 0.0
    %139 = vmatpush1.msra.mxu0 0.0
    %140 = vmatprep.subr.mxu0 0.0
    %141 = vmatpush1.msra.mxu0 0.0
    %142 = vmatprep.subr.mxu0 0.0
    %143 = vmatpush1.msra.mxu0 0.0
    %144 = vmatprep.subr.mxu0 0.0
    %145 = vmatpush1.msra.mxu0 0.0
    %146 = vmatprep.subr.mxu0 0.0
    %147 = vmatpush1.msra.mxu0 0.0
    %148 = vmatprep.subr.mxu0 0.0
    %149 = vmatpush1.msra.mxu0 0.0
    %150 = vmatprep.subr.mxu0 0.0
    %151 = vmatpush1.msra.mxu0 0.0
    %152 = vmatprep.subr.mxu0 0.0
    %153 = vmatpush1.msra.mxu0 0.0
    %154 = vmatprep.subr.mxu0 0.0
    %155 = vmatpush1.msra.mxu0 0.0
    %156 = vmatprep.subr.mxu0 0.0
    %157 = vmatpush1.msra.mxu0 %v47
    %158 = vmatprep.subr.mxu0 0.0
    %159 = vmatpush2.msra.mxu0 0.0
    %160 = vmatprep.subr.mxu0 0.0
    %161 = vmatpush2.msra.mxu0 0.0
    %162 = vmatprep.subr.mxu0 0.0
    %163 = vmatpush2.msra.mxu0 0.0
    %164 = vmatprep.subr.mxu0 0.0
    %165 = vmatpush2.msra.mxu0 0.0
    %166 = vmatprep.subr.mxu0 0.0
    %167 = vmatpush2.msra.mxu0 0.0
    %168 = vmatprep.subr.mxu0 0.0
    %169 = vmatpush2.msra.mxu0 0.0
    %170 = vmatprep.subr.mxu0 0.0
    %171 = vmatpush2.msra.mxu0 0.0
    %172 = vmatprep.subr.mxu0 0.0
    %173 = vmatpush2.msra.mxu0 0.0
    %174 = vmatprep.subr.mxu0 0.0
    %175 = vmatpush2.msra.mxu0 0.0
    %176 = vmatprep.subr.mxu0 0.0
    %177 = vmatpush2.msra.mxu0 0.0
    %178 = vmatprep.subr.mxu0 0.0
    %179 = vmatpush2.msra.mxu0 0.0
    %180 = vmatprep.subr.mxu0 0.0
    %181 = vmatpush2.msra.mxu0 0.0
    %182 = vmatprep.subr.mxu0 0.0
    %183 = vmatpush2.msra.mxu0 0.0
    %184 = vmatprep.subr.mxu0 0.0
    %185 = vmatpush2.msra.mxu0 0.0
    %186 = vmatprep.subr.mxu0 0.0
    %187 = vmatpush2.msra.mxu0 0.0
    %188 = vmatprep.subr.mxu0 0.0
    %189 = vmatpush2.msra.mxu0 0.0
    %190 = vmatprep.mubr.f32.mxu0 0.0
    %191 = vmatmul.mubr.f32.gmra.mxu0 %v53
    %v192 = vpop.f32.mrf.mxu0
    %v193 = vadd.f32 0.0, %v192
    %v194 = vpop.f32.mrf.mxu0
    %195 = vdwg.mxu0
    %196 = vrot.lane.b32.xlu0 %v25, 19
    %v197 = vpop.permute.xlu0 %196
    %198 = vrot.lane.b32.xlu0 %v26, 19
    %v199 = vpop.permute.xlu0 %198
    %200 = vrot.lane.b32.xlu0 %v27, 19
    %v201 = vpop.permute.xlu0 %200
    %202 = vrot.lane.b32.xlu0 %v28, 19
    %v203 = vpop.permute.xlu0 %202
    %vm204 = vcmask 154624
    %v205 = vsel %vm204, %v197, %v199
    %v206 = vsel %vm204, %v199, %v201
    %v207 = vsel %vm204, %v201, %v203
    %v212 = vsel %vm51, %v29, 0
    %214 = vmatprep.subr.mxu0 0.0
    %215 = vmatpush1.msra.mxu0 0.0
    %216 = vmatprep.subr.mxu0 0.0
    %217 = vmatpush1.msra.mxu0 0.0
    %218 = vmatprep.subr.mxu0 0.0
    %219 = vmatpush1.msra.mxu0 0.0
    %220 = vmatprep.subr.mxu0 0.0
    %221 = vmatpush1.msra.mxu0 0.0
    %222 = vmatprep.subr.mxu0 0.0
    %223 = vmatpush1.msra.mxu0 0.0
    %224 = vmatprep.subr.mxu0 0.0
    %225 = vmatpush1.msra.mxu0 0.0
    %226 = vmatprep.subr.mxu0 0.0
    %227 = vmatpush1.msra.mxu0 0.0
    %228 = vmatprep.subr.mxu0 0.0
    %229 = vmatpush1.msra.mxu0 0.0
    %230 = vmatprep.subr.mxu0 0.0
    %231 = vmatpush1.msra.mxu0 0.0
    %232 = vmatprep.subr.mxu0 0.0
    %233 = vmatpush1.msra.mxu0 0.0
    %234 = vmatprep.subr.mxu0 0.0
    %235 = vmatpush1.msra.mxu0 0.0
    %236 = vmatprep.subr.mxu0 0.0
    %237 = vmatpush1.msra.mxu0 0.0
    %238 = vmatprep.subr.mxu0 0.0
    %239 = vmatpush1.msra.mxu0 0.0
    %240 = vmatprep.subr.mxu0 0.0
    %241 = vmatpush1.msra.mxu0 0.0
    %242 = vmatprep.subr.mxu0 0.0
    %243 = vmatpush1.msra.mxu0 0.0
    %244 = vmatprep.subr.mxu0 %v206
    %245 = vmatpush1.msra.mxu0 %v205
    %246 = vmatprep.subr.mxu0 0.0
    %247 = vmatpush2.msra.mxu0 0.0
    %248 = vmatprep.subr.mxu0 0.0
    %249 = vmatpush2.msra.mxu0 0.0
    %250 = vmatprep.subr.mxu0 0.0
    %251 = vmatpush2.msra.mxu0 0.0
    %252 = vmatprep.subr.mxu0 0.0
    %253 = vmatpush2.msra.mxu0 0.0
    %254 = vmatprep.subr.mxu0 0.0
    %255 = vmatpush2.msra.mxu0 0.0
    %256 = vmatprep.subr.mxu0 0.0
    %257 = vmatpush2.msra.mxu0 0.0
    %258 = vmatprep.subr.mxu0 0.0
    %259 = vmatpush2.msra.mxu0 0.0
    %260 = vmatprep.subr.mxu0 0.0
    %261 = vmatpush2.msra.mxu0 0.0
    %262 = vmatprep.subr.mxu0 0.0
    %263 = vmatpush2.msra.mxu0 0.0
    %264 = vmatprep.subr.mxu0 0.0
    %265 = vmatpush2.msra.mxu0 0.0
    %266 = vmatprep.subr.mxu0 0.0
    %267 = vmatpush2.msra.mxu0 0.0
    %268 = vmatprep.subr.mxu0 0.0
    %269 = vmatpush2.msra.mxu0 0.0
    %270 = vmatprep.subr.mxu0 0.0
    %271 = vmatpush2.msra.mxu0 0.0
    %272 = vmatprep.subr.mxu0 0.0
    %273 = vmatpush2.msra.mxu0 0.0
    %274 = vmatprep.subr.mxu0 0.0
    %275 = vmatpush2.msra.mxu0 0.0
    %276 = vmatprep.subr.mxu0 0.0
    %277 = vmatpush2.msra.mxu0 0.0
    %278 = vmatprep.mubr.f32.mxu0 0.0
    %279 = vmatmul.mubr.f32.gmra.mxu0 %v212
    %v280 = vpop.f32.mrf.mxu0
    %v281 = vadd.f32 %v122, %v280
    %v282 = vpop.f32.mrf.mxu0
    %v283 = vadd.f32 %v124, %v282
    %284 = vdwg.mxu0
    %285 = vmatprep.subr.mxu0 0.0
    %286 = vmatpush1.msra.mxu0 0.0
    %287 = vmatprep.subr.mxu0 0.0
    %288 = vmatpush1.msra.mxu0 0.0
    %289 = vmatprep.subr.mxu0 0.0
    %290 = vmatpush1.msra.mxu0 0.0
    %291 = vmatprep.subr.mxu0 0.0
    %292 = vmatpush1.msra.mxu0 0.0
    %293 = vmatprep.subr.mxu0 0.0
    %294 = vmatpush1.msra.mxu0 0.0
    %295 = vmatprep.subr.mxu0 0.0
    %296 = vmatpush1.msra.mxu0 0.0
    %297 = vmatprep.subr.mxu0 0.0
    %298 = vmatpush1.msra.mxu0 0.0
    %299 = vmatprep.subr.mxu0 0.0
    %300 = vmatpush1.msra.mxu0 0.0
    %301 = vmatprep.subr.mxu0 0.0
    %302 = vmatpush1.msra.mxu0 0.0
    %303 = vmatprep.subr.mxu0 0.0
    %304 = vmatpush1.msra.mxu0 0.0
    %305 = vmatprep.subr.mxu0 0.0
    %306 = vmatpush1.msra.mxu0 0.0
    %307 = vmatprep.subr.mxu0 0.0
    %308 = vmatpush1.msra.mxu0 0.0
    %309 = vmatprep.subr.mxu0 0.0
    %310 = vmatpush1.msra.mxu0 0.0
    %311 = vmatprep.subr.mxu0 0.0
    %312 = vmatpush1.msra.mxu0 0.0
    %313 = vmatprep.subr.mxu0 0.0
    %314 = vmatpush1.msra.mxu0 0.0
    %315 = vmatprep.subr.mxu0 0.0
    %316 = vmatpush1.msra.mxu0 %v207
    %317 = vmatprep.subr.mxu0 0.0
    %318 = vmatpush2.msra.mxu0 0.0
    %319 = vmatprep.subr.mxu0 0.0
    %320 = vmatpush2.msra.mxu0 0.0
    %321 = vmatprep.subr.mxu0 0.0
    %322 = vmatpush2.msra.mxu0 0.0
    %323 = vmatprep.subr.mxu0 0.0
    %324 = vmatpush2.msra.mxu0 0.0
    %325 = vmatprep.subr.mxu0 0.0
    %326 = vmatpush2.msra.mxu0 0.0
    %327 = vmatprep.subr.mxu0 0.0
    %328 = vmatpush2.msra.mxu0 0.0
    %329 = vmatprep.subr.mxu0 0.0
    %330 = vmatpush2.msra.mxu0 0.0
    %331 = vmatprep.subr.mxu0 0.0
    %332 = vmatpush2.msra.mxu0 0.0
    %333 = vmatprep.subr.mxu0 0.0
    %334 = vmatpush2.msra.mxu0 0.0
    %335 = vmatprep.subr.mxu0 0.0
    %336 = vmatpush2.msra.mxu0 0.0
    %337 = vmatprep.subr.mxu0 0.0
    %338 = vmatpush2.msra.mxu0 0.0
    %339 = vmatprep.subr.mxu0 0.0
    %340 = vmatpush2.msra.mxu0 0.0
    %341 = vmatprep.subr.mxu0 0.0
    %342 = vmatpush2.msra.mxu0 0.0
    %343 = vmatprep.subr.mxu0 0.0
    %344 = vmatpush2.msra.mxu0 0.0
    %345 = vmatprep.subr.mxu0 0.0
    %346 = vmatpush2.msra.mxu0 0.0
    %347 = vmatprep.subr.mxu0 0.0
    %348 = vmatpush2.msra.mxu0 0.0
    %349 = vmatprep.mubr.f32.mxu0 0.0
    %350 = vmatmul.mubr.f32.gmra.mxu0 %v212
    %v351 = vpop.f32.mrf.mxu0
    %v352 = vadd.f32 %v193, %v351
    %v353 = vpop.f32.mrf.mxu0
    %354 = vdwg.mxu0
    %s355 = scalar_lea.vmem %s2, 16
    %v356 = vld [vmem:[%s355] sm:$0xff]
    %357 = vrot.lane.b32.xlu0 %v25, 17
    %v358 = vpop.permute.xlu0 %357
    %359 = vrot.lane.b32.xlu0 %v26, 17
    %v360 = vpop.permute.xlu0 %359
    %361 = vrot.lane.b32.xlu0 %v27, 17
    %v362 = vpop.permute.xlu0 %361
    %363 = vrot.lane.b32.xlu0 %v28, 17
    %v364 = vpop.permute.xlu0 %363
    %vm365 = vcmask 138240
    %v366 = vsel %vm365, %v358, %v360
    %v367 = vsel %vm365, %v360, %v362
    %v368 = vsel %vm365, %v362, %v364
    %v373 = vsel %vm51, %v356, 0
    %375 = vmatprep.subr.mxu0 0.0
    %376 = vmatpush1.msra.mxu0 0.0
    %377 = vmatprep.subr.mxu0 0.0
    %378 = vmatpush1.msra.mxu0 0.0
    %379 = vmatprep.subr.mxu0 0.0
    %380 = vmatpush1.msra.mxu0 0.0
    %381 = vmatprep.subr.mxu0 0.0
    %382 = vmatpush1.msra.mxu0 0.0
    %383 = vmatprep.subr.mxu0 0.0
    %384 = vmatpush1.msra.mxu0 0.0
    %385 = vmatprep.subr.mxu0 0.0
    %386 = vmatpush1.msra.mxu0 0.0
    %387 = vmatprep.subr.mxu0 0.0
    %388 = vmatpush1.msra.mxu0 0.0
    %389 = vmatprep.subr.mxu0 0.0
    %390 = vmatpush1.msra.mxu0 0.0
    %391 = vmatprep.subr.mxu0 0.0
    %392 = vmatpush1.msra.mxu0 0.0
    %393 = vmatprep.subr.mxu0 0.0
    %394 = vmatpush1.msra.mxu0 0.0
    %395 = vmatprep.subr.mxu0 0.0
    %396 = vmatpush1.msra.mxu0 0.0
    %397 = vmatprep.subr.mxu0 0.0
    %398 = vmatpush1.msra.mxu0 0.0
    %399 = vmatprep.subr.mxu0 0.0
    %400 = vmatpush1.msra.mxu0 0.0
    %401 = vmatprep.subr.mxu0 0.0
    %402 = vmatpush1.msra.mxu0 0.0
    %403 = vmatprep.subr.mxu0 0.0
    %404 = vmatpush1.msra.mxu0 0.0
    %405 = vmatprep.subr.mxu0 %v367
    %406 = vmatpush1.msra.mxu0 %v366
    %407 = vmatprep.subr.mxu0 0.0
    %408 = vmatpush2.msra.mxu0 0.0
    %409 = vmatprep.subr.mxu0 0.0
    %410 = vmatpush2.msra.mxu0 0.0
    %411 = vmatprep.subr.mxu0 0.0
    %412 = vmatpush2.msra.mxu0 0.0
    %413 = vmatprep.subr.mxu0 0.0
    %414 = vmatpush2.msra.mxu0 0.0
    %415 = vmatprep.subr.mxu0 0.0
    %416 = vmatpush2.msra.mxu0 0.0
    %417 = vmatprep.subr.mxu0 0.0
    %418 = vmatpush2.msra.mxu0 0.0
    %419 = vmatprep.subr.mxu0 0.0
    %420 = vmatpush2.msra.mxu0 0.0
    %421 = vmatprep.subr.mxu0 0.0
    %422 = vmatpush2.msra.mxu0 0.0
    %423 = vmatprep.subr.mxu0 0.0
    %424 = vmatpush2.msra.mxu0 0.0
    %425 = vmatprep.subr.mxu0 0.0
    %426 = vmatpush2.msra.mxu0 0.0
    %427 = vmatprep.subr.mxu0 0.0
    %428 = vmatpush2.msra.mxu0 0.0
    %429 = vmatprep.subr.mxu0 0.0
    %430 = vmatpush2.msra.mxu0 0.0
    %431 = vmatprep.subr.mxu0 0.0
    %432 = vmatpush2.msra.mxu0 0.0
    %433 = vmatprep.subr.mxu0 0.0
    %434 = vmatpush2.msra.mxu0 0.0
    %435 = vmatprep.subr.mxu0 0.0
    %436 = vmatpush2.msra.mxu0 0.0
    %437 = vmatprep.subr.mxu0 0.0
    %438 = vmatpush2.msra.mxu0 0.0
    %439 = vmatprep.mubr.f32.mxu0 0.0
    %440 = vmatmul.mubr.f32.gmra.mxu0 %v373
    %v441 = vpop.f32.mrf.mxu0
    %v442 = vadd.f32 0.0, %v441
    %v443 = vpop.f32.mrf.mxu0
    %v444 = vadd.f32 0.0, %v443
    %445 = vdwg.mxu0
    %446 = vmatprep.subr.mxu0 0.0
    %447 = vmatpush1.msra.mxu0 0.0
    %448 = vmatprep.subr.mxu0 0.0
    %449 = vmatpush1.msra.mxu0 0.0
    %450 = vmatprep.subr.mxu0 0.0
    %451 = vmatpush1.msra.mxu0 0.0
    %452 = vmatprep.subr.mxu0 0.0
    %453 = vmatpush1.msra.mxu0 0.0
    %454 = vmatprep.subr.mxu0 0.0
    %455 = vmatpush1.msra.mxu0 0.0
    %456 = vmatprep.subr.mxu0 0.0
    %457 = vmatpush1.msra.mxu0 0.0
    %458 = vmatprep.subr.mxu0 0.0
    %459 = vmatpush1.msra.mxu0 0.0
    %460 = vmatprep.subr.mxu0 0.0
    %461 = vmatpush1.msra.mxu0 0.0
    %462 = vmatprep.subr.mxu0 0.0
    %463 = vmatpush1.msra.mxu0 0.0
    %464 = vmatprep.subr.mxu0 0.0
    %465 = vmatpush1.msra.mxu0 0.0
    %466 = vmatprep.subr.mxu0 0.0
    %467 = vmatpush1.msra.mxu0 0.0
    %468 = vmatprep.subr.mxu0 0.0
    %469 = vmatpush1.msra.mxu0 0.0
    %470 = vmatprep.subr.mxu0 0.0
    %471 = vmatpush1.msra.mxu0 0.0
    %472 = vmatprep.subr.mxu0 0.0
    %473 = vmatpush1.msra.mxu0 0.0
    %474 = vmatprep.subr.mxu0 0.0
    %475 = vmatpush1.msra.mxu0 0.0
    %476 = vmatprep.subr.mxu0 0.0
    %477 = vmatpush1.msra.mxu0 %v368
    %478 = vmatprep.subr.mxu0 0.0
    %479 = vmatpush2.msra.mxu0 0.0
    %480 = vmatprep.subr.mxu0 0.0
    %481 = vmatpush2.msra.mxu0 0.0
    %482 = vmatprep.subr.mxu0 0.0
    %483 = vmatpush2.msra.mxu0 0.0
    %484 = vmatprep.subr.mxu0 0.0
    %485 = vmatpush2.msra.mxu0 0.0
    %486 = vmatprep.subr.mxu0 0.0
    %487 = vmatpush2.msra.mxu0 0.0
    %488 = vmatprep.subr.mxu0 0.0
    %489 = vmatpush2.msra.mxu0 0.0
    %490 = vmatprep.subr.mxu0 0.0
    %491 = vmatpush2.msra.mxu0 0.0
    %492 = vmatprep.subr.mxu0 0.0
    %493 = vmatpush2.msra.mxu0 0.0
    %494 = vmatprep.subr.mxu0 0.0
    %495 = vmatpush2.msra.mxu0 0.0
    %496 = vmatprep.subr.mxu0 0.0
    %497 = vmatpush2.msra.mxu0 0.0
    %498 = vmatprep.subr.mxu0 0.0
    %499 = vmatpush2.msra.mxu0 0.0
    %500 = vmatprep.subr.mxu0 0.0
    %501 = vmatpush2.msra.mxu0 0.0
    %502 = vmatprep.subr.mxu0 0.0
    %503 = vmatpush2.msra.mxu0 0.0
    %504 = vmatprep.subr.mxu0 0.0
    %505 = vmatpush2.msra.mxu0 0.0
    %506 = vmatprep.subr.mxu0 0.0
    %507 = vmatpush2.msra.mxu0 0.0
    %508 = vmatprep.subr.mxu0 0.0
    %509 = vmatpush2.msra.mxu0 0.0
    %510 = vmatprep.mubr.f32.mxu0 0.0
    %511 = vmatmul.mubr.f32.gmra.mxu0 %v373
    %v512 = vpop.f32.mrf.mxu0
    %v513 = vadd.f32 0.0, %v512
    %v514 = vpop.f32.mrf.mxu0
    %515 = vdwg.mxu0
    %v516 = vadd.f32 %v281, %v442
    %v517 = vadd.f32 %v283, %v444
    %v518 = vadd.f32 %v352, %v513
    %s519 = scalar_lea.vmem %s2, 24
    %v520 = vld [vmem:[%s519] sm:$0xff]
    %521 = vrot.lane.b32.xlu0 %v25, 1
    %v522 = vpop.permute.xlu0 %521
    %523 = vrot.lane.b32.xlu0 %v26, 1
    %v524 = vpop.permute.xlu0 %523
    %525 = vrot.lane.b32.xlu0 %v27, 1
    %v526 = vpop.permute.xlu0 %525
    %527 = vrot.lane.b32.xlu0 %v28, 1
    %v528 = vpop.permute.xlu0 %527
    %vm529 = vcmask 7168
    %v530 = vsel %vm529, %v522, %v524
    %v531 = vsel %vm529, %v524, %v526
    %v532 = vsel %vm529, %v526, %v528
    %v537 = vsel %vm51, %v520, 0
    %539 = vmatprep.subr.mxu0 0.0
    %540 = vmatpush1.msra.mxu0 0.0
    %541 = vmatprep.subr.mxu0 0.0
    %542 = vmatpush1.msra.mxu0 0.0
    %543 = vmatprep.subr.mxu0 0.0
    %544 = vmatpush1.msra.mxu0 0.0
    %545 = vmatprep.subr.mxu0 0.0
    %546 = vmatpush1.msra.mxu0 0.0
    %547 = vmatprep.subr.mxu0 0.0
    %548 = vmatpush1.msra.mxu0 0.0
    %549 = vmatprep.subr.mxu0 0.0
    %550 = vmatpush1.msra.mxu0 0.0
    %551 = vmatprep.subr.mxu0 0.0
    %552 = vmatpush1.msra.mxu0 0.0
    %553 = vmatprep.subr.mxu0 0.0
    %554 = vmatpush1.msra.mxu0 0.0
    %555 = vmatprep.subr.mxu0 0.0
    %556 = vmatpush1.msra.mxu0 0.0
    %557 = vmatprep.subr.mxu0 0.0
    %558 = vmatpush1.msra.mxu0 0.0
    %559 = vmatprep.subr.mxu0 0.0
    %560 = vmatpush1.msra.mxu0 0.0
    %561 = vmatprep.subr.mxu0 0.0
    %562 = vmatpush1.msra.mxu0 0.0
    %563 = vmatprep.subr.mxu0 0.0
    %564 = vmatpush1.msra.mxu0 0.0
    %565 = vmatprep.subr.mxu0 0.0
    %566 = vmatpush1.msra.mxu0 0.0
    %567 = vmatprep.subr.mxu0 0.0
    %568 = vmatpush1.msra.mxu0 0.0
    %569 = vmatprep.subr.mxu0 %v531
    %570 = vmatpush1.msra.mxu0 %v530
    %571 = vmatprep.subr.mxu0 0.0
    %572 = vmatpush2.msra.mxu0 0.0
    %573 = vmatprep.subr.mxu0 0.0
    %574 = vmatpush2.msra.mxu0 0.0
    %575 = vmatprep.subr.mxu0 0.0
    %576 = vmatpush2.msra.mxu0 0.0
    %577 = vmatprep.subr.mxu0 0.0
    %578 = vmatpush2.msra.mxu0 0.0
    %579 = vmatprep.subr.mxu0 0.0
    %580 = vmatpush2.msra.mxu0 0.0
    %581 = vmatprep.subr.mxu0 0.0
    %582 = vmatpush2.msra.mxu0 0.0
    %583 = vmatprep.subr.mxu0 0.0
    %584 = vmatpush2.msra.mxu0 0.0
    %585 = vmatprep.subr.mxu0 0.0
    %586 = vmatpush2.msra.mxu0 0.0
    %587 = vmatprep.subr.mxu0 0.0
    %588 = vmatpush2.msra.mxu0 0.0
    %589 = vmatprep.subr.mxu0 0.0
    %590 = vmatpush2.msra.mxu0 0.0
    %591 = vmatprep.subr.mxu0 0.0
    %592 = vmatpush2.msra.mxu0 0.0
    %593 = vmatprep.subr.mxu0 0.0
    %594 = vmatpush2.msra.mxu0 0.0
    %595 = vmatprep.subr.mxu0 0.0
    %596 = vmatpush2.msra.mxu0 0.0
    %597 = vmatprep.subr.mxu0 0.0
    %598 = vmatpush2.msra.mxu0 0.0
    %599 = vmatprep.subr.mxu0 0.0
    %600 = vmatpush2.msra.mxu0 0.0
    %601 = vmatprep.subr.mxu0 0.0
    %602 = vmatpush2.msra.mxu0 0.0
    %603 = vmatprep.mubr.f32.mxu0 0.0
    %604 = vmatmul.mubr.f32.gmra.mxu0 %v537
    %v605 = vpop.f32.mrf.mxu0
    %v606 = vadd.f32 0.0, %v605
    %v607 = vpop.f32.mrf.mxu0
    %v608 = vadd.f32 0.0, %v607
    %609 = vdwg.mxu0
    %610 = vmatprep.subr.mxu0 0.0
    %611 = vmatpush1.msra.mxu0 0.0
    %612 = vmatprep.subr.mxu0 0.0
    %613 = vmatpush1.msra.mxu0 0.0
    %614 = vmatprep.subr.mxu0 0.0
    %615 = vmatpush1.msra.mxu0 0.0
    %616 = vmatprep.subr.mxu0 0.0
    %617 = vmatpush1.msra.mxu0 0.0
    %618 = vmatprep.subr.mxu0 0.0
    %619 = vmatpush1.msra.mxu0 0.0
    %620 = vmatprep.subr.mxu0 0.0
    %621 = vmatpush1.msra.mxu0 0.0
    %622 = vmatprep.subr.mxu0 0.0
    %623 = vmatpush1.msra.mxu0 0.0
    %624 = vmatprep.subr.mxu0 0.0
    %625 = vmatpush1.msra.mxu0 0.0
    %626 = vmatprep.subr.mxu0 0.0
    %627 = vmatpush1.msra.mxu0 0.0
    %628 = vmatprep.subr.mxu0 0.0
    %629 = vmatpush1.msra.mxu0 0.0
    %630 = vmatprep.subr.mxu0 0.0
    %631 = vmatpush1.msra.mxu0 0.0
    %632 = vmatprep.subr.mxu0 0.0
    %633 = vmatpush1.msra.mxu0 0.0
    %634 = vmatprep.subr.mxu0 0.0
    %635 = vmatpush1.msra.mxu0 0.0
    %636 = vmatprep.subr.mxu0 0.0
    %637 = vmatpush1.msra.mxu0 0.0
    %638 = vmatprep.subr.mxu0 0.0
    %639 = vmatpush1.msra.mxu0 0.0
    %640 = vmatprep.subr.mxu0 0.0
    %641 = vmatpush1.msra.mxu0 %v532
    %642 = vmatprep.subr.mxu0 0.0
    %643 = vmatpush2.msra.mxu0 0.0
    %644 = vmatprep.subr.mxu0 0.0
    %645 = vmatpush2.msra.mxu0 0.0
    %646 = vmatprep.subr.mxu0 0.0
    %647 = vmatpush2.msra.mxu0 0.0
    %648 = vmatprep.subr.mxu0 0.0
    %649 = vmatpush2.msra.mxu0 0.0
    %650 = vmatprep.subr.mxu0 0.0
    %651 = vmatpush2.msra.mxu0 0.0
    %652 = vmatprep.subr.mxu0 0.0
    %653 = vmatpush2.msra.mxu0 0.0
    %654 = vmatprep.subr.mxu0 0.0
    %655 = vmatpush2.msra.mxu0 0.0
    %656 = vmatprep.subr.mxu0 0.0
    %657 = vmatpush2.msra.mxu0 0.0
    %658 = vmatprep.subr.mxu0 0.0
    %659 = vmatpush2.msra.mxu0 0.0
    %660 = vmatprep.subr.mxu0 0.0
    %661 = vmatpush2.msra.mxu0 0.0
    %662 = vmatprep.subr.mxu0 0.0
    %663 = vmatpush2.msra.mxu0 0.0
    %664 = vmatprep.subr.mxu0 0.0
    %665 = vmatpush2.msra.mxu0 0.0
    %666 = vmatprep.subr.mxu0 0.0
    %667 = vmatpush2.msra.mxu0 0.0
    %668 = vmatprep.subr.mxu0 0.0
    %669 = vmatpush2.msra.mxu0 0.0
    %670 = vmatprep.subr.mxu0 0.0
    %671 = vmatpush2.msra.mxu0 0.0
    %672 = vmatprep.subr.mxu0 0.0
    %673 = vmatpush2.msra.mxu0 0.0
    %674 = vmatprep.mubr.f32.mxu0 0.0
    %675 = vmatmul.mubr.f32.gmra.mxu0 %v537
    %v676 = vpop.f32.mrf.mxu0
    %v677 = vadd.f32 0.0, %v676
    %v678 = vpop.f32.mrf.mxu0
    %679 = vdwg.mxu0
    %v680 = vadd.f32 %v516, %v606
    %v681 = vadd.f32 %v517, %v608
    %v682 = vadd.f32 %v518, %v677
    %s683 = scalar_lea.vmem %s2, 32
    %v684 = vld [vmem:[%s683] sm:$0xff]
    %v686 = vsel %vm51, %v684, 0
    %688 = vmatprep.subr.mxu0 0.0
    %689 = vmatpush1.msra.mxu0 0.0
    %690 = vmatprep.subr.mxu0 0.0
    %691 = vmatpush1.msra.mxu0 0.0
    %692 = vmatprep.subr.mxu0 0.0
    %693 = vmatpush1.msra.mxu0 0.0
    %694 = vmatprep.subr.mxu0 0.0
    %695 = vmatpush1.msra.mxu0 0.0
    %696 = vmatprep.subr.mxu0 0.0
    %697 = vmatpush1.msra.mxu0 0.0
    %698 = vmatprep.subr.mxu0 0.0
    %699 = vmatpush1.msra.mxu0 0.0
    %700 = vmatprep.subr.mxu0 0.0
    %701 = vmatpush1.msra.mxu0 0.0
    %702 = vmatprep.subr.mxu0 0.0
    %703 = vmatpush1.msra.mxu0 0.0
    %704 = vmatprep.subr.mxu0 0.0
    %705 = vmatpush1.msra.mxu0 0.0
    %706 = vmatprep.subr.mxu0 0.0
    %707 = vmatpush1.msra.mxu0 0.0
    %708 = vmatprep.subr.mxu0 0.0
    %709 = vmatpush1.msra.mxu0 0.0
    %710 = vmatprep.subr.mxu0 0.0
    %711 = vmatpush1.msra.mxu0 0.0
    %712 = vmatprep.subr.mxu0 0.0
    %713 = vmatpush1.msra.mxu0 0.0
    %714 = vmatprep.subr.mxu0 0.0
    %715 = vmatpush1.msra.mxu0 0.0
    %716 = vmatprep.subr.mxu0 0.0
    %717 = vmatpush1.msra.mxu0 0.0
    %718 = vmatprep.subr.mxu0 %v27
    %719 = vmatpush1.msra.mxu0 %v26
    %720 = vmatprep.subr.mxu0 0.0
    %721 = vmatpush2.msra.mxu0 0.0
    %722 = vmatprep.subr.mxu0 0.0
    %723 = vmatpush2.msra.mxu0 0.0
    %724 = vmatprep.subr.mxu0 0.0
    %725 = vmatpush2.msra.mxu0 0.0
    %726 = vmatprep.subr.mxu0 0.0
    %727 = vmatpush2.msra.mxu0 0.0
    %728 = vmatprep.subr.mxu0 0.0
    %729 = vmatpush2.msra.mxu0 0.0
    %730 = vmatprep.subr.mxu0 0.0
    %731 = vmatpush2.msra.mxu0 0.0
    %732 = vmatprep.subr.mxu0 0.0
    %733 = vmatpush2.msra.mxu0 0.0
    %734 = vmatprep.subr.mxu0 0.0
    %735 = vmatpush2.msra.mxu0 0.0
    %736 = vmatprep.subr.mxu0 0.0
    %737 = vmatpush2.msra.mxu0 0.0
    %738 = vmatprep.subr.mxu0 0.0
    %739 = vmatpush2.msra.mxu0 0.0
    %740 = vmatprep.subr.mxu0 0.0
    %741 = vmatpush2.msra.mxu0 0.0
    %742 = vmatprep.subr.mxu0 0.0
    %743 = vmatpush2.msra.mxu0 0.0
    %744 = vmatprep.subr.mxu0 0.0
    %745 = vmatpush2.msra.mxu0 0.0
    %746 = vmatprep.subr.mxu0 0.0
    %747 = vmatpush2.msra.mxu0 0.0
    %748 = vmatprep.subr.mxu0 0.0
    %749 = vmatpush2.msra.mxu0 0.0
    %750 = vmatprep.subr.mxu0 0.0
    %751 = vmatpush2.msra.mxu0 0.0
    %752 = vmatprep.mubr.f32.mxu0 0.0
    %753 = vmatmul.mubr.f32.gmra.mxu0 %v686
    %v754 = vpop.f32.mrf.mxu0
    %v755 = vadd.f32 0.0, %v754
    %v756 = vpop.f32.mrf.mxu0
    %v757 = vadd.f32 0.0, %v756
    %758 = vdwg.mxu0
    %759 = vmatprep.subr.mxu0 0.0
    %760 = vmatpush1.msra.mxu0 0.0
    %761 = vmatprep.subr.mxu0 0.0
    %762 = vmatpush1.msra.mxu0 0.0
    %763 = vmatprep.subr.mxu0 0.0
    %764 = vmatpush1.msra.mxu0 0.0
    %765 = vmatprep.subr.mxu0 0.0
    %766 = vmatpush1.msra.mxu0 0.0
    %767 = vmatprep.subr.mxu0 0.0
    %768 = vmatpush1.msra.mxu0 0.0
    %769 = vmatprep.subr.mxu0 0.0
    %770 = vmatpush1.msra.mxu0 0.0
    %771 = vmatprep.subr.mxu0 0.0
    %772 = vmatpush1.msra.mxu0 0.0
    %773 = vmatprep.subr.mxu0 0.0
    %774 = vmatpush1.msra.mxu0 0.0
    %775 = vmatprep.subr.mxu0 0.0
    %776 = vmatpush1.msra.mxu0 0.0
    %777 = vmatprep.subr.mxu0 0.0
    %778 = vmatpush1.msra.mxu0 0.0
    %779 = vmatprep.subr.mxu0 0.0
    %780 = vmatpush1.msra.mxu0 0.0
    %781 = vmatprep.subr.mxu0 0.0
    %782 = vmatpush1.msra.mxu0 0.0
    %783 = vmatprep.subr.mxu0 0.0
    %784 = vmatpush1.msra.mxu0 0.0
    %785 = vmatprep.subr.mxu0 0.0
    %786 = vmatpush1.msra.mxu0 0.0
    %787 = vmatprep.subr.mxu0 0.0
    %788 = vmatpush1.msra.mxu0 0.0
    %789 = vmatprep.subr.mxu0 0.0
    %790 = vmatpush1.msra.mxu0 %v28
    %791 = vmatprep.subr.mxu0 0.0
    %792 = vmatpush2.msra.mxu0 0.0
    %793 = vmatprep.subr.mxu0 0.0
    %794 = vmatpush2.msra.mxu0 0.0
    %795 = vmatprep.subr.mxu0 0.0
    %796 = vmatpush2.msra.mxu0 0.0
    %797 = vmatprep.subr.mxu0 0.0
    %798 = vmatpush2.msra.mxu0 0.0
    %799 = vmatprep.subr.mxu0 0.0
    %800 = vmatpush2.msra.mxu0 0.0
    %801 = vmatprep.subr.mxu0 0.0
    %802 = vmatpush2.msra.mxu0 0.0
    %803 = vmatprep.subr.mxu0 0.0
    %804 = vmatpush2.msra.mxu0 0.0
    %805 = vmatprep.subr.mxu0 0.0
    %806 = vmatpush2.msra.mxu0 0.0
    %807 = vmatprep.subr.mxu0 0.0
    %808 = vmatpush2.msra.mxu0 0.0
    %809 = vmatprep.subr.mxu0 0.0
    %810 = vmatpush2.msra.mxu0 0.0
    %811 = vmatprep.subr.mxu0 0.0
    %812 = vmatpush2.msra.mxu0 0.0
    %813 = vmatprep.subr.mxu0 0.0
    %814 = vmatpush2.msra.mxu0 0.0
    %815 = vmatprep.subr.mxu0 0.0
    %816 = vmatpush2.msra.mxu0 0.0
    %817 = vmatprep.subr.mxu0 0.0
    %818 = vmatpush2.msra.mxu0 0.0
    %819 = vmatprep.subr.mxu0 0.0
    %820 = vmatpush2.msra.mxu0 0.0
    %821 = vmatprep.subr.mxu0 0.0
    %822 = vmatpush2.msra.mxu0 0.0
    %823 = vmatprep.mubr.f32.mxu0 0.0
    %824 = vmatmul.mubr.f32.gmra.mxu0 %v686
    %v825 = vpop.f32.mrf.mxu0
    %v826 = vadd.f32 0.0, %v825
    %v827 = vpop.f32.mrf.mxu0
    %828 = vdwg.mxu0
    %v829 = vadd.f32 %v680, %v755
    %v830 = vadd.f32 %v681, %v757
    %v831 = vadd.f32 %v682, %v826
    %v832 = vld [vmem:[%s0 + $0x8] sm:$0xff]
    %v833 = vld [vmem:[%s0 + $0x10] sm:$0xff]
    %v834 = vld [vmem:[%s0 + $0x18] sm:$0xff]
    %v835 = vld [vmem:[%s0 + $0x20] sm:$0xff]
    %s836 = scalar_lea.vmem %s2, 40
    %v837 = vld [vmem:[%s836] sm:$0xff]
    %842 = vrot.lane.b32.xlu0 %v832, 127
    %v843 = vpop.permute.xlu0 %842
    %844 = vrot.lane.b32.xlu0 %v833, 127
    %v845 = vpop.permute.xlu0 %844
    %846 = vrot.lane.b32.xlu0 %v834, 127
    %v847 = vpop.permute.xlu0 %846
    %848 = vrot.lane.b32.xlu0 %v835, 127
    %v849 = vpop.permute.xlu0 %848
    %vm850 = vcmask 1039360
    %v851 = vsel %vm850, %v843, %v845
    %v852 = vsel %vm850, %v845, %v847
    %v853 = vsel %vm850, %v847, %v849
    %v858 = vsel %vm51, %v837, 0
    %860 = vmatprep.subr.mxu0 0.0
    %861 = vmatpush1.msra.mxu0 0.0
    %862 = vmatprep.subr.mxu0 0.0
    %863 = vmatpush1.msra.mxu0 0.0
    %864 = vmatprep.subr.mxu0 0.0
    %865 = vmatpush1.msra.mxu0 0.0
    %866 = vmatprep.subr.mxu0 0.0
    %867 = vmatpush1.msra.mxu0 0.0
    %868 = vmatprep.subr.mxu0 0.0
    %869 = vmatpush1.msra.mxu0 0.0
    %870 = vmatprep.subr.mxu0 0.0
    %871 = vmatpush1.msra.mxu0 0.0
    %872 = vmatprep.subr.mxu0 0.0
    %873 = vmatpush1.msra.mxu0 0.0
    %874 = vmatprep.subr.mxu0 0.0
    %875 = vmatpush1.msra.mxu0 0.0
    %876 = vmatprep.subr.mxu0 0.0
    %877 = vmatpush1.msra.mxu0 0.0
    %878 = vmatprep.subr.mxu0 0.0
    %879 = vmatpush1.msra.mxu0 0.0
    %880 = vmatprep.subr.mxu0 0.0
    %881 = vmatpush1.msra.mxu0 0.0
    %882 = vmatprep.subr.mxu0 0.0
    %883 = vmatpush1.msra.mxu0 0.0
    %884 = vmatprep.subr.mxu0 0.0
    %885 = vmatpush1.msra.mxu0 0.0
    %886 = vmatprep.subr.mxu0 0.0
    %887 = vmatpush1.msra.mxu0 0.0
    %888 = vmatprep.subr.mxu0 0.0
    %889 = vmatpush1.msra.mxu0 0.0
    %890 = vmatprep.subr.mxu0 %v852
    %891 = vmatpush1.msra.mxu0 %v851
    %892 = vmatprep.subr.mxu0 0.0
    %893 = vmatpush2.msra.mxu0 0.0
    %894 = vmatprep.subr.mxu0 0.0
    %895 = vmatpush2.msra.mxu0 0.0
    %896 = vmatprep.subr.mxu0 0.0
    %897 = vmatpush2.msra.mxu0 0.0
    %898 = vmatprep.subr.mxu0 0.0
    %899 = vmatpush2.msra.mxu0 0.0
    %900 = vmatprep.subr.mxu0 0.0
    %901 = vmatpush2.msra.mxu0 0.0
    %902 = vmatprep.subr.mxu0 0.0
    %903 = vmatpush2.msra.mxu0 0.0
    %904 = vmatprep.subr.mxu0 0.0
    %905 = vmatpush2.msra.mxu0 0.0
    %906 = vmatprep.subr.mxu0 0.0
    %907 = vmatpush2.msra.mxu0 0.0
    %908 = vmatprep.subr.mxu0 0.0
    %909 = vmatpush2.msra.mxu0 0.0
    %910 = vmatprep.subr.mxu0 0.0
    %911 = vmatpush2.msra.mxu0 0.0
    %912 = vmatprep.subr.mxu0 0.0
    %913 = vmatpush2.msra.mxu0 0.0
    %914 = vmatprep.subr.mxu0 0.0
    %915 = vmatpush2.msra.mxu0 0.0
    %916 = vmatprep.subr.mxu0 0.0
    %917 = vmatpush2.msra.mxu0 0.0
    %918 = vmatprep.subr.mxu0 0.0
    %919 = vmatpush2.msra.mxu0 0.0
    %920 = vmatprep.subr.mxu0 0.0
    %921 = vmatpush2.msra.mxu0 0.0
    %922 = vmatprep.subr.mxu0 0.0
    %923 = vmatpush2.msra.mxu0 0.0
    %924 = vmatprep.mubr.f32.mxu0 0.0
    %925 = vmatmul.mubr.f32.gmra.mxu0 %v858
    %v926 = vpop.f32.mrf.mxu0
    %v927 = vadd.f32 0.0, %v926
    %v928 = vpop.f32.mrf.mxu0
    %v929 = vadd.f32 0.0, %v928
    %930 = vdwg.mxu0
    %931 = vmatprep.subr.mxu0 0.0
    %932 = vmatpush1.msra.mxu0 0.0
    %933 = vmatprep.subr.mxu0 0.0
    %934 = vmatpush1.msra.mxu0 0.0
    %935 = vmatprep.subr.mxu0 0.0
    %936 = vmatpush1.msra.mxu0 0.0
    %937 = vmatprep.subr.mxu0 0.0
    %938 = vmatpush1.msra.mxu0 0.0
    %939 = vmatprep.subr.mxu0 0.0
    %940 = vmatpush1.msra.mxu0 0.0
    %941 = vmatprep.subr.mxu0 0.0
    %942 = vmatpush1.msra.mxu0 0.0
    %943 = vmatprep.subr.mxu0 0.0
    %944 = vmatpush1.msra.mxu0 0.0
    %945 = vmatprep.subr.mxu0 0.0
    %946 = vmatpush1.msra.mxu0 0.0
    %947 = vmatprep.subr.mxu0 0.0
    %948 = vmatpush1.msra.mxu0 0.0
    %949 = vmatprep.subr.mxu0 0.0
    %950 = vmatpush1.msra.mxu0 0.0
    %951 = vmatprep.subr.mxu0 0.0
    %952 = vmatpush1.msra.mxu0 0.0
    %953 = vmatprep.subr.mxu0 0.0
    %954 = vmatpush1.msra.mxu0 0.0
    %955 = vmatprep.subr.mxu0 0.0
    %956 = vmatpush1.msra.mxu0 0.0
    %957 = vmatprep.subr.mxu0 0.0
    %958 = vmatpush1.msra.mxu0 0.0
    %959 = vmatprep.subr.mxu0 0.0
    %960 = vmatpush1.msra.mxu0 0.0
    %961 = vmatprep.subr.mxu0 0.0
    %962 = vmatpush1.msra.mxu0 %v853
    %963 = vmatprep.subr.mxu0 0.0
    %964 = vmatpush2.msra.mxu0 0.0
    %965 = vmatprep.subr.mxu0 0.0
    %966 = vmatpush2.msra.mxu0 0.0
    %967 = vmatprep.subr.mxu0 0.0
    %968 = vmatpush2.msra.mxu0 0.0
    %969 = vmatprep.subr.mxu0 0.0
    %970 = vmatpush2.msra.mxu0 0.0
    %971 = vmatprep.subr.mxu0 0.0
    %972 = vmatpush2.msra.mxu0 0.0
    %973 = vmatprep.subr.mxu0 0.0
    %974 = vmatpush2.msra.mxu0 0.0
    %975 = vmatprep.subr.mxu0 0.0
    %976 = vmatpush2.msra.mxu0 0.0
    %977 = vmatprep.subr.mxu0 0.0
    %978 = vmatpush2.msra.mxu0 0.0
    %979 = vmatprep.subr.mxu0 0.0
    %980 = vmatpush2.msra.mxu0 0.0
    %981 = vmatprep.subr.mxu0 0.0
    %982 = vmatpush2.msra.mxu0 0.0
    %983 = vmatprep.subr.mxu0 0.0
    %984 = vmatpush2.msra.mxu0 0.0
    %985 = vmatprep.subr.mxu0 0.0
    %986 = vmatpush2.msra.mxu0 0.0
    %987 = vmatprep.subr.mxu0 0.0
    %988 = vmatpush2.msra.mxu0 0.0
    %989 = vmatprep.subr.mxu0 0.0
    %990 = vmatpush2.msra.mxu0 0.0
    %991 = vmatprep.subr.mxu0 0.0
    %992 = vmatpush2.msra.mxu0 0.0
    %993 = vmatprep.subr.mxu0 0.0
    %994 = vmatpush2.msra.mxu0 0.0
    %995 = vmatprep.mubr.f32.mxu0 0.0
    %996 = vmatmul.mubr.f32.gmra.mxu0 %v858
    %v997 = vpop.f32.mrf.mxu0
    %v998 = vadd.f32 0.0, %v997
    %v999 = vpop.f32.mrf.mxu0
    %1000 = vdwg.mxu0
    %v1001 = vadd.f32 %v829, %v927
    %v1002 = vadd.f32 %v830, %v929
    %v1003 = vadd.f32 %v831, %v998
    %s1004 = scalar_lea.vmem %s2, 48
    %v1005 = vld [vmem:[%s1004] sm:$0xff]
    %1006 = vrot.lane.b32.xlu0 %v832, 111
    %v1007 = vpop.permute.xlu0 %1006
    %1008 = vrot.lane.b32.xlu0 %v833, 111
    %v1009 = vpop.permute.xlu0 %1008
    %1010 = vrot.lane.b32.xlu0 %v834, 111
    %v1011 = vpop.permute.xlu0 %1010
    %1012 = vrot.lane.b32.xlu0 %v835, 111
    %v1013 = vpop.permute.xlu0 %1012
    %vm1014 = vcmask 908288
    %v1015 = vsel %vm1014, %v1007, %v1009
    %v1016 = vsel %vm1014, %v1009, %v1011
    %v1017 = vsel %vm1014, %v1011, %v1013
    %v1022 = vsel %vm51, %v1005, 0
    %1024 = vmatprep.subr.mxu0 0.0
    %1025 = vmatpush1.msra.mxu0 0.0
    %1026 = vmatprep.subr.mxu0 0.0
    %1027 = vmatpush1.msra.mxu0 0.0
    %1028 = vmatprep.subr.mxu0 0.0
    %1029 = vmatpush1.msra.mxu0 0.0
    %1030 = vmatprep.subr.mxu0 0.0
    %1031 = vmatpush1.msra.mxu0 0.0
    %1032 = vmatprep.subr.mxu0 0.0
    %1033 = vmatpush1.msra.mxu0 0.0
    %1034 = vmatprep.subr.mxu0 0.0
    %1035 = vmatpush1.msra.mxu0 0.0
    %1036 = vmatprep.subr.mxu0 0.0
    %1037 = vmatpush1.msra.mxu0 0.0
    %1038 = vmatprep.subr.mxu0 0.0
    %1039 = vmatpush1.msra.mxu0 0.0
    %1040 = vmatprep.subr.mxu0 0.0
    %1041 = vmatpush1.msra.mxu0 0.0
    %1042 = vmatprep.subr.mxu0 0.0
    %1043 = vmatpush1.msra.mxu0 0.0
    %1044 = vmatprep.subr.mxu0 0.0
    %1045 = vmatpush1.msra.mxu0 0.0
    %1046 = vmatprep.subr.mxu0 0.0
    %1047 = vmatpush1.msra.mxu0 0.0
    %1048 = vmatprep.subr.mxu0 0.0
    %1049 = vmatpush1.msra.mxu0 0.0
    %1050 = vmatprep.subr.mxu0 0.0
    %1051 = vmatpush1.msra.mxu0 0.0
    %1052 = vmatprep.subr.mxu0 0.0
    %1053 = vmatpush1.msra.mxu0 0.0
    %1054 = vmatprep.subr.mxu0 %v1016
    %1055 = vmatpush1.msra.mxu0 %v1015
    %1056 = vmatprep.subr.mxu0 0.0
    %1057 = vmatpush2.msra.mxu0 0.0
    %1058 = vmatprep.subr.mxu0 0.0
    %1059 = vmatpush2.msra.mxu0 0.0
    %1060 = vmatprep.subr.mxu0 0.0
    %1061 = vmatpush2.msra.mxu0 0.0
    %1062 = vmatprep.subr.mxu0 0.0
    %1063 = vmatpush2.msra.mxu0 0.0
    %1064 = vmatprep.subr.mxu0 0.0
    %1065 = vmatpush2.msra.mxu0 0.0
    %1066 = vmatprep.subr.mxu0 0.0
    %1067 = vmatpush2.msra.mxu0 0.0
    %1068 = vmatprep.subr.mxu0 0.0
    %1069 = vmatpush2.msra.mxu0 0.0
    %1070 = vmatprep.subr.mxu0 0.0
    %1071 = vmatpush2.msra.mxu0 0.0
    %1072 = vmatprep.subr.mxu0 0.0
    %1073 = vmatpush2.msra.mxu0 0.0
    %1074 = vmatprep.subr.mxu0 0.0
    %1075 = vmatpush2.msra.mxu0 0.0
    %1076 = vmatprep.subr.mxu0 0.0
    %1077 = vmatpush2.msra.mxu0 0.0
    %1078 = vmatprep.subr.mxu0 0.0
    %1079 = vmatpush2.msra.mxu0 0.0
    %1080 = vmatprep.subr.mxu0 0.0
    %1081 = vmatpush2.msra.mxu0 0.0
    %1082 = vmatprep.subr.mxu0 0.0
    %1083 = vmatpush2.msra.mxu0 0.0
    %1084 = vmatprep.subr.mxu0 0.0
    %1085 = vmatpush2.msra.mxu0 0.0
    %1086 = vmatprep.subr.mxu0 0.0
    %1087 = vmatpush2.msra.mxu0 0.0
    %1088 = vmatprep.mubr.f32.mxu0 0.0
    %1089 = vmatmul.mubr.f32.gmra.mxu0 %v1022
    %v1090 = vpop.f32.mrf.mxu0
    %v1091 = vadd.f32 0.0, %v1090
    %v1092 = vpop.f32.mrf.mxu0
    %v1093 = vadd.f32 0.0, %v1092
    %1094 = vdwg.mxu0
    %1095 = vmatprep.subr.mxu0 0.0
    %1096 = vmatpush1.msra.mxu0 0.0
    %1097 = vmatprep.subr.mxu0 0.0
    %1098 = vmatpush1.msra.mxu0 0.0
    %1099 = vmatprep.subr.mxu0 0.0
    %1100 = vmatpush1.msra.mxu0 0.0
    %1101 = vmatprep.subr.mxu0 0.0
    %1102 = vmatpush1.msra.mxu0 0.0
    %1103 = vmatprep.subr.mxu0 0.0
    %1104 = vmatpush1.msra.mxu0 0.0
    %1105 = vmatprep.subr.mxu0 0.0
    %1106 = vmatpush1.msra.mxu0 0.0
    %1107 = vmatprep.subr.mxu0 0.0
    %1108 = vmatpush1.msra.mxu0 0.0
    %1109 = vmatprep.subr.mxu0 0.0
    %1110 = vmatpush1.msra.mxu0 0.0
    %1111 = vmatprep.subr.mxu0 0.0
    %1112 = vmatpush1.msra.mxu0 0.0
    %1113 = vmatprep.subr.mxu0 0.0
    %1114 = vmatpush1.msra.mxu0 0.0
    %1115 = vmatprep.subr.mxu0 0.0
    %1116 = vmatpush1.msra.mxu0 0.0
    %1117 = vmatprep.subr.mxu0 0.0
    %1118 = vmatpush1.msra.mxu0 0.0
    %1119 = vmatprep.subr.mxu0 0.0
    %1120 = vmatpush1.msra.mxu0 0.0
    %1121 = vmatprep.subr.mxu0 0.0
    %1122 = vmatpush1.msra.mxu0 0.0
    %1123 = vmatprep.subr.mxu0 0.0
    %1124 = vmatpush1.msra.mxu0 0.0
    %1125 = vmatprep.subr.mxu0 0.0
    %1126 = vmatpush1.msra.mxu0 %v1017
    %1127 = vmatprep.subr.mxu0 0.0
    %1128 = vmatpush2.msra.mxu0 0.0
    %1129 = vmatprep.subr.mxu0 0.0
    %1130 = vmatpush2.msra.mxu0 0.0
    %1131 = vmatprep.subr.mxu0 0.0
    %1132 = vmatpush2.msra.mxu0 0.0
    %1133 = vmatprep.subr.mxu0 0.0
    %1134 = vmatpush2.msra.mxu0 0.0
    %1135 = vmatprep.subr.mxu0 0.0
    %1136 = vmatpush2.msra.mxu0 0.0
    %1137 = vmatprep.subr.mxu0 0.0
    %1138 = vmatpush2.msra.mxu0 0.0
    %1139 = vmatprep.subr.mxu0 0.0
    %1140 = vmatpush2.msra.mxu0 0.0
    %1141 = vmatprep.subr.mxu0 0.0
    %1142 = vmatpush2.msra.mxu0 0.0
    %1143 = vmatprep.subr.mxu0 0.0
    %1144 = vmatpush2.msra.mxu0 0.0
    %1145 = vmatprep.subr.mxu0 0.0
    %1146 = vmatpush2.msra.mxu0 0.0
    %1147 = vmatprep.subr.mxu0 0.0
    %1148 = vmatpush2.msra.mxu0 0.0
    %1149 = vmatprep.subr.mxu0 0.0
    %1150 = vmatpush2.msra.mxu0 0.0
    %1151 = vmatprep.subr.mxu0 0.0
    %1152 = vmatpush2.msra.mxu0 0.0
    %1153 = vmatprep.subr.mxu0 0.0
    %1154 = vmatpush2.msra.mxu0 0.0
    %1155 = vmatprep.subr.mxu0 0.0
    %1156 = vmatpush2.msra.mxu0 0.0
    %1157 = vmatprep.subr.mxu0 0.0
    %1158 = vmatpush2.msra.mxu0 0.0
    %1159 = vmatprep.mubr.f32.mxu0 0.0
    %1160 = vmatmul.mubr.f32.gmra.mxu0 %v1022
    %v1161 = vpop.f32.mrf.mxu0
    %v1162 = vadd.f32 0.0, %v1161
    %v1163 = vpop.f32.mrf.mxu0
    %1164 = vdwg.mxu0
    %v1165 = vadd.f32 %v1001, %v1091
    %v1166 = vadd.f32 %v1002, %v1093
    %v1167 = vadd.f32 %v1003, %v1162
    %s1168 = scalar_lea.vmem %s2, 56
    %v1169 = vld [vmem:[%s1168] sm:$0xff]
    %1170 = vrot.lane.b32.xlu0 %v832, 110
    %v1171 = vpop.permute.xlu0 %1170
    %1172 = vrot.lane.b32.xlu0 %v833, 110
    %v1173 = vpop.permute.xlu0 %1172
    %1174 = vrot.lane.b32.xlu0 %v834, 110
    %v1175 = vpop.permute.xlu0 %1174
    %1176 = vrot.lane.b32.xlu0 %v835, 110
    %v1177 = vpop.permute.xlu0 %1176
    %vm1178 = vcmask 900096
    %v1179 = vsel %vm1178, %v1171, %v1173
    %v1180 = vsel %vm1178, %v1173, %v1175
    %v1181 = vsel %vm1178, %v1175, %v1177
    %v1186 = vsel %vm51, %v1169, 0
    %1188 = vmatprep.subr.mxu0 0.0
    %1189 = vmatpush1.msra.mxu0 0.0
    %1190 = vmatprep.subr.mxu0 0.0
    %1191 = vmatpush1.msra.mxu0 0.0
    %1192 = vmatprep.subr.mxu0 0.0
    %1193 = vmatpush1.msra.mxu0 0.0
    %1194 = vmatprep.subr.mxu0 0.0
    %1195 = vmatpush1.msra.mxu0 0.0
    %1196 = vmatprep.subr.mxu0 0.0
    %1197 = vmatpush1.msra.mxu0 0.0
    %1198 = vmatprep.subr.mxu0 0.0
    %1199 = vmatpush1.msra.mxu0 0.0
    %1200 = vmatprep.subr.mxu0 0.0
    %1201 = vmatpush1.msra.mxu0 0.0
    %1202 = vmatprep.subr.mxu0 0.0
    %1203 = vmatpush1.msra.mxu0 0.0
    %1204 = vmatprep.subr.mxu0 0.0
    %1205 = vmatpush1.msra.mxu0 0.0
    %1206 = vmatprep.subr.mxu0 0.0
    %1207 = vmatpush1.msra.mxu0 0.0
    %1208 = vmatprep.subr.mxu0 0.0
    %1209 = vmatpush1.msra.mxu0 0.0
    %1210 = vmatprep.subr.mxu0 0.0
    %1211 = vmatpush1.msra.mxu0 0.0
    %1212 = vmatprep.subr.mxu0 0.0
    %1213 = vmatpush1.msra.mxu0 0.0
    %1214 = vmatprep.subr.mxu0 0.0
    %1215 = vmatpush1.msra.mxu0 0.0
    %1216 = vmatprep.subr.mxu0 0.0
    %1217 = vmatpush1.msra.mxu0 0.0
    %1218 = vmatprep.subr.mxu0 %v1180
    %1219 = vmatpush1.msra.mxu0 %v1179
    %1220 = vmatprep.subr.mxu0 0.0
    %1221 = vmatpush2.msra.mxu0 0.0
    %1222 = vmatprep.subr.mxu0 0.0
    %1223 = vmatpush2.msra.mxu0 0.0
    %1224 = vmatprep.subr.mxu0 0.0
    %1225 = vmatpush2.msra.mxu0 0.0
    %1226 = vmatprep.subr.mxu0 0.0
    %1227 = vmatpush2.msra.mxu0 0.0
    %1228 = vmatprep.subr.mxu0 0.0
    %1229 = vmatpush2.msra.mxu0 0.0
    %1230 = vmatprep.subr.mxu0 0.0
    %1231 = vmatpush2.msra.mxu0 0.0
    %1232 = vmatprep.subr.mxu0 0.0
    %1233 = vmatpush2.msra.mxu0 0.0
    %1234 = vmatprep.subr.mxu0 0.0
    %1235 = vmatpush2.msra.mxu0 0.0
    %1236 = vmatprep.subr.mxu0 0.0
    %1237 = vmatpush2.msra.mxu0 0.0
    %1238 = vmatprep.subr.mxu0 0.0
    %1239 = vmatpush2.msra.mxu0 0.0
    %1240 = vmatprep.subr.mxu0 0.0
    %1241 = vmatpush2.msra.mxu0 0.0
    %1242 = vmatprep.subr.mxu0 0.0
    %1243 = vmatpush2.msra.mxu0 0.0
    %1244 = vmatprep.subr.mxu0 0.0
    %1245 = vmatpush2.msra.mxu0 0.0
    %1246 = vmatprep.subr.mxu0 0.0
    %1247 = vmatpush2.msra.mxu0 0.0
    %1248 = vmatprep.subr.mxu0 0.0
    %1249 = vmatpush2.msra.mxu0 0.0
    %1250 = vmatprep.subr.mxu0 0.0
    %1251 = vmatpush2.msra.mxu0 0.0
    %1252 = vmatprep.mubr.f32.mxu0 0.0
    %1253 = vmatmul.mubr.f32.gmra.mxu0 %v1186
    %v1254 = vpop.f32.mrf.mxu0
    %v1255 = vadd.f32 0.0, %v1254
    %v1256 = vpop.f32.mrf.mxu0
    %v1257 = vadd.f32 0.0, %v1256
    %1258 = vdwg.mxu0
    %1259 = vmatprep.subr.mxu0 0.0
    %1260 = vmatpush1.msra.mxu0 0.0
    %1261 = vmatprep.subr.mxu0 0.0
    %1262 = vmatpush1.msra.mxu0 0.0
    %1263 = vmatprep.subr.mxu0 0.0
    %1264 = vmatpush1.msra.mxu0 0.0
    %1265 = vmatprep.subr.mxu0 0.0
    %1266 = vmatpush1.msra.mxu0 0.0
    %1267 = vmatprep.subr.mxu0 0.0
    %1268 = vmatpush1.msra.mxu0 0.0
    %1269 = vmatprep.subr.mxu0 0.0
    %1270 = vmatpush1.msra.mxu0 0.0
    %1271 = vmatprep.subr.mxu0 0.0
    %1272 = vmatpush1.msra.mxu0 0.0
    %1273 = vmatprep.subr.mxu0 0.0
    %1274 = vmatpush1.msra.mxu0 0.0
    %1275 = vmatprep.subr.mxu0 0.0
    %1276 = vmatpush1.msra.mxu0 0.0
    %1277 = vmatprep.subr.mxu0 0.0
    %1278 = vmatpush1.msra.mxu0 0.0
    %1279 = vmatprep.subr.mxu0 0.0
    %1280 = vmatpush1.msra.mxu0 0.0
    %1281 = vmatprep.subr.mxu0 0.0
    %1282 = vmatpush1.msra.mxu0 0.0
    %1283 = vmatprep.subr.mxu0 0.0
    %1284 = vmatpush1.msra.mxu0 0.0
    %1285 = vmatprep.subr.mxu0 0.0
    %1286 = vmatpush1.msra.mxu0 0.0
    %1287 = vmatprep.subr.mxu0 0.0
    %1288 = vmatpush1.msra.mxu0 0.0
    %1289 = vmatprep.subr.mxu0 0.0
    %1290 = vmatpush1.msra.mxu0 %v1181
    %1291 = vmatprep.subr.mxu0 0.0
    %1292 = vmatpush2.msra.mxu0 0.0
    %1293 = vmatprep.subr.mxu0 0.0
    %1294 = vmatpush2.msra.mxu0 0.0
    %1295 = vmatprep.subr.mxu0 0.0
    %1296 = vmatpush2.msra.mxu0 0.0
    %1297 = vmatprep.subr.mxu0 0.0
    %1298 = vmatpush2.msra.mxu0 0.0
    %1299 = vmatprep.subr.mxu0 0.0
    %1300 = vmatpush2.msra.mxu0 0.0
    %1301 = vmatprep.subr.mxu0 0.0
    %1302 = vmatpush2.msra.mxu0 0.0
    %1303 = vmatprep.subr.mxu0 0.0
    %1304 = vmatpush2.msra.mxu0 0.0
    %1305 = vmatprep.subr.mxu0 0.0
    %1306 = vmatpush2.msra.mxu0 0.0
    %1307 = vmatprep.subr.mxu0 0.0
    %1308 = vmatpush2.msra.mxu0 0.0
    %1309 = vmatprep.subr.mxu0 0.0
    %1310 = vmatpush2.msra.mxu0 0.0
    %1311 = vmatprep.subr.mxu0 0.0
    %1312 = vmatpush2.msra.mxu0 0.0
    %1313 = vmatprep.subr.mxu0 0.0
    %1314 = vmatpush2.msra.mxu0 0.0
    %1315 = vmatprep.subr.mxu0 0.0
    %1316 = vmatpush2.msra.mxu0 0.0
    %1317 = vmatprep.subr.mxu0 0.0
    %1318 = vmatpush2.msra.mxu0 0.0
    %1319 = vmatprep.subr.mxu0 0.0
    %1320 = vmatpush2.msra.mxu0 0.0
    %1321 = vmatprep.subr.mxu0 0.0
    %1322 = vmatpush2.msra.mxu0 0.0
    %1323 = vmatprep.mubr.f32.mxu0 0.0
    %1324 = vmatmul.mubr.f32.gmra.mxu0 %v1186
    %v1325 = vpop.f32.mrf.mxu0
    %v1326 = vadd.f32 0.0, %v1325
    %v1327 = vpop.f32.mrf.mxu0
    %1328 = vdwg.mxu0
    %v1329 = vadd.f32 %v1165, %v1255
    %v1330 = vadd.f32 %v1166, %v1257
    %v1331 = vadd.f32 %v1167, %v1326
    %s1332 = scalar_lea.vmem %s2, 64
    %v1333 = vld [vmem:[%s1332] sm:$0xff]
    %1334 = vrot.lane.b32.xlu0 %v832, 109
    %v1335 = vpop.permute.xlu0 %1334
    %1336 = vrot.lane.b32.xlu0 %v833, 109
    %v1337 = vpop.permute.xlu0 %1336
    %1338 = vrot.lane.b32.xlu0 %v834, 109
    %v1339 = vpop.permute.xlu0 %1338
    %1340 = vrot.lane.b32.xlu0 %v835, 109
    %v1341 = vpop.permute.xlu0 %1340
    %vm1342 = vcmask 891904
    %v1343 = vsel %vm1342, %v1335, %v1337
    %v1344 = vsel %vm1342, %v1337, %v1339
    %v1345 = vsel %vm1342, %v1339, %v1341
    %v1350 = vsel %vm51, %v1333, 0
    %1352 = vmatprep.subr.mxu0 0.0
    %1353 = vmatpush1.msra.mxu0 0.0
    %1354 = vmatprep.subr.mxu0 0.0
    %1355 = vmatpush1.msra.mxu0 0.0
    %1356 = vmatprep.subr.mxu0 0.0
    %1357 = vmatpush1.msra.mxu0 0.0
    %1358 = vmatprep.subr.mxu0 0.0
    %1359 = vmatpush1.msra.mxu0 0.0
    %1360 = vmatprep.subr.mxu0 0.0
    %1361 = vmatpush1.msra.mxu0 0.0
    %1362 = vmatprep.subr.mxu0 0.0
    %1363 = vmatpush1.msra.mxu0 0.0
    %1364 = vmatprep.subr.mxu0 0.0
    %1365 = vmatpush1.msra.mxu0 0.0
    %1366 = vmatprep.subr.mxu0 0.0
    %1367 = vmatpush1.msra.mxu0 0.0
    %1368 = vmatprep.subr.mxu0 0.0
    %1369 = vmatpush1.msra.mxu0 0.0
    %1370 = vmatprep.subr.mxu0 0.0
    %1371 = vmatpush1.msra.mxu0 0.0
    %1372 = vmatprep.subr.mxu0 0.0
    %1373 = vmatpush1.msra.mxu0 0.0
    %1374 = vmatprep.subr.mxu0 0.0
    %1375 = vmatpush1.msra.mxu0 0.0
    %1376 = vmatprep.subr.mxu0 0.0
    %1377 = vmatpush1.msra.mxu0 0.0
    %1378 = vmatprep.subr.mxu0 0.0
    %1379 = vmatpush1.msra.mxu0 0.0
    %1380 = vmatprep.subr.mxu0 0.0
    %1381 = vmatpush1.msra.mxu0 0.0
    %1382 = vmatprep.subr.mxu0 %v1344
    %1383 = vmatpush1.msra.mxu0 %v1343
    %1384 = vmatprep.subr.mxu0 0.0
    %1385 = vmatpush2.msra.mxu0 0.0
    %1386 = vmatprep.subr.mxu0 0.0
    %1387 = vmatpush2.msra.mxu0 0.0
    %1388 = vmatprep.subr.mxu0 0.0
    %1389 = vmatpush2.msra.mxu0 0.0
    %1390 = vmatprep.subr.mxu0 0.0
    %1391 = vmatpush2.msra.mxu0 0.0
    %1392 = vmatprep.subr.mxu0 0.0
    %1393 = vmatpush2.msra.mxu0 0.0
    %1394 = vmatprep.subr.mxu0 0.0
    %1395 = vmatpush2.msra.mxu0 0.0
    %1396 = vmatprep.subr.mxu0 0.0
    %1397 = vmatpush2.msra.mxu0 0.0
    %1398 = vmatprep.subr.mxu0 0.0
    %1399 = vmatpush2.msra.mxu0 0.0
    %1400 = vmatprep.subr.mxu0 0.0
    %1401 = vmatpush2.msra.mxu0 0.0
    %1402 = vmatprep.subr.mxu0 0.0
    %1403 = vmatpush2.msra.mxu0 0.0
    %1404 = vmatprep.subr.mxu0 0.0
    %1405 = vmatpush2.msra.mxu0 0.0
    %1406 = vmatprep.subr.mxu0 0.0
    %1407 = vmatpush2.msra.mxu0 0.0
    %1408 = vmatprep.subr.mxu0 0.0
    %1409 = vmatpush2.msra.mxu0 0.0
    %1410 = vmatprep.subr.mxu0 0.0
    %1411 = vmatpush2.msra.mxu0 0.0
    %1412 = vmatprep.subr.mxu0 0.0
    %1413 = vmatpush2.msra.mxu0 0.0
    %1414 = vmatprep.subr.mxu0 0.0
    %1415 = vmatpush2.msra.mxu0 0.0
    %1416 = vmatprep.mubr.f32.mxu0 0.0
    %1417 = vmatmul.mubr.f32.gmra.mxu0 %v1350
    %v1418 = vpop.f32.mrf.mxu0
    %v1419 = vadd.f32 0.0, %v1418
    %v1420 = vpop.f32.mrf.mxu0
    %v1421 = vadd.f32 0.0, %v1420
    %1422 = vdwg.mxu0
    %1423 = vmatprep.subr.mxu0 0.0
    %1424 = vmatpush1.msra.mxu0 0.0
    %1425 = vmatprep.subr.mxu0 0.0
    %1426 = vmatpush1.msra.mxu0 0.0
    %1427 = vmatprep.subr.mxu0 0.0
    %1428 = vmatpush1.msra.mxu0 0.0
    %1429 = vmatprep.subr.mxu0 0.0
    %1430 = vmatpush1.msra.mxu0 0.0
    %1431 = vmatprep.subr.mxu0 0.0
    %1432 = vmatpush1.msra.mxu0 0.0
    %1433 = vmatprep.subr.mxu0 0.0
    %1434 = vmatpush1.msra.mxu0 0.0
    %1435 = vmatprep.subr.mxu0 0.0
    %1436 = vmatpush1.msra.mxu0 0.0
    %1437 = vmatprep.subr.mxu0 0.0
    %1438 = vmatpush1.msra.mxu0 0.0
    %1439 = vmatprep.subr.mxu0 0.0
    %1440 = vmatpush1.msra.mxu0 0.0
    %1441 = vmatprep.subr.mxu0 0.0
    %1442 = vmatpush1.msra.mxu0 0.0
    %1443 = vmatprep.subr.mxu0 0.0
    %1444 = vmatpush1.msra.mxu0 0.0
    %1445 = vmatprep.subr.mxu0 0.0
    %1446 = vmatpush1.msra.mxu0 0.0
    %1447 = vmatprep.subr.mxu0 0.0
    %1448 = vmatpush1.msra.mxu0 0.0
    %1449 = vmatprep.subr.mxu0 0.0
    %1450 = vmatpush1.msra.mxu0 0.0
    %1451 = vmatprep.subr.mxu0 0.0
    %1452 = vmatpush1.msra.mxu0 0.0
    %1453 = vmatprep.subr.mxu0 0.0
    %1454 = vmatpush1.msra.mxu0 %v1345
    %1455 = vmatprep.subr.mxu0 0.0
    %1456 = vmatpush2.msra.mxu0 0.0
    %1457 = vmatprep.subr.mxu0 0.0
    %1458 = vmatpush2.msra.mxu0 0.0
    %1459 = vmatprep.subr.mxu0 0.0
    %1460 = vmatpush2.msra.mxu0 0.0
    %1461 = vmatprep.subr.mxu0 0.0
    %1462 = vmatpush2.msra.mxu0 0.0
    %1463 = vmatprep.subr.mxu0 0.0
    %1464 = vmatpush2.msra.mxu0 0.0
    %1465 = vmatprep.subr.mxu0 0.0
    %1466 = vmatpush2.msra.mxu0 0.0
    %1467 = vmatprep.subr.mxu0 0.0
    %1468 = vmatpush2.msra.mxu0 0.0
    %1469 = vmatprep.subr.mxu0 0.0
    %1470 = vmatpush2.msra.mxu0 0.0
    %1471 = vmatprep.subr.mxu0 0.0
    %1472 = vmatpush2.msra.mxu0 0.0
    %1473 = vmatprep.subr.mxu0 0.0
    %1474 = vmatpush2.msra.mxu0 0.0
    %1475 = vmatprep.subr.mxu0 0.0
    %1476 = vmatpush2.msra.mxu0 0.0
    %1477 = vmatprep.subr.mxu0 0.0
    %1478 = vmatpush2.msra.mxu0 0.0
    %1479 = vmatprep.subr.mxu0 0.0
    %1480 = vmatpush2.msra.mxu0 0.0
    %1481 = vmatprep.subr.mxu0 0.0
    %1482 = vmatpush2.msra.mxu0 0.0
    %1483 = vmatprep.subr.mxu0 0.0
    %1484 = vmatpush2.msra.mxu0 0.0
    %1485 = vmatprep.subr.mxu0 0.0
    %1486 = vmatpush2.msra.mxu0 0.0
    %1487 = vmatprep.mubr.f32.mxu0 0.0
    %1488 = vmatmul.mubr.f32.gmra.mxu0 %v1350
    %v1489 = vpop.f32.mrf.mxu0
    %v1490 = vadd.f32 0.0, %v1489
    %v1491 = vpop.f32.mrf.mxu0
    %1492 = vdwg.mxu0
    %v1493 = vadd.f32 %v1329, %v1419
    %v1494 = vadd.f32 %v1330, %v1421
    %v1495 = vadd.f32 %v1331, %v1490
    %v1496 = vld [vmem:[%s3] sm:$0xff]
    %1498 = vset.pattern.permute.xlu0 0
    %1499 = vperm.xlu0 %1498, %v1496
    %v1500 = vpop.permute.xlu0 %1499
    %v1502 = vadd.f32 %v1493, %v1500
    %v1503 = vadd.f32 %v1494, %v1500
    %v1504 = vadd.f32 %v1495, %v1500
    %v1505 = vmax.f32 %v1502, 0.0
    %v1506 = vmax.f32 %v1503, 0.0
    %v1507 = vmax.f32 %v1504, 0.0
    %v1509 = vlaneseq
    %v1510 = vshrl.u32 %v1509, 7
    %v1511 = vsub.s32 0, %v1510
    %v1512 = vrot.slane %v24, %v1511
    %v1513 = vlaneseq
    %v1514 = vshrl.u32 %v1513, 7
    %v1515 = vsub.s32 1, %v1514
    %v1516 = vrot.slane %v24, %v1515
    %v1517 = vlaneseq
    %v1518 = vshrl.u32 %v1517, 7
    %v1519 = vsub.s32 2, %v1518
    %v1520 = vrot.slane %v24, %v1519
    %v1524 = vmul.f32 %v1505, %v1512
    %v1525 = vmul.f32 %v1506, %v1516
    %v1526 = vmul.f32 %v1507, %v1520
    %1527 = vst [vmem:[#allocation2] sm:$0xff] 0.0
    %1528 = vst [vmem:[#allocation2 + $0x20] sm:$0xff] 0.0
    %1529 = vst [vmem:[#allocation2 + $0x8] sm:$0xff] %v1524
    %1530 = vst [vmem:[#allocation2 + $0x10] sm:$0xff] %v1525
    %1531 = vst [vmem:[#allocation2 + $0x18] sm:$0xff] %v1526
    %v1532 = vld [vmem:[#allocation2] sm:$0xff]
    %v1533 = vld [vmem:[#allocation2 + $0x8] sm:$0xff]
    %v1534 = vld [vmem:[#allocation2 + $0x10] sm:$0xff]
    %v1535 = vld [vmem:[#allocation2 + $0x18] sm:$0xff]
    %v1536 = vld [vmem:[%s4] sm:$0xff]
    %s1537 = scalar_lea.vmem %s4, 8
    %v1538 = vld [vmem:[%s1537] sm:$0xff]
    %1543 = vrot.lane.b32.xlu0 %v1532, 18
    %v1544 = vpop.permute.xlu0 %1543
    %1545 = vrot.lane.b32.xlu0 %v1533, 18
    %v1546 = vpop.permute.xlu0 %1545
    %1547 = vrot.lane.b32.xlu0 %v1534, 18
    %v1548 = vpop.permute.xlu0 %1547
    %1549 = vrot.lane.b32.xlu0 %v1535, 18
    %v1550 = vpop.permute.xlu0 %1549
    %v1551 = vsel %vm44, %v1544, %v1546
    %v1552 = vsel %vm44, %v1546, %v1548
    %v1553 = vsel %vm44, %v1548, %v1550
    %v1558 = vsel %vm51, %v1538, 0
    %1560 = vmatprep.subr.mxu0 0.0
    %1561 = vmatpush1.msra.mxu0 0.0
    %1562 = vmatprep.subr.mxu0 0.0
    %1563 = vmatpush1.msra.mxu0 0.0
    %1564 = vmatprep.subr.mxu0 0.0
    %1565 = vmatpush1.msra.mxu0 0.0
    %1566 = vmatprep.subr.mxu0 0.0
    %1567 = vmatpush1.msra.mxu0 0.0
    %1568 = vmatprep.subr.mxu0 0.0
    %1569 = vmatpush1.msra.mxu0 0.0
    %1570 = vmatprep.subr.mxu0 0.0
    %1571 = vmatpush1.msra.mxu0 0.0
    %1572 = vmatprep.subr.mxu0 0.0
    %1573 = vmatpush1.msra.mxu0 0.0
    %1574 = vmatprep.subr.mxu0 0.0
    %1575 = vmatpush1.msra.mxu0 0.0
    %1576 = vmatprep.subr.mxu0 0.0
    %1577 = vmatpush1.msra.mxu0 0.0
    %1578 = vmatprep.subr.mxu0 0.0
    %1579 = vmatpush1.msra.mxu0 0.0
    %1580 = vmatprep.subr.mxu0 0.0
    %1581 = vmatpush1.msra.mxu0 0.0
    %1582 = vmatprep.subr.mxu0 0.0
    %1583 = vmatpush1.msra.mxu0 0.0
    %1584 = vmatprep.subr.mxu0 0.0
    %1585 = vmatpush1.msra.mxu0 0.0
    %1586 = vmatprep.subr.mxu0 0.0
    %1587 = vmatpush1.msra.mxu0 0.0
    %1588 = vmatprep.subr.mxu0 0.0
    %1589 = vmatpush1.msra.mxu0 0.0
    %1590 = vmatprep.subr.mxu0 %v1552
    %1591 = vmatpush1.msra.mxu0 %v1551
    %1592 = vmatprep.subr.mxu0 0.0
    %1593 = vmatpush2.msra.mxu0 0.0
    %1594 = vmatprep.subr.mxu0 0.0
    %1595 = vmatpush2.msra.mxu0 0.0
    %1596 = vmatprep.subr.mxu0 0.0
    %1597 = vmatpush2.msra.mxu0 0.0
    %1598 = vmatprep.subr.mxu0 0.0
    %1599 = vmatpush2.msra.mxu0 0.0
    %1600 = vmatprep.subr.mxu0 0.0
    %1601 = vmatpush2.msra.mxu0 0.0
    %1602 = vmatprep.subr.mxu0 0.0
    %1603 = vmatpush2.msra.mxu0 0.0
    %1604 = vmatprep.subr.mxu0 0.0
    %1605 = vmatpush2.msra.mxu0 0.0
    %1606 = vmatprep.subr.mxu0 0.0
    %1607 = vmatpush2.msra.mxu0 0.0
    %1608 = vmatprep.subr.mxu0 0.0
    %1609 = vmatpush2.msra.mxu0 0.0
    %1610 = vmatprep.subr.mxu0 0.0
    %1611 = vmatpush2.msra.mxu0 0.0
    %1612 = vmatprep.subr.mxu0 0.0
    %1613 = vmatpush2.msra.mxu0 0.0
    %1614 = vmatprep.subr.mxu0 0.0
    %1615 = vmatpush2.msra.mxu0 0.0
    %1616 = vmatprep.subr.mxu0 0.0
    %1617 = vmatpush2.msra.mxu0 0.0
    %1618 = vmatprep.subr.mxu0 0.0
    %1619 = vmatpush2.msra.mxu0 0.0
    %1620 = vmatprep.subr.mxu0 0.0
    %1621 = vmatpush2.msra.mxu0 0.0
    %1622 = vmatprep.subr.mxu0 0.0
    %1623 = vmatpush2.msra.mxu0 0.0
    %1624 = vmatprep.mubr.f32.mxu0 0.0
    %1625 = vmatmul.mubr.f32.gmra.mxu0 %v1558
    %v1626 = vpop.f32.mrf.mxu0
    %v1627 = vadd.f32 0.0, %v1626
    %v1628 = vpop.f32.mrf.mxu0
    %v1629 = vadd.f32 0.0, %v1628
    %1630 = vdwg.mxu0
    %1631 = vmatprep.subr.mxu0 0.0
    %1632 = vmatpush1.msra.mxu0 0.0
    %1633 = vmatprep.subr.mxu0 0.0
    %1634 = vmatpush1.msra.mxu0 0.0
    %1635 = vmatprep.subr.mxu0 0.0
    %1636 = vmatpush1.msra.mxu0 0.0
    %1637 = vmatprep.subr.mxu0 0.0
    %1638 = vmatpush1.msra.mxu0 0.0
    %1639 = vmatprep.subr.mxu0 0.0
    %1640 = vmatpush1.msra.mxu0 0.0
    %1641 = vmatprep.subr.mxu0 0.0
    %1642 = vmatpush1.msra.mxu0 0.0
    %1643 = vmatprep.subr.mxu0 0.0
    %1644 = vmatpush1.msra.mxu0 0.0
    %1645 = vmatprep.subr.mxu0 0.0
    %1646 = vmatpush1.msra.mxu0 0.0
    %1647 = vmatprep.subr.mxu0 0.0
    %1648 = vmatpush1.msra.mxu0 0.0
    %1649 = vmatprep.subr.mxu0 0.0
    %1650 = vmatpush1.msra.mxu0 0.0
    %1651 = vmatprep.subr.mxu0 0.0
    %1652 = vmatpush1.msra.mxu0 0.0
    %1653 = vmatprep.subr.mxu0 0.0
    %1654 = vmatpush1.msra.mxu0 0.0
    %1655 = vmatprep.subr.mxu0 0.0
    %1656 = vmatpush1.msra.mxu0 0.0
    %1657 = vmatprep.subr.mxu0 0.0
    %1658 = vmatpush1.msra.mxu0 0.0
    %1659 = vmatprep.subr.mxu0 0.0
    %1660 = vmatpush1.msra.mxu0 0.0
    %1661 = vmatprep.subr.mxu0 0.0
    %1662 = vmatpush1.msra.mxu0 %v1553
    %1663 = vmatprep.subr.mxu0 0.0
    %1664 = vmatpush2.msra.mxu0 0.0
    %1665 = vmatprep.subr.mxu0 0.0
    %1666 = vmatpush2.msra.mxu0 0.0
    %1667 = vmatprep.subr.mxu0 0.0
    %1668 = vmatpush2.msra.mxu0 0.0
    %1669 = vmatprep.subr.mxu0 0.0
    %1670 = vmatpush2.msra.mxu0 0.0
    %1671 = vmatprep.subr.mxu0 0.0
    %1672 = vmatpush2.msra.mxu0 0.0
    %1673 = vmatprep.subr.mxu0 0.0
    %1674 = vmatpush2.msra.mxu0 0.0
    %1675 = vmatprep.subr.mxu0 0.0
    %1676 = vmatpush2.msra.mxu0 0.0
    %1677 = vmatprep.subr.mxu0 0.0
    %1678 = vmatpush2.msra.mxu0 0.0
    %1679 = vmatprep.subr.mxu0 0.0
    %1680 = vmatpush2.msra.mxu0 0.0
    %1681 = vmatprep.subr.mxu0 0.0
    %1682 = vmatpush2.msra.mxu0 0.0
    %1683 = vmatprep.subr.mxu0 0.0
    %1684 = vmatpush2.msra.mxu0 0.0
    %1685 = vmatprep.subr.mxu0 0.0
    %1686 = vmatpush2.msra.mxu0 0.0
    %1687 = vmatprep.subr.mxu0 0.0
    %1688 = vmatpush2.msra.mxu0 0.0
    %1689 = vmatprep.subr.mxu0 0.0
    %1690 = vmatpush2.msra.mxu0 0.0
    %1691 = vmatprep.subr.mxu0 0.0
    %1692 = vmatpush2.msra.mxu0 0.0
    %1693 = vmatprep.subr.mxu0 0.0
    %1694 = vmatpush2.msra.mxu0 0.0
    %1695 = vmatprep.mubr.f32.mxu0 0.0
    %1696 = vmatmul.mubr.f32.gmra.mxu0 %v1558
    %v1697 = vpop.f32.mrf.mxu0
    %v1698 = vadd.f32 0.0, %v1697
    %v1699 = vpop.f32.mrf.mxu0
    %1700 = vdwg.mxu0
    %1701 = vrot.lane.b32.xlu0 %v1532, 19
    %v1702 = vpop.permute.xlu0 %1701
    %1703 = vrot.lane.b32.xlu0 %v1533, 19
    %v1704 = vpop.permute.xlu0 %1703
    %1705 = vrot.lane.b32.xlu0 %v1534, 19
    %v1706 = vpop.permute.xlu0 %1705
    %1707 = vrot.lane.b32.xlu0 %v1535, 19
    %v1708 = vpop.permute.xlu0 %1707
    %v1709 = vsel %vm204, %v1702, %v1704
    %v1710 = vsel %vm204, %v1704, %v1706
    %v1711 = vsel %vm204, %v1706, %v1708
    %v1716 = vsel %vm51, %v1536, 0
    %1718 = vmatprep.subr.mxu0 0.0
    %1719 = vmatpush1.msra.mxu0 0.0
    %1720 = vmatprep.subr.mxu0 0.0
    %1721 = vmatpush1.msra.mxu0 0.0
    %1722 = vmatprep.subr.mxu0 0.0
    %1723 = vmatpush1.msra.mxu0 0.0
    %1724 = vmatprep.subr.mxu0 0.0
    %1725 = vmatpush1.msra.mxu0 0.0
    %1726 = vmatprep.subr.mxu0 0.0
    %1727 = vmatpush1.msra.mxu0 0.0
    %1728 = vmatprep.subr.mxu0 0.0
    %1729 = vmatpush1.msra.mxu0 0.0
    %1730 = vmatprep.subr.mxu0 0.0
    %1731 = vmatpush1.msra.mxu0 0.0
    %1732 = vmatprep.subr.mxu0 0.0
    %1733 = vmatpush1.msra.mxu0 0.0
    %1734 = vmatprep.subr.mxu0 0.0
    %1735 = vmatpush1.msra.mxu0 0.0
    %1736 = vmatprep.subr.mxu0 0.0
    %1737 = vmatpush1.msra.mxu0 0.0
    %1738 = vmatprep.subr.mxu0 0.0
    %1739 = vmatpush1.msra.mxu0 0.0
    %1740 = vmatprep.subr.mxu0 0.0
    %1741 = vmatpush1.msra.mxu0 0.0
    %1742 = vmatprep.subr.mxu0 0.0
    %1743 = vmatpush1.msra.mxu0 0.0
    %1744 = vmatprep.subr.mxu0 0.0
    %1745 = vmatpush1.msra.mxu0 0.0
    %1746 = vmatprep.subr.mxu0 0.0
    %1747 = vmatpush1.msra.mxu0 0.0
    %1748 = vmatprep.subr.mxu0 %v1710
    %1749 = vmatpush1.msra.mxu0 %v1709
    %1750 = vmatprep.subr.mxu0 0.0
    %1751 = vmatpush2.msra.mxu0 0.0
    %1752 = vmatprep.subr.mxu0 0.0
    %1753 = vmatpush2.msra.mxu0 0.0
    %1754 = vmatprep.subr.mxu0 0.0
    %1755 = vmatpush2.msra.mxu0 0.0
    %1756 = vmatprep.subr.mxu0 0.0
    %1757 = vmatpush2.msra.mxu0 0.0
    %1758 = vmatprep.subr.mxu0 0.0
    %1759 = vmatpush2.msra.mxu0 0.0
    %1760 = vmatprep.subr.mxu0 0.0
    %1761 = vmatpush2.msra.mxu0 0.0
    %1762 = vmatprep.subr.mxu0 0.0
    %1763 = vmatpush2.msra.mxu0 0.0
    %1764 = vmatprep.subr.mxu0 0.0
    %1765 = vmatpush2.msra.mxu0 0.0
    %1766 = vmatprep.subr.mxu0 0.0
    %1767 = vmatpush2.msra.mxu0 0.0
    %1768 = vmatprep.subr.mxu0 0.0
    %1769 = vmatpush2.msra.mxu0 0.0
    %1770 = vmatprep.subr.mxu0 0.0
    %1771 = vmatpush2.msra.mxu0 0.0
    %1772 = vmatprep.subr.mxu0 0.0
    %1773 = vmatpush2.msra.mxu0 0.0
    %1774 = vmatprep.subr.mxu0 0.0
    %1775 = vmatpush2.msra.mxu0 0.0
    %1776 = vmatprep.subr.mxu0 0.0
    %1777 = vmatpush2.msra.mxu0 0.0
    %1778 = vmatprep.subr.mxu0 0.0
    %1779 = vmatpush2.msra.mxu0 0.0
    %1780 = vmatprep.subr.mxu0 0.0
    %1781 = vmatpush2.msra.mxu0 0.0
    %1782 = vmatprep.mubr.f32.mxu0 0.0
    %1783 = vmatmul.mubr.f32.gmra.mxu0 %v1716
    %v1784 = vpop.f32.mrf.mxu0
    %v1785 = vadd.f32 %v1627, %v1784
    %v1786 = vpop.f32.mrf.mxu0
    %v1787 = vadd.f32 %v1629, %v1786
    %1788 = vdwg.mxu0
    %1789 = vmatprep.subr.mxu0 0.0
    %1790 = vmatpush1.msra.mxu0 0.0
    %1791 = vmatprep.subr.mxu0 0.0
    %1792 = vmatpush1.msra.mxu0 0.0
    %1793 = vmatprep.subr.mxu0 0.0
    %1794 = vmatpush1.msra.mxu0 0.0
    %1795 = vmatprep.subr.mxu0 0.0
    %1796 = vmatpush1.msra.mxu0 0.0
    %1797 = vmatprep.subr.mxu0 0.0
    %1798 = vmatpush1.msra.mxu0 0.0
    %1799 = vmatprep.subr.mxu0 0.0
    %1800 = vmatpush1.msra.mxu0 0.0
    %1801 = vmatprep.subr.mxu0 0.0
    %1802 = vmatpush1.msra.mxu0 0.0
    %1803 = vmatprep.subr.mxu0 0.0
    %1804 = vmatpush1.msra.mxu0 0.0
    %1805 = vmatprep.subr.mxu0 0.0
    %1806 = vmatpush1.msra.mxu0 0.0
    %1807 = vmatprep.subr.mxu0 0.0
    %1808 = vmatpush1.msra.mxu0 0.0
    %1809 = vmatprep.subr.mxu0 0.0
    %1810 = vmatpush1.msra.mxu0 0.0
    %1811 = vmatprep.subr.mxu0 0.0
    %1812 = vmatpush1.msra.mxu0 0.0
    %1813 = vmatprep.subr.mxu0 0.0
    %1814 = vmatpush1.msra.mxu0 0.0
    %1815 = vmatprep.subr.mxu0 0.0
    %1816 = vmatpush1.msra.mxu0 0.0
    %1817 = vmatprep.subr.mxu0 0.0
    %1818 = vmatpush1.msra.mxu0 0.0
    %1819 = vmatprep.subr.mxu0 0.0
    %1820 = vmatpush1.msra.mxu0 %v1711
    %1821 = vmatprep.subr.mxu0 0.0
    %1822 = vmatpush2.msra.mxu0 0.0
    %1823 = vmatprep.subr.mxu0 0.0
    %1824 = vmatpush2.msra.mxu0 0.0
    %1825 = vmatprep.subr.mxu0 0.0
    %1826 = vmatpush2.msra.mxu0 0.0
    %1827 = vmatprep.subr.mxu0 0.0
    %1828 = vmatpush2.msra.mxu0 0.0
    %1829 = vmatprep.subr.mxu0 0.0
    %1830 = vmatpush2.msra.mxu0 0.0
    %1831 = vmatprep.subr.mxu0 0.0
    %1832 = vmatpush2.msra.mxu0 0.0
    %1833 = vmatprep.subr.mxu0 0.0
    %1834 = vmatpush2.msra.mxu0 0.0
    %1835 = vmatprep.subr.mxu0 0.0
    %1836 = vmatpush2.msra.mxu0 0.0
    %1837 = vmatprep.subr.mxu0 0.0
    %1838 = vmatpush2.msra.mxu0 0.0
    %1839 = vmatprep.subr.mxu0 0.0
    %1840 = vmatpush2.msra.mxu0 0.0
    %1841 = vmatprep.subr.mxu0 0.0
    %1842 = vmatpush2.msra.mxu0 0.0
    %1843 = vmatprep.subr.mxu0 0.0
    %1844 = vmatpush2.msra.mxu0 0.0
    %1845 = vmatprep.subr.mxu0 0.0
    %1846 = vmatpush2.msra.mxu0 0.0
    %1847 = vmatprep.subr.mxu0 0.0
    %1848 = vmatpush2.msra.mxu0 0.0
    %1849 = vmatprep.subr.mxu0 0.0
    %1850 = vmatpush2.msra.mxu0 0.0
    %1851 = vmatprep.subr.mxu0 0.0
    %1852 = vmatpush2.msra.mxu0 0.0
    %1853 = vmatprep.mubr.f32.mxu0 0.0
    %1854 = vmatmul.mubr.f32.gmra.mxu0 %v1716
    %v1855 = vpop.f32.mrf.mxu0
    %v1856 = vadd.f32 %v1698, %v1855
    %v1857 = vpop.f32.mrf.mxu0
    %1858 = vdwg.mxu0
    %s1859 = scalar_lea.vmem %s4, 16
    %v1860 = vld [vmem:[%s1859] sm:$0xff]
    %1861 = vrot.lane.b32.xlu0 %v1532, 17
    %v1862 = vpop.permute.xlu0 %1861
    %1863 = vrot.lane.b32.xlu0 %v1533, 17
    %v1864 = vpop.permute.xlu0 %1863
    %1865 = vrot.lane.b32.xlu0 %v1534, 17
    %v1866 = vpop.permute.xlu0 %1865
    %1867 = vrot.lane.b32.xlu0 %v1535, 17
    %v1868 = vpop.permute.xlu0 %1867
    %v1869 = vsel %vm365, %v1862, %v1864
    %v1870 = vsel %vm365, %v1864, %v1866
    %v1871 = vsel %vm365, %v1866, %v1868
    %v1876 = vsel %vm51, %v1860, 0
    %1878 = vmatprep.subr.mxu0 0.0
    %1879 = vmatpush1.msra.mxu0 0.0
    %1880 = vmatprep.subr.mxu0 0.0
    %1881 = vmatpush1.msra.mxu0 0.0
    %1882 = vmatprep.subr.mxu0 0.0
    %1883 = vmatpush1.msra.mxu0 0.0
    %1884 = vmatprep.subr.mxu0 0.0
    %1885 = vmatpush1.msra.mxu0 0.0
    %1886 = vmatprep.subr.mxu0 0.0
    %1887 = vmatpush1.msra.mxu0 0.0
    %1888 = vmatprep.subr.mxu0 0.0
    %1889 = vmatpush1.msra.mxu0 0.0
    %1890 = vmatprep.subr.mxu0 0.0
    %1891 = vmatpush1.msra.mxu0 0.0
    %1892 = vmatprep.subr.mxu0 0.0
    %1893 = vmatpush1.msra.mxu0 0.0
    %1894 = vmatprep.subr.mxu0 0.0
    %1895 = vmatpush1.msra.mxu0 0.0
    %1896 = vmatprep.subr.mxu0 0.0
    %1897 = vmatpush1.msra.mxu0 0.0
    %1898 = vmatprep.subr.mxu0 0.0
    %1899 = vmatpush1.msra.mxu0 0.0
    %1900 = vmatprep.subr.mxu0 0.0
    %1901 = vmatpush1.msra.mxu0 0.0
    %1902 = vmatprep.subr.mxu0 0.0
    %1903 = vmatpush1.msra.mxu0 0.0
    %1904 = vmatprep.subr.mxu0 0.0
    %1905 = vmatpush1.msra.mxu0 0.0
    %1906 = vmatprep.subr.mxu0 0.0
    %1907 = vmatpush1.msra.mxu0 0.0
    %1908 = vmatprep.subr.mxu0 %v1870
    %1909 = vmatpush1.msra.mxu0 %v1869
    %1910 = vmatprep.subr.mxu0 0.0
    %1911 = vmatpush2.msra.mxu0 0.0
    %1912 = vmatprep.subr.mxu0 0.0
    %1913 = vmatpush2.msra.mxu0 0.0
    %1914 = vmatprep.subr.mxu0 0.0
    %1915 = vmatpush2.msra.mxu0 0.0
    %1916 = vmatprep.subr.mxu0 0.0
    %1917 = vmatpush2.msra.mxu0 0.0
    %1918 = vmatprep.subr.mxu0 0.0
    %1919 = vmatpush2.msra.mxu0 0.0
    %1920 = vmatprep.subr.mxu0 0.0
    %1921 = vmatpush2.msra.mxu0 0.0
    %1922 = vmatprep.subr.mxu0 0.0
    %1923 = vmatpush2.msra.mxu0 0.0
    %1924 = vmatprep.subr.mxu0 0.0
    %1925 = vmatpush2.msra.mxu0 0.0
    %1926 = vmatprep.subr.mxu0 0.0
    %1927 = vmatpush2.msra.mxu0 0.0
    %1928 = vmatprep.subr.mxu0 0.0
    %1929 = vmatpush2.msra.mxu0 0.0
    %1930 = vmatprep.subr.mxu0 0.0
    %1931 = vmatpush2.msra.mxu0 0.0
    %1932 = vmatprep.subr.mxu0 0.0
    %1933 = vmatpush2.msra.mxu0 0.0
    %1934 = vmatprep.subr.mxu0 0.0
    %1935 = vmatpush2.msra.mxu0 0.0
    %1936 = vmatprep.subr.mxu0 0.0
    %1937 = vmatpush2.msra.mxu0 0.0
    %1938 = vmatprep.subr.mxu0 0.0
    %1939 = vmatpush2.msra.mxu0 0.0
    %1940 = vmatprep.subr.mxu0 0.0
    %1941 = vmatpush2.msra.mxu0 0.0
    %1942 = vmatprep.mubr.f32.mxu0 0.0
    %1943 = vmatmul.mubr.f32.gmra.mxu0 %v1876
    %v1944 = vpop.f32.mrf.mxu0
    %v1945 = vadd.f32 0.0, %v1944
    %v1946 = vpop.f32.mrf.mxu0
    %v1947 = vadd.f32 0.0, %v1946
    %1948 = vdwg.mxu0
    %1949 = vmatprep.subr.mxu0 0.0
    %1950 = vmatpush1.msra.mxu0 0.0
    %1951 = vmatprep.subr.mxu0 0.0
    %1952 = vmatpush1.msra.mxu0 0.0
    %1953 = vmatprep.subr.mxu0 0.0
    %1954 = vmatpush1.msra.mxu0 0.0
    %1955 = vmatprep.subr.mxu0 0.0
    %1956 = vmatpush1.msra.mxu0 0.0
    %1957 = vmatprep.subr.mxu0 0.0
    %1958 = vmatpush1.msra.mxu0 0.0
    %1959 = vmatprep.subr.mxu0 0.0
    %1960 = vmatpush1.msra.mxu0 0.0
    %1961 = vmatprep.subr.mxu0 0.0
    %1962 = vmatpush1.msra.mxu0 0.0
    %1963 = vmatprep.subr.mxu0 0.0
    %1964 = vmatpush1.msra.mxu0 0.0
    %1965 = vmatprep.subr.mxu0 0.0
    %1966 = vmatpush1.msra.mxu0 0.0
    %1967 = vmatprep.subr.mxu0 0.0
    %1968 = vmatpush1.msra.mxu0 0.0
    %1969 = vmatprep.subr.mxu0 0.0
    %1970 = vmatpush1.msra.mxu0 0.0
    %1971 = vmatprep.subr.mxu0 0.0
    %1972 = vmatpush1.msra.mxu0 0.0
    %1973 = vmatprep.subr.mxu0 0.0
    %1974 = vmatpush1.msra.mxu0 0.0
    %1975 = vmatprep.subr.mxu0 0.0
    %1976 = vmatpush1.msra.mxu0 0.0
    %1977 = vmatprep.subr.mxu0 0.0
    %1978 = vmatpush1.msra.mxu0 0.0
    %1979 = vmatprep.subr.mxu0 0.0
    %1980 = vmatpush1.msra.mxu0 %v1871
    %1981 = vmatprep.subr.mxu0 0.0
    %1982 = vmatpush2.msra.mxu0 0.0
    %1983 = vmatprep.subr.mxu0 0.0
    %1984 = vmatpush2.msra.mxu0 0.0
    %1985 = vmatprep.subr.mxu0 0.0
    %1986 = vmatpush2.msra.mxu0 0.0
    %1987 = vmatprep.subr.mxu0 0.0
    %1988 = vmatpush2.msra.mxu0 0.0
    %1989 = vmatprep.subr.mxu0 0.0
    %1990 = vmatpush2.msra.mxu0 0.0
    %1991 = vmatprep.subr.mxu0 0.0
    %1992 = vmatpush2.msra.mxu0 0.0
    %1993 = vmatprep.subr.mxu0 0.0
    %1994 = vmatpush2.msra.mxu0 0.0
    %1995 = vmatprep.subr.mxu0 0.0
    %1996 = vmatpush2.msra.mxu0 0.0
    %1997 = vmatprep.subr.mxu0 0.0
    %1998 = vmatpush2.msra.mxu0 0.0
    %1999 = vmatprep.subr.mxu0 0.0
    %2000 = vmatpush2.msra.mxu0 0.0
    %2001 = vmatprep.subr.mxu0 0.0
    %2002 = vmatpush2.msra.mxu0 0.0
    %2003 = vmatprep.subr.mxu0 0.0
    %2004 = vmatpush2.msra.mxu0 0.0
    %2005 = vmatprep.subr.mxu0 0.0
    %2006 = vmatpush2.msra.mxu0 0.0
    %2007 = vmatprep.subr.mxu0 0.0
    %2008 = vmatpush2.msra.mxu0 0.0
    %2009 = vmatprep.subr.mxu0 0.0
    %2010 = vmatpush2.msra.mxu0 0.0
    %2011 = vmatprep.subr.mxu0 0.0
    %2012 = vmatpush2.msra.mxu0 0.0
    %2013 = vmatprep.mubr.f32.mxu0 0.0
    %2014 = vmatmul.mubr.f32.gmra.mxu0 %v1876
    %v2015 = vpop.f32.mrf.mxu0
    %v2016 = vadd.f32 0.0, %v2015
    %v2017 = vpop.f32.mrf.mxu0
    %2018 = vdwg.mxu0
    %v2019 = vadd.f32 %v1785, %v1945
    %v2020 = vadd.f32 %v1787, %v1947
    %v2021 = vadd.f32 %v1856, %v2016
    %s2022 = scalar_lea.vmem %s4, 24
    %v2023 = vld [vmem:[%s2022] sm:$0xff]
    %2024 = vrot.lane.b32.xlu0 %v1532, 1
    %v2025 = vpop.permute.xlu0 %2024
    %2026 = vrot.lane.b32.xlu0 %v1533, 1
    %v2027 = vpop.permute.xlu0 %2026
    %2028 = vrot.lane.b32.xlu0 %v1534, 1
    %v2029 = vpop.permute.xlu0 %2028
    %2030 = vrot.lane.b32.xlu0 %v1535, 1
    %v2031 = vpop.permute.xlu0 %2030
    %v2032 = vsel %vm529, %v2025, %v2027
    %v2033 = vsel %vm529, %v2027, %v2029
    %v2034 = vsel %vm529, %v2029, %v2031
    %v2039 = vsel %vm51, %v2023, 0
    %2041 = vmatprep.subr.mxu0 0.0
    %2042 = vmatpush1.msra.mxu0 0.0
    %2043 = vmatprep.subr.mxu0 0.0
    %2044 = vmatpush1.msra.mxu0 0.0
    %2045 = vmatprep.subr.mxu0 0.0
    %2046 = vmatpush1.msra.mxu0 0.0
    %2047 = vmatprep.subr.mxu0 0.0
    %2048 = vmatpush1.msra.mxu0 0.0
    %2049 = vmatprep.subr.mxu0 0.0
    %2050 = vmatpush1.msra.mxu0 0.0
    %2051 = vmatprep.subr.mxu0 0.0
    %2052 = vmatpush1.msra.mxu0 0.0
    %2053 = vmatprep.subr.mxu0 0.0
    %2054 = vmatpush1.msra.mxu0 0.0
    %2055 = vmatprep.subr.mxu0 0.0
    %2056 = vmatpush1.msra.mxu0 0.0
    %2057 = vmatprep.subr.mxu0 0.0
    %2058 = vmatpush1.msra.mxu0 0.0
    %2059 = vmatprep.subr.mxu0 0.0
    %2060 = vmatpush1.msra.mxu0 0.0
    %2061 = vmatprep.subr.mxu0 0.0
    %2062 = vmatpush1.msra.mxu0 0.0
    %2063 = vmatprep.subr.mxu0 0.0
    %2064 = vmatpush1.msra.mxu0 0.0
    %2065 = vmatprep.subr.mxu0 0.0
    %2066 = vmatpush1.msra.mxu0 0.0
    %2067 = vmatprep.subr.mxu0 0.0
    %2068 = vmatpush1.msra.mxu0 0.0
    %2069 = vmatprep.subr.mxu0 0.0
    %2070 = vmatpush1.msra.mxu0 0.0
    %2071 = vmatprep.subr.mxu0 %v2033
    %2072 = vmatpush1.msra.mxu0 %v2032
    %2073 = vmatprep.subr.mxu0 0.0
    %2074 = vmatpush2.msra.mxu0 0.0
    %2075 = vmatprep.subr.mxu0 0.0
    %2076 = vmatpush2.msra.mxu0 0.0
    %2077 = vmatprep.subr.mxu0 0.0
    %2078 = vmatpush2.msra.mxu0 0.0
    %2079 = vmatprep.subr.mxu0 0.0
    %2080 = vmatpush2.msra.mxu0 0.0
    %2081 = vmatprep.subr.mxu0 0.0
    %2082 = vmatpush2.msra.mxu0 0.0
    %2083 = vmatprep.subr.mxu0 0.0
    %2084 = vmatpush2.msra.mxu0 0.0
    %2085 = vmatprep.subr.mxu0 0.0
    %2086 = vmatpush2.msra.mxu0 0.0
    %2087 = vmatprep.subr.mxu0 0.0
    %2088 = vmatpush2.msra.mxu0 0.0
    %2089 = vmatprep.subr.mxu0 0.0
    %2090 = vmatpush2.msra.mxu0 0.0
    %2091 = vmatprep.subr.mxu0 0.0
    %2092 = vmatpush2.msra.mxu0 0.0
    %2093 = vmatprep.subr.mxu0 0.0
    %2094 = vmatpush2.msra.mxu0 0.0
    %2095 = vmatprep.subr.mxu0 0.0
    %2096 = vmatpush2.msra.mxu0 0.0
    %2097 = vmatprep.subr.mxu0 0.0
    %2098 = vmatpush2.msra.mxu0 0.0
    %2099 = vmatprep.subr.mxu0 0.0
    %2100 = vmatpush2.msra.mxu0 0.0
    %2101 = vmatprep.subr.mxu0 0.0
    %2102 = vmatpush2.msra.mxu0 0.0
    %2103 = vmatprep.subr.mxu0 0.0
    %2104 = vmatpush2.msra.mxu0 0.0
    %2105 = vmatprep.mubr.f32.mxu0 0.0
    %2106 = vmatmul.mubr.f32.gmra.mxu0 %v2039
    %v2107 = vpop.f32.mrf.mxu0
    %v2108 = vadd.f32 0.0, %v2107
    %v2109 = vpop.f32.mrf.mxu0
    %v2110 = vadd.f32 0.0, %v2109
    %2111 = vdwg.mxu0
    %2112 = vmatprep.subr.mxu0 0.0
    %2113 = vmatpush1.msra.mxu0 0.0
    %2114 = vmatprep.subr.mxu0 0.0
    %2115 = vmatpush1.msra.mxu0 0.0
    %2116 = vmatprep.subr.mxu0 0.0
    %2117 = vmatpush1.msra.mxu0 0.0
    %2118 = vmatprep.subr.mxu0 0.0
    %2119 = vmatpush1.msra.mxu0 0.0
    %2120 = vmatprep.subr.mxu0 0.0
    %2121 = vmatpush1.msra.mxu0 0.0
    %2122 = vmatprep.subr.mxu0 0.0
    %2123 = vmatpush1.msra.mxu0 0.0
    %2124 = vmatprep.subr.mxu0 0.0
    %2125 = vmatpush1.msra.mxu0 0.0
    %2126 = vmatprep.subr.mxu0 0.0
    %2127 = vmatpush1.msra.mxu0 0.0
    %2128 = vmatprep.subr.mxu0 0.0
    %2129 = vmatpush1.msra.mxu0 0.0
    %2130 = vmatprep.subr.mxu0 0.0
    %2131 = vmatpush1.msra.mxu0 0.0
    %2132 = vmatprep.subr.mxu0 0.0
    %2133 = vmatpush1.msra.mxu0 0.0
    %2134 = vmatprep.subr.mxu0 0.0
    %2135 = vmatpush1.msra.mxu0 0.0
    %2136 = vmatprep.subr.mxu0 0.0
    %2137 = vmatpush1.msra.mxu0 0.0
    %2138 = vmatprep.subr.mxu0 0.0
    %2139 = vmatpush1.msra.mxu0 0.0
    %2140 = vmatprep.subr.mxu0 0.0
    %2141 = vmatpush1.msra.mxu0 0.0
    %2142 = vmatprep.subr.mxu0 0.0
    %2143 = vmatpush1.msra.mxu0 %v2034
    %2144 = vmatprep.subr.mxu0 0.0
    %2145 = vmatpush2.msra.mxu0 0.0
    %2146 = vmatprep.subr.mxu0 0.0
    %2147 = vmatpush2.msra.mxu0 0.0
    %2148 = vmatprep.subr.mxu0 0.0
    %2149 = vmatpush2.msra.mxu0 0.0
    %2150 = vmatprep.subr.mxu0 0.0
    %2151 = vmatpush2.msra.mxu0 0.0
    %2152 = vmatprep.subr.mxu0 0.0
    %2153 = vmatpush2.msra.mxu0 0.0
    %2154 = vmatprep.subr.mxu0 0.0
    %2155 = vmatpush2.msra.mxu0 0.0
    %2156 = vmatprep.subr.mxu0 0.0
    %2157 = vmatpush2.msra.mxu0 0.0
    %2158 = vmatprep.subr.mxu0 0.0
    %2159 = vmatpush2.msra.mxu0 0.0
    %2160 = vmatprep.subr.mxu0 0.0
    %2161 = vmatpush2.msra.mxu0 0.0
    %2162 = vmatprep.subr.mxu0 0.0
    %2163 = vmatpush2.msra.mxu0 0.0
    %2164 = vmatprep.subr.mxu0 0.0
    %2165 = vmatpush2.msra.mxu0 0.0
    %2166 = vmatprep.subr.mxu0 0.0
    %2167 = vmatpush2.msra.mxu0 0.0
    %2168 = vmatprep.subr.mxu0 0.0
    %2169 = vmatpush2.msra.mxu0 0.0
    %2170 = vmatprep.subr.mxu0 0.0
    %2171 = vmatpush2.msra.mxu0 0.0
    %2172 = vmatprep.subr.mxu0 0.0
    %2173 = vmatpush2.msra.mxu0 0.0
    %2174 = vmatprep.subr.mxu0 0.0
    %2175 = vmatpush2.msra.mxu0 0.0
    %2176 = vmatprep.mubr.f32.mxu0 0.0
    %2177 = vmatmul.mubr.f32.gmra.mxu0 %v2039
    %v2178 = vpop.f32.mrf.mxu0
    %v2179 = vadd.f32 0.0, %v2178
    %v2180 = vpop.f32.mrf.mxu0
    %2181 = vdwg.mxu0
    %v2182 = vadd.f32 %v2019, %v2108
    %v2183 = vadd.f32 %v2020, %v2110
    %v2184 = vadd.f32 %v2021, %v2179
    %s2185 = scalar_lea.vmem %s4, 32
    %v2186 = vld [vmem:[%s2185] sm:$0xff]
    %v2188 = vsel %vm51, %v2186, 0
    %2190 = vmatprep.subr.mxu0 0.0
    %2191 = vmatpush1.msra.mxu0 0.0
    %2192 = vmatprep.subr.mxu0 0.0
    %2193 = vmatpush1.msra.mxu0 0.0
    %2194 = vmatprep.subr.mxu0 0.0
    %2195 = vmatpush1.msra.mxu0 0.0
    %2196 = vmatprep.subr.mxu0 0.0
    %2197 = vmatpush1.msra.mxu0 0.0
    %2198 = vmatprep.subr.mxu0 0.0
    %2199 = vmatpush1.msra.mxu0 0.0
    %2200 = vmatprep.subr.mxu0 0.0
    %2201 = vmatpush1.msra.mxu0 0.0
    %2202 = vmatprep.subr.mxu0 0.0
    %2203 = vmatpush1.msra.mxu0 0.0
    %2204 = vmatprep.subr.mxu0 0.0
    %2205 = vmatpush1.msra.mxu0 0.0
    %2206 = vmatprep.subr.mxu0 0.0
    %2207 = vmatpush1.msra.mxu0 0.0
    %2208 = vmatprep.subr.mxu0 0.0
    %2209 = vmatpush1.msra.mxu0 0.0
    %2210 = vmatprep.subr.mxu0 0.0
    %2211 = vmatpush1.msra.mxu0 0.0
    %2212 = vmatprep.subr.mxu0 0.0
    %2213 = vmatpush1.msra.mxu0 0.0
    %2214 = vmatprep.subr.mxu0 0.0
    %2215 = vmatpush1.msra.mxu0 0.0
    %2216 = vmatprep.subr.mxu0 0.0
    %2217 = vmatpush1.msra.mxu0 0.0
    %2218 = vmatprep.subr.mxu0 0.0
    %2219 = vmatpush1.msra.mxu0 0.0
    %2220 = vmatprep.subr.mxu0 %v1534
    %2221 = vmatpush1.msra.mxu0 %v1533
    %2222 = vmatprep.subr.mxu0 0.0
    %2223 = vmatpush2.msra.mxu0 0.0
    %2224 = vmatprep.subr.mxu0 0.0
    %2225 = vmatpush2.msra.mxu0 0.0
    %2226 = vmatprep.subr.mxu0 0.0
    %2227 = vmatpush2.msra.mxu0 0.0
    %2228 = vmatprep.subr.mxu0 0.0
    %2229 = vmatpush2.msra.mxu0 0.0
    %2230 = vmatprep.subr.mxu0 0.0
    %2231 = vmatpush2.msra.mxu0 0.0
    %2232 = vmatprep.subr.mxu0 0.0
    %2233 = vmatpush2.msra.mxu0 0.0
    %2234 = vmatprep.subr.mxu0 0.0
    %2235 = vmatpush2.msra.mxu0 0.0
    %2236 = vmatprep.subr.mxu0 0.0
    %2237 = vmatpush2.msra.mxu0 0.0
    %2238 = vmatprep.subr.mxu0 0.0
    %2239 = vmatpush2.msra.mxu0 0.0
    %2240 = vmatprep.subr.mxu0 0.0
    %2241 = vmatpush2.msra.mxu0 0.0
    %2242 = vmatprep.subr.mxu0 0.0
    %2243 = vmatpush2.msra.mxu0 0.0
    %2244 = vmatprep.subr.mxu0 0.0
    %2245 = vmatpush2.msra.mxu0 0.0
    %2246 = vmatprep.subr.mxu0 0.0
    %2247 = vmatpush2.msra.mxu0 0.0
    %2248 = vmatprep.subr.mxu0 0.0
    %2249 = vmatpush2.msra.mxu0 0.0
    %2250 = vmatprep.subr.mxu0 0.0
    %2251 = vmatpush2.msra.mxu0 0.0
    %2252 = vmatprep.subr.mxu0 0.0
    %2253 = vmatpush2.msra.mxu0 0.0
    %2254 = vmatprep.mubr.f32.mxu0 0.0
    %2255 = vmatmul.mubr.f32.gmra.mxu0 %v2188
    %v2256 = vpop.f32.mrf.mxu0
    %v2257 = vadd.f32 0.0, %v2256
    %v2258 = vpop.f32.mrf.mxu0
    %v2259 = vadd.f32 0.0, %v2258
    %2260 = vdwg.mxu0
    %2261 = vmatprep.subr.mxu0 0.0
    %2262 = vmatpush1.msra.mxu0 0.0
    %2263 = vmatprep.subr.mxu0 0.0
    %2264 = vmatpush1.msra.mxu0 0.0
    %2265 = vmatprep.subr.mxu0 0.0
    %2266 = vmatpush1.msra.mxu0 0.0
    %2267 = vmatprep.subr.mxu0 0.0
    %2268 = vmatpush1.msra.mxu0 0.0
    %2269 = vmatprep.subr.mxu0 0.0
    %2270 = vmatpush1.msra.mxu0 0.0
    %2271 = vmatprep.subr.mxu0 0.0
    %2272 = vmatpush1.msra.mxu0 0.0
    %2273 = vmatprep.subr.mxu0 0.0
    %2274 = vmatpush1.msra.mxu0 0.0
    %2275 = vmatprep.subr.mxu0 0.0
    %2276 = vmatpush1.msra.mxu0 0.0
    %2277 = vmatprep.subr.mxu0 0.0
    %2278 = vmatpush1.msra.mxu0 0.0
    %2279 = vmatprep.subr.mxu0 0.0
    %2280 = vmatpush1.msra.mxu0 0.0
    %2281 = vmatprep.subr.mxu0 0.0
    %2282 = vmatpush1.msra.mxu0 0.0
    %2283 = vmatprep.subr.mxu0 0.0
    %2284 = vmatpush1.msra.mxu0 0.0
    %2285 = vmatprep.subr.mxu0 0.0
    %2286 = vmatpush1.msra.mxu0 0.0
    %2287 = vmatprep.subr.mxu0 0.0
    %2288 = vmatpush1.msra.mxu0 0.0
    %2289 = vmatprep.subr.mxu0 0.0
    %2290 = vmatpush1.msra.mxu0 0.0
    %2291 = vmatprep.subr.mxu0 0.0
    %2292 = vmatpush1.msra.mxu0 %v1535
    %2293 = vmatprep.subr.mxu0 0.0
    %2294 = vmatpush2.msra.mxu0 0.0
    %2295 = vmatprep.subr.mxu0 0.0
    %2296 = vmatpush2.msra.mxu0 0.0
    %2297 = vmatprep.subr.mxu0 0.0
    %2298 = vmatpush2.msra.mxu0 0.0
    %2299 = vmatprep.subr.mxu0 0.0
    %2300 = vmatpush2.msra.mxu0 0.0
    %2301 = vmatprep.subr.mxu0 0.0
    %2302 = vmatpush2.msra.mxu0 0.0
    %2303 = vmatprep.subr.mxu0 0.0
    %2304 = vmatpush2.msra.mxu0 0.0
    %2305 = vmatprep.subr.mxu0 0.0
    %2306 = vmatpush2.msra.mxu0 0.0
    %2307 = vmatprep.subr.mxu0 0.0
    %2308 = vmatpush2.msra.mxu0 0.0
    %2309 = vmatprep.subr.mxu0 0.0
    %2310 = vmatpush2.msra.mxu0 0.0
    %2311 = vmatprep.subr.mxu0 0.0
    %2312 = vmatpush2.msra.mxu0 0.0
    %2313 = vmatprep.subr.mxu0 0.0
    %2314 = vmatpush2.msra.mxu0 0.0
    %2315 = vmatprep.subr.mxu0 0.0
    %2316 = vmatpush2.msra.mxu0 0.0
    %2317 = vmatprep.subr.mxu0 0.0
    %2318 = vmatpush2.msra.mxu0 0.0
    %2319 = vmatprep.subr.mxu0 0.0
    %2320 = vmatpush2.msra.mxu0 0.0
    %2321 = vmatprep.subr.mxu0 0.0
    %2322 = vmatpush2.msra.mxu0 0.0
    %2323 = vmatprep.subr.mxu0 0.0
    %2324 = vmatpush2.msra.mxu0 0.0
    %2325 = vmatprep.mubr.f32.mxu0 0.0
    %2326 = vmatmul.mubr.f32.gmra.mxu0 %v2188
    %v2327 = vpop.f32.mrf.mxu0
    %v2328 = vadd.f32 0.0, %v2327
    %v2329 = vpop.f32.mrf.mxu0
    %2330 = vdwg.mxu0
    %v2331 = vadd.f32 %v2182, %v2257
    %v2332 = vadd.f32 %v2183, %v2259
    %v2333 = vadd.f32 %v2184, %v2328
    %v2334 = vld [vmem:[#allocation2 + $0x8] sm:$0xff]
    %v2335 = vld [vmem:[#allocation2 + $0x10] sm:$0xff]
    %v2336 = vld [vmem:[#allocation2 + $0x18] sm:$0xff]
    %v2337 = vld [vmem:[#allocation2 + $0x20] sm:$0xff]
    %s2338 = scalar_lea.vmem %s4, 40
    %v2339 = vld [vmem:[%s2338] sm:$0xff]
    %2344 = vrot.lane.b32.xlu0 %v2334, 127
    %v2345 = vpop.permute.xlu0 %2344
    %2346 = vrot.lane.b32.xlu0 %v2335, 127
    %v2347 = vpop.permute.xlu0 %2346
    %2348 = vrot.lane.b32.xlu0 %v2336, 127
    %v2349 = vpop.permute.xlu0 %2348
    %2350 = vrot.lane.b32.xlu0 %v2337, 127
    %v2351 = vpop.permute.xlu0 %2350
    %v2352 = vsel %vm850, %v2345, %v2347
    %v2353 = vsel %vm850, %v2347, %v2349
    %v2354 = vsel %vm850, %v2349, %v2351
    %v2359 = vsel %vm51, %v2339, 0
    %2361 = vmatprep.subr.mxu0 0.0
    %2362 = vmatpush1.msra.mxu0 0.0
    %2363 = vmatprep.subr.mxu0 0.0
    %2364 = vmatpush1.msra.mxu0 0.0
    %2365 = vmatprep.subr.mxu0 0.0
    %2366 = vmatpush1.msra.mxu0 0.0
    %2367 = vmatprep.subr.mxu0 0.0
    %2368 = vmatpush1.msra.mxu0 0.0
    %2369 = vmatprep.subr.mxu0 0.0
    %2370 = vmatpush1.msra.mxu0 0.0
    %2371 = vmatprep.subr.mxu0 0.0
    %2372 = vmatpush1.msra.mxu0 0.0
    %2373 = vmatprep.subr.mxu0 0.0
    %2374 = vmatpush1.msra.mxu0 0.0
    %2375 = vmatprep.subr.mxu0 0.0
    %2376 = vmatpush1.msra.mxu0 0.0
    %2377 = vmatprep.subr.mxu0 0.0
    %2378 = vmatpush1.msra.mxu0 0.0
    %2379 = vmatprep.subr.mxu0 0.0
    %2380 = vmatpush1.msra.mxu0 0.0
    %2381 = vmatprep.subr.mxu0 0.0
    %2382 = vmatpush1.msra.mxu0 0.0
    %2383 = vmatprep.subr.mxu0 0.0
    %2384 = vmatpush1.msra.mxu0 0.0
    %2385 = vmatprep.subr.mxu0 0.0
    %2386 = vmatpush1.msra.mxu0 0.0
    %2387 = vmatprep.subr.mxu0 0.0
    %2388 = vmatpush1.msra.mxu0 0.0
    %2389 = vmatprep.subr.mxu0 0.0
    %2390 = vmatpush1.msra.mxu0 0.0
    %2391 = vmatprep.subr.mxu0 %v2353
    %2392 = vmatpush1.msra.mxu0 %v2352
    %2393 = vmatprep.subr.mxu0 0.0
    %2394 = vmatpush2.msra.mxu0 0.0
    %2395 = vmatprep.subr.mxu0 0.0
    %2396 = vmatpush2.msra.mxu0 0.0
    %2397 = vmatprep.subr.mxu0 0.0
    %2398 = vmatpush2.msra.mxu0 0.0
    %2399 = vmatprep.subr.mxu0 0.0
    %2400 = vmatpush2.msra.mxu0 0.0
    %2401 = vmatprep.subr.mxu0 0.0
    %2402 = vmatpush2.msra.mxu0 0.0
    %2403 = vmatprep.subr.mxu0 0.0
    %2404 = vmatpush2.msra.mxu0 0.0
    %2405 = vmatprep.subr.mxu0 0.0
    %2406 = vmatpush2.msra.mxu0 0.0
    %2407 = vmatprep.subr.mxu0 0.0
    %2408 = vmatpush2.msra.mxu0 0.0
    %2409 = vmatprep.subr.mxu0 0.0
    %2410 = vmatpush2.msra.mxu0 0.0
    %2411 = vmatprep.subr.mxu0 0.0
    %2412 = vmatpush2.msra.mxu0 0.0
    %2413 = vmatprep.subr.mxu0 0.0
    %2414 = vmatpush2.msra.mxu0 0.0
    %2415 = vmatprep.subr.mxu0 0.0
    %2416 = vmatpush2.msra.mxu0 0.0
    %2417 = vmatprep.subr.mxu0 0.0
    %2418 = vmatpush2.msra.mxu0 0.0
    %2419 = vmatprep.subr.mxu0 0.0
    %2420 = vmatpush2.msra.mxu0 0.0
    %2421 = vmatprep.subr.mxu0 0.0
    %2422 = vmatpush2.msra.mxu0 0.0
    %2423 = vmatprep.subr.mxu0 0.0
    %2424 = vmatpush2.msra.mxu0 0.0
    %2425 = vmatprep.mubr.f32.mxu0 0.0
    %2426 = vmatmul.mubr.f32.gmra.mxu0 %v2359
    %v2427 = vpop.f32.mrf.mxu0
    %v2428 = vadd.f32 0.0, %v2427
    %v2429 = vpop.f32.mrf.mxu0
    %v2430 = vadd.f32 0.0, %v2429
    %2431 = vdwg.mxu0
    %2432 = vmatprep.subr.mxu0 0.0
    %2433 = vmatpush1.msra.mxu0 0.0
    %2434 = vmatprep.subr.mxu0 0.0
    %2435 = vmatpush1.msra.mxu0 0.0
    %2436 = vmatprep.subr.mxu0 0.0
    %2437 = vmatpush1.msra.mxu0 0.0
    %2438 = vmatprep.subr.mxu0 0.0
    %2439 = vmatpush1.msra.mxu0 0.0
    %2440 = vmatprep.subr.mxu0 0.0
    %2441 = vmatpush1.msra.mxu0 0.0
    %2442 = vmatprep.subr.mxu0 0.0
    %2443 = vmatpush1.msra.mxu0 0.0
    %2444 = vmatprep.subr.mxu0 0.0
    %2445 = vmatpush1.msra.mxu0 0.0
    %2446 = vmatprep.subr.mxu0 0.0
    %2447 = vmatpush1.msra.mxu0 0.0
    %2448 = vmatprep.subr.mxu0 0.0
    %2449 = vmatpush1.msra.mxu0 0.0
    %2450 = vmatprep.subr.mxu0 0.0
    %2451 = vmatpush1.msra.mxu0 0.0
    %2452 = vmatprep.subr.mxu0 0.0
    %2453 = vmatpush1.msra.mxu0 0.0
    %2454 = vmatprep.subr.mxu0 0.0
    %2455 = vmatpush1.msra.mxu0 0.0
    %2456 = vmatprep.subr.mxu0 0.0
    %2457 = vmatpush1.msra.mxu0 0.0
    %2458 = vmatprep.subr.mxu0 0.0
    %2459 = vmatpush1.msra.mxu0 0.0
    %2460 = vmatprep.subr.mxu0 0.0
    %2461 = vmatpush1.msra.mxu0 0.0
    %2462 = vmatprep.subr.mxu0 0.0
    %2463 = vmatpush1.msra.mxu0 %v2354
    %2464 = vmatprep.subr.mxu0 0.0
    %2465 = vmatpush2.msra.mxu0 0.0
    %2466 = vmatprep.subr.mxu0 0.0
    %2467 = vmatpush2.msra.mxu0 0.0
    %2468 = vmatprep.subr.mxu0 0.0
    %2469 = vmatpush2.msra.mxu0 0.0
    %2470 = vmatprep.subr.mxu0 0.0
    %2471 = vmatpush2.msra.mxu0 0.0
    %2472 = vmatprep.subr.mxu0 0.0
    %2473 = vmatpush2.msra.mxu0 0.0
    %2474 = vmatprep.subr.mxu0 0.0
    %2475 = vmatpush2.msra.mxu0 0.0
    %2476 = vmatprep.subr.mxu0 0.0
    %2477 = vmatpush2.msra.mxu0 0.0
    %2478 = vmatprep.subr.mxu0 0.0
    %2479 = vmatpush2.msra.mxu0 0.0
    %2480 = vmatprep.subr.mxu0 0.0
    %2481 = vmatpush2.msra.mxu0 0.0
    %2482 = vmatprep.subr.mxu0 0.0
    %2483 = vmatpush2.msra.mxu0 0.0
    %2484 = vmatprep.subr.mxu0 0.0
    %2485 = vmatpush2.msra.mxu0 0.0
    %2486 = vmatprep.subr.mxu0 0.0
    %2487 = vmatpush2.msra.mxu0 0.0
    %2488 = vmatprep.subr.mxu0 0.0
    %2489 = vmatpush2.msra.mxu0 0.0
    %2490 = vmatprep.subr.mxu0 0.0
    %2491 = vmatpush2.msra.mxu0 0.0
    %2492 = vmatprep.subr.mxu0 0.0
    %2493 = vmatpush2.msra.mxu0 0.0
    %2494 = vmatprep.subr.mxu0 0.0
    %2495 = vmatpush2.msra.mxu0 0.0
    %2496 = vmatprep.mubr.f32.mxu0 0.0
    %2497 = vmatmul.mubr.f32.gmra.mxu0 %v2359
    %v2498 = vpop.f32.mrf.mxu0
    %v2499 = vadd.f32 0.0, %v2498
    %v2500 = vpop.f32.mrf.mxu0
    %2501 = vdwg.mxu0
    %v2502 = vadd.f32 %v2331, %v2428
    %v2503 = vadd.f32 %v2332, %v2430
    %v2504 = vadd.f32 %v2333, %v2499
    %s2505 = scalar_lea.vmem %s4, 48
    %v2506 = vld [vmem:[%s2505] sm:$0xff]
    %2507 = vrot.lane.b32.xlu0 %v2334, 111
    %v2508 = vpop.permute.xlu0 %2507
    %2509 = vrot.lane.b32.xlu0 %v2335, 111
    %v2510 = vpop.permute.xlu0 %2509
    %2511 = vrot.lane.b32.xlu0 %v2336, 111
    %v2512 = vpop.permute.xlu0 %2511
    %2513 = vrot.lane.b32.xlu0 %v2337, 111
    %v2514 = vpop.permute.xlu0 %2513
    %v2515 = vsel %vm1014, %v2508, %v2510
    %v2516 = vsel %vm1014, %v2510, %v2512
    %v2517 = vsel %vm1014, %v2512, %v2514
    %v2522 = vsel %vm51, %v2506, 0
    %2524 = vmatprep.subr.mxu0 0.0
    %2525 = vmatpush1.msra.mxu0 0.0
    %2526 = vmatprep.subr.mxu0 0.0
    %2527 = vmatpush1.msra.mxu0 0.0
    %2528 = vmatprep.subr.mxu0 0.0
    %2529 = vmatpush1.msra.mxu0 0.0
    %2530 = vmatprep.subr.mxu0 0.0
    %2531 = vmatpush1.msra.mxu0 0.0
    %2532 = vmatprep.subr.mxu0 0.0
    %2533 = vmatpush1.msra.mxu0 0.0
    %2534 = vmatprep.subr.mxu0 0.0
    %2535 = vmatpush1.msra.mxu0 0.0
    %2536 = vmatprep.subr.mxu0 0.0
    %2537 = vmatpush1.msra.mxu0 0.0
    %2538 = vmatprep.subr.mxu0 0.0
    %2539 = vmatpush1.msra.mxu0 0.0
    %2540 = vmatprep.subr.mxu0 0.0
    %2541 = vmatpush1.msra.mxu0 0.0
    %2542 = vmatprep.subr.mxu0 0.0
    %2543 = vmatpush1.msra.mxu0 0.0
    %2544 = vmatprep.subr.mxu0 0.0
    %2545 = vmatpush1.msra.mxu0 0.0
    %2546 = vmatprep.subr.mxu0 0.0
    %2547 = vmatpush1.msra.mxu0 0.0
    %2548 = vmatprep.subr.mxu0 0.0
    %2549 = vmatpush1.msra.mxu0 0.0
    %2550 = vmatprep.subr.mxu0 0.0
    %2551 = vmatpush1.msra.mxu0 0.0
    %2552 = vmatprep.subr.mxu0 0.0
    %2553 = vmatpush1.msra.mxu0 0.0
    %2554 = vmatprep.subr.mxu0 %v2516
    %2555 = vmatpush1.msra.mxu0 %v2515
    %2556 = vmatprep.subr.mxu0 0.0
    %2557 = vmatpush2.msra.mxu0 0.0
    %2558 = vmatprep.subr.mxu0 0.0
    %2559 = vmatpush2.msra.mxu0 0.0
    %2560 = vmatprep.subr.mxu0 0.0
    %2561 = vmatpush2.msra.mxu0 0.0
    %2562 = vmatprep.subr.mxu0 0.0
    %2563 = vmatpush2.msra.mxu0 0.0
    %2564 = vmatprep.subr.mxu0 0.0
    %2565 = vmatpush2.msra.mxu0 0.0
    %2566 = vmatprep.subr.mxu0 0.0
    %2567 = vmatpush2.msra.mxu0 0.0
    %2568 = vmatprep.subr.mxu0 0.0
    %2569 = vmatpush2.msra.mxu0 0.0
    %2570 = vmatprep.subr.mxu0 0.0
    %2571 = vmatpush2.msra.mxu0 0.0
    %2572 = vmatprep.subr.mxu0 0.0
    %2573 = vmatpush2.msra.mxu0 0.0
    %2574 = vmatprep.subr.mxu0 0.0
    %2575 = vmatpush2.msra.mxu0 0.0
    %2576 = vmatprep.subr.mxu0 0.0
    %2577 = vmatpush2.msra.mxu0 0.0
    %2578 = vmatprep.subr.mxu0 0.0
    %2579 = vmatpush2.msra.mxu0 0.0
    %2580 = vmatprep.subr.mxu0 0.0
    %2581 = vmatpush2.msra.mxu0 0.0
    %2582 = vmatprep.subr.mxu0 0.0
    %2583 = vmatpush2.msra.mxu0 0.0
    %2584 = vmatprep.subr.mxu0 0.0
    %2585 = vmatpush2.msra.mxu0 0.0
    %2586 = vmatprep.subr.mxu0 0.0
    %2587 = vmatpush2.msra.mxu0 0.0
    %2588 = vmatprep.mubr.f32.mxu0 0.0
    %2589 = vmatmul.mubr.f32.gmra.mxu0 %v2522
    %v2590 = vpop.f32.mrf.mxu0
    %v2591 = vadd.f32 0.0, %v2590
    %v2592 = vpop.f32.mrf.mxu0
    %v2593 = vadd.f32 0.0, %v2592
    %2594 = vdwg.mxu0
    %2595 = vmatprep.subr.mxu0 0.0
    %2596 = vmatpush1.msra.mxu0 0.0
    %2597 = vmatprep.subr.mxu0 0.0
    %2598 = vmatpush1.msra.mxu0 0.0
    %2599 = vmatprep.subr.mxu0 0.0
    %2600 = vmatpush1.msra.mxu0 0.0
    %2601 = vmatprep.subr.mxu0 0.0
    %2602 = vmatpush1.msra.mxu0 0.0
    %2603 = vmatprep.subr.mxu0 0.0
    %2604 = vmatpush1.msra.mxu0 0.0
    %2605 = vmatprep.subr.mxu0 0.0
    %2606 = vmatpush1.msra.mxu0 0.0
    %2607 = vmatprep.subr.mxu0 0.0
    %2608 = vmatpush1.msra.mxu0 0.0
    %2609 = vmatprep.subr.mxu0 0.0
    %2610 = vmatpush1.msra.mxu0 0.0
    %2611 = vmatprep.subr.mxu0 0.0
    %2612 = vmatpush1.msra.mxu0 0.0
    %2613 = vmatprep.subr.mxu0 0.0
    %2614 = vmatpush1.msra.mxu0 0.0
    %2615 = vmatprep.subr.mxu0 0.0
    %2616 = vmatpush1.msra.mxu0 0.0
    %2617 = vmatprep.subr.mxu0 0.0
    %2618 = vmatpush1.msra.mxu0 0.0
    %2619 = vmatprep.subr.mxu0 0.0
    %2620 = vmatpush1.msra.mxu0 0.0
    %2621 = vmatprep.subr.mxu0 0.0
    %2622 = vmatpush1.msra.mxu0 0.0
    %2623 = vmatprep.subr.mxu0 0.0
    %2624 = vmatpush1.msra.mxu0 0.0
    %2625 = vmatprep.subr.mxu0 0.0
    %2626 = vmatpush1.msra.mxu0 %v2517
    %2627 = vmatprep.subr.mxu0 0.0
    %2628 = vmatpush2.msra.mxu0 0.0
    %2629 = vmatprep.subr.mxu0 0.0
    %2630 = vmatpush2.msra.mxu0 0.0
    %2631 = vmatprep.subr.mxu0 0.0
    %2632 = vmatpush2.msra.mxu0 0.0
    %2633 = vmatprep.subr.mxu0 0.0
    %2634 = vmatpush2.msra.mxu0 0.0
    %2635 = vmatprep.subr.mxu0 0.0
    %2636 = vmatpush2.msra.mxu0 0.0
    %2637 = vmatprep.subr.mxu0 0.0
    %2638 = vmatpush2.msra.mxu0 0.0
    %2639 = vmatprep.subr.mxu0 0.0
    %2640 = vmatpush2.msra.mxu0 0.0
    %2641 = vmatprep.subr.mxu0 0.0
    %2642 = vmatpush2.msra.mxu0 0.0
    %2643 = vmatprep.subr.mxu0 0.0
    %2644 = vmatpush2.msra.mxu0 0.0
    %2645 = vmatprep.subr.mxu0 0.0
    %2646 = vmatpush2.msra.mxu0 0.0
    %2647 = vmatprep.subr.mxu0 0.0
    %2648 = vmatpush2.msra.mxu0 0.0
    %2649 = vmatprep.subr.mxu0 0.0
    %2650 = vmatpush2.msra.mxu0 0.0
    %2651 = vmatprep.subr.mxu0 0.0
    %2652 = vmatpush2.msra.mxu0 0.0
    %2653 = vmatprep.subr.mxu0 0.0
    %2654 = vmatpush2.msra.mxu0 0.0
    %2655 = vmatprep.subr.mxu0 0.0
    %2656 = vmatpush2.msra.mxu0 0.0
    %2657 = vmatprep.subr.mxu0 0.0
    %2658 = vmatpush2.msra.mxu0 0.0
    %2659 = vmatprep.mubr.f32.mxu0 0.0
    %2660 = vmatmul.mubr.f32.gmra.mxu0 %v2522
    %v2661 = vpop.f32.mrf.mxu0
    %v2662 = vadd.f32 0.0, %v2661
    %v2663 = vpop.f32.mrf.mxu0
    %2664 = vdwg.mxu0
    %v2665 = vadd.f32 %v2502, %v2591
    %v2666 = vadd.f32 %v2503, %v2593
    %v2667 = vadd.f32 %v2504, %v2662
    %s2668 = scalar_lea.vmem %s4, 56
    %v2669 = vld [vmem:[%s2668] sm:$0xff]
    %2670 = vrot.lane.b32.xlu0 %v2334, 110
    %v2671 = vpop.permute.xlu0 %2670
    %2672 = vrot.lane.b32.xlu0 %v2335, 110
    %v2673 = vpop.permute.xlu0 %2672
    %2674 = vrot.lane.b32.xlu0 %v2336, 110
    %v2675 = vpop.permute.xlu0 %2674
    %2676 = vrot.lane.b32.xlu0 %v2337, 110
    %v2677 = vpop.permute.xlu0 %2676
    %v2678 = vsel %vm1178, %v2671, %v2673
    %v2679 = vsel %vm1178, %v2673, %v2675
    %v2680 = vsel %vm1178, %v2675, %v2677
    %v2685 = vsel %vm51, %v2669, 0
    %2687 = vmatprep.subr.mxu0 0.0
    %2688 = vmatpush1.msra.mxu0 0.0
    %2689 = vmatprep.subr.mxu0 0.0
    %2690 = vmatpush1.msra.mxu0 0.0
    %2691 = vmatprep.subr.mxu0 0.0
    %2692 = vmatpush1.msra.mxu0 0.0
    %2693 = vmatprep.subr.mxu0 0.0
    %2694 = vmatpush1.msra.mxu0 0.0
    %2695 = vmatprep.subr.mxu0 0.0
    %2696 = vmatpush1.msra.mxu0 0.0
    %2697 = vmatprep.subr.mxu0 0.0
    %2698 = vmatpush1.msra.mxu0 0.0
    %2699 = vmatprep.subr.mxu0 0.0
    %2700 = vmatpush1.msra.mxu0 0.0
    %2701 = vmatprep.subr.mxu0 0.0
    %2702 = vmatpush1.msra.mxu0 0.0
    %2703 = vmatprep.subr.mxu0 0.0
    %2704 = vmatpush1.msra.mxu0 0.0
    %2705 = vmatprep.subr.mxu0 0.0
    %2706 = vmatpush1.msra.mxu0 0.0
    %2707 = vmatprep.subr.mxu0 0.0
    %2708 = vmatpush1.msra.mxu0 0.0
    %2709 = vmatprep.subr.mxu0 0.0
    %2710 = vmatpush1.msra.mxu0 0.0
    %2711 = vmatprep.subr.mxu0 0.0
    %2712 = vmatpush1.msra.mxu0 0.0
    %2713 = vmatprep.subr.mxu0 0.0
    %2714 = vmatpush1.msra.mxu0 0.0
    %2715 = vmatprep.subr.mxu0 0.0
    %2716 = vmatpush1.msra.mxu0 0.0
    %2717 = vmatprep.subr.mxu0 %v2679
    %2718 = vmatpush1.msra.mxu0 %v2678
    %2719 = vmatprep.subr.mxu0 0.0
    %2720 = vmatpush2.msra.mxu0 0.0
    %2721 = vmatprep.subr.mxu0 0.0
    %2722 = vmatpush2.msra.mxu0 0.0
    %2723 = vmatprep.subr.mxu0 0.0
    %2724 = vmatpush2.msra.mxu0 0.0
    %2725 = vmatprep.subr.mxu0 0.0
    %2726 = vmatpush2.msra.mxu0 0.0
    %2727 = vmatprep.subr.mxu0 0.0
    %2728 = vmatpush2.msra.mxu0 0.0
    %2729 = vmatprep.subr.mxu0 0.0
    %2730 = vmatpush2.msra.mxu0 0.0
    %2731 = vmatprep.subr.mxu0 0.0
    %2732 = vmatpush2.msra.mxu0 0.0
    %2733 = vmatprep.subr.mxu0 0.0
    %2734 = vmatpush2.msra.mxu0 0.0
    %2735 = vmatprep.subr.mxu0 0.0
    %2736 = vmatpush2.msra.mxu0 0.0
    %2737 = vmatprep.subr.mxu0 0.0
    %2738 = vmatpush2.msra.mxu0 0.0
    %2739 = vmatprep.subr.mxu0 0.0
    %2740 = vmatpush2.msra.mxu0 0.0
    %2741 = vmatprep.subr.mxu0 0.0
    %2742 = vmatpush2.msra.mxu0 0.0
    %2743 = vmatprep.subr.mxu0 0.0
    %2744 = vmatpush2.msra.mxu0 0.0
    %2745 = vmatprep.subr.mxu0 0.0
    %2746 = vmatpush2.msra.mxu0 0.0
    %2747 = vmatprep.subr.mxu0 0.0
    %2748 = vmatpush2.msra.mxu0 0.0
    %2749 = vmatprep.subr.mxu0 0.0
    %2750 = vmatpush2.msra.mxu0 0.0
    %2751 = vmatprep.mubr.f32.mxu0 0.0
    %2752 = vmatmul.mubr.f32.gmra.mxu0 %v2685
    %v2753 = vpop.f32.mrf.mxu0
    %v2754 = vadd.f32 0.0, %v2753
    %v2755 = vpop.f32.mrf.mxu0
    %v2756 = vadd.f32 0.0, %v2755
    %2757 = vdwg.mxu0
    %2758 = vmatprep.subr.mxu0 0.0
    %2759 = vmatpush1.msra.mxu0 0.0
    %2760 = vmatprep.subr.mxu0 0.0
    %2761 = vmatpush1.msra.mxu0 0.0
    %2762 = vmatprep.subr.mxu0 0.0
    %2763 = vmatpush1.msra.mxu0 0.0
    %2764 = vmatprep.subr.mxu0 0.0
    %2765 = vmatpush1.msra.mxu0 0.0
    %2766 = vmatprep.subr.mxu0 0.0
    %2767 = vmatpush1.msra.mxu0 0.0
    %2768 = vmatprep.subr.mxu0 0.0
    %2769 = vmatpush1.msra.mxu0 0.0
    %2770 = vmatprep.subr.mxu0 0.0
    %2771 = vmatpush1.msra.mxu0 0.0
    %2772 = vmatprep.subr.mxu0 0.0
    %2773 = vmatpush1.msra.mxu0 0.0
    %2774 = vmatprep.subr.mxu0 0.0
    %2775 = vmatpush1.msra.mxu0 0.0
    %2776 = vmatprep.subr.mxu0 0.0
    %2777 = vmatpush1.msra.mxu0 0.0
    %2778 = vmatprep.subr.mxu0 0.0
    %2779 = vmatpush1.msra.mxu0 0.0
    %2780 = vmatprep.subr.mxu0 0.0
    %2781 = vmatpush1.msra.mxu0 0.0
    %2782 = vmatprep.subr.mxu0 0.0
    %2783 = vmatpush1.msra.mxu0 0.0
    %2784 = vmatprep.subr.mxu0 0.0
    %2785 = vmatpush1.msra.mxu0 0.0
    %2786 = vmatprep.subr.mxu0 0.0
    %2787 = vmatpush1.msra.mxu0 0.0
    %2788 = vmatprep.subr.mxu0 0.0
    %2789 = vmatpush1.msra.mxu0 %v2680
    %2790 = vmatprep.subr.mxu0 0.0
    %2791 = vmatpush2.msra.mxu0 0.0
    %2792 = vmatprep.subr.mxu0 0.0
    %2793 = vmatpush2.msra.mxu0 0.0
    %2794 = vmatprep.subr.mxu0 0.0
    %2795 = vmatpush2.msra.mxu0 0.0
    %2796 = vmatprep.subr.mxu0 0.0
    %2797 = vmatpush2.msra.mxu0 0.0
    %2798 = vmatprep.subr.mxu0 0.0
    %2799 = vmatpush2.msra.mxu0 0.0
    %2800 = vmatprep.subr.mxu0 0.0
    %2801 = vmatpush2.msra.mxu0 0.0
    %2802 = vmatprep.subr.mxu0 0.0
    %2803 = vmatpush2.msra.mxu0 0.0
    %2804 = vmatprep.subr.mxu0 0.0
    %2805 = vmatpush2.msra.mxu0 0.0
    %2806 = vmatprep.subr.mxu0 0.0
    %2807 = vmatpush2.msra.mxu0 0.0
    %2808 = vmatprep.subr.mxu0 0.0
    %2809 = vmatpush2.msra.mxu0 0.0
    %2810 = vmatprep.subr.mxu0 0.0
    %2811 = vmatpush2.msra.mxu0 0.0
    %2812 = vmatprep.subr.mxu0 0.0
    %2813 = vmatpush2.msra.mxu0 0.0
    %2814 = vmatprep.subr.mxu0 0.0
    %2815 = vmatpush2.msra.mxu0 0.0
    %2816 = vmatprep.subr.mxu0 0.0
    %2817 = vmatpush2.msra.mxu0 0.0
    %2818 = vmatprep.subr.mxu0 0.0
    %2819 = vmatpush2.msra.mxu0 0.0
    %2820 = vmatprep.subr.mxu0 0.0
    %2821 = vmatpush2.msra.mxu0 0.0
    %2822 = vmatprep.mubr.f32.mxu0 0.0
    %2823 = vmatmul.mubr.f32.gmra.mxu0 %v2685
    %v2824 = vpop.f32.mrf.mxu0
    %v2825 = vadd.f32 0.0, %v2824
    %v2826 = vpop.f32.mrf.mxu0
    %2827 = vdwg.mxu0
    %v2828 = vadd.f32 %v2665, %v2754
    %v2829 = vadd.f32 %v2666, %v2756
    %v2830 = vadd.f32 %v2667, %v2825
    %s2831 = scalar_lea.vmem %s4, 64
    %v2832 = vld [vmem:[%s2831] sm:$0xff]
    %2833 = vrot.lane.b32.xlu0 %v2334, 109
    %v2834 = vpop.permute.xlu0 %2833
    %2835 = vrot.lane.b32.xlu0 %v2335, 109
    %v2836 = vpop.permute.xlu0 %2835
    %2837 = vrot.lane.b32.xlu0 %v2336, 109
    %v2838 = vpop.permute.xlu0 %2837
    %2839 = vrot.lane.b32.xlu0 %v2337, 109
    %v2840 = vpop.permute.xlu0 %2839
    %v2841 = vsel %vm1342, %v2834, %v2836
    %v2842 = vsel %vm1342, %v2836, %v2838
    %v2843 = vsel %vm1342, %v2838, %v2840
    %v2848 = vsel %vm51, %v2832, 0
    %2850 = vmatprep.subr.mxu0 0.0
    %2851 = vmatpush1.msra.mxu0 0.0
    %2852 = vmatprep.subr.mxu0 0.0
    %2853 = vmatpush1.msra.mxu0 0.0
    %2854 = vmatprep.subr.mxu0 0.0
    %2855 = vmatpush1.msra.mxu0 0.0
    %2856 = vmatprep.subr.mxu0 0.0
    %2857 = vmatpush1.msra.mxu0 0.0
    %2858 = vmatprep.subr.mxu0 0.0
    %2859 = vmatpush1.msra.mxu0 0.0
    %2860 = vmatprep.subr.mxu0 0.0
    %2861 = vmatpush1.msra.mxu0 0.0
    %2862 = vmatprep.subr.mxu0 0.0
    %2863 = vmatpush1.msra.mxu0 0.0
    %2864 = vmatprep.subr.mxu0 0.0
    %2865 = vmatpush1.msra.mxu0 0.0
    %2866 = vmatprep.subr.mxu0 0.0
    %2867 = vmatpush1.msra.mxu0 0.0
    %2868 = vmatprep.subr.mxu0 0.0
    %2869 = vmatpush1.msra.mxu0 0.0
    %2870 = vmatprep.subr.mxu0 0.0
    %2871 = vmatpush1.msra.mxu0 0.0
    %2872 = vmatprep.subr.mxu0 0.0
    %2873 = vmatpush1.msra.mxu0 0.0
    %2874 = vmatprep.subr.mxu0 0.0
    %2875 = vmatpush1.msra.mxu0 0.0
    %2876 = vmatprep.subr.mxu0 0.0
    %2877 = vmatpush1.msra.mxu0 0.0
    %2878 = vmatprep.subr.mxu0 0.0
    %2879 = vmatpush1.msra.mxu0 0.0
    %2880 = vmatprep.subr.mxu0 %v2842
    %2881 = vmatpush1.msra.mxu0 %v2841
    %2882 = vmatprep.subr.mxu0 0.0
    %2883 = vmatpush2.msra.mxu0 0.0
    %2884 = vmatprep.subr.mxu0 0.0
    %2885 = vmatpush2.msra.mxu0 0.0
    %2886 = vmatprep.subr.mxu0 0.0
    %2887 = vmatpush2.msra.mxu0 0.0
    %2888 = vmatprep.subr.mxu0 0.0
    %2889 = vmatpush2.msra.mxu0 0.0
    %2890 = vmatprep.subr.mxu0 0.0
    %2891 = vmatpush2.msra.mxu0 0.0
    %2892 = vmatprep.subr.mxu0 0.0
    %2893 = vmatpush2.msra.mxu0 0.0
    %2894 = vmatprep.subr.mxu0 0.0
    %2895 = vmatpush2.msra.mxu0 0.0
    %2896 = vmatprep.subr.mxu0 0.0
    %2897 = vmatpush2.msra.mxu0 0.0
    %2898 = vmatprep.subr.mxu0 0.0
    %2899 = vmatpush2.msra.mxu0 0.0
    %2900 = vmatprep.subr.mxu0 0.0
    %2901 = vmatpush2.msra.mxu0 0.0
    %2902 = vmatprep.subr.mxu0 0.0
    %2903 = vmatpush2.msra.mxu0 0.0
    %2904 = vmatprep.subr.mxu0 0.0
    %2905 = vmatpush2.msra.mxu0 0.0
    %2906 = vmatprep.subr.mxu0 0.0
    %2907 = vmatpush2.msra.mxu0 0.0
    %2908 = vmatprep.subr.mxu0 0.0
    %2909 = vmatpush2.msra.mxu0 0.0
    %2910 = vmatprep.subr.mxu0 0.0
    %2911 = vmatpush2.msra.mxu0 0.0
    %2912 = vmatprep.subr.mxu0 0.0
    %2913 = vmatpush2.msra.mxu0 0.0
    %2914 = vmatprep.mubr.f32.mxu0 0.0
    %2915 = vmatmul.mubr.f32.gmra.mxu0 %v2848
    %v2916 = vpop.f32.mrf.mxu0
    %v2917 = vadd.f32 0.0, %v2916
    %v2918 = vpop.f32.mrf.mxu0
    %v2919 = vadd.f32 0.0, %v2918
    %2920 = vdwg.mxu0
    %2921 = vmatprep.subr.mxu0 0.0
    %2922 = vmatpush1.msra.mxu0 0.0
    %2923 = vmatprep.subr.mxu0 0.0
    %2924 = vmatpush1.msra.mxu0 0.0
    %2925 = vmatprep.subr.mxu0 0.0
    %2926 = vmatpush1.msra.mxu0 0.0
    %2927 = vmatprep.subr.mxu0 0.0
    %2928 = vmatpush1.msra.mxu0 0.0
    %2929 = vmatprep.subr.mxu0 0.0
    %2930 = vmatpush1.msra.mxu0 0.0
    %2931 = vmatprep.subr.mxu0 0.0
    %2932 = vmatpush1.msra.mxu0 0.0
    %2933 = vmatprep.subr.mxu0 0.0
    %2934 = vmatpush1.msra.mxu0 0.0
    %2935 = vmatprep.subr.mxu0 0.0
    %2936 = vmatpush1.msra.mxu0 0.0
    %2937 = vmatprep.subr.mxu0 0.0
    %2938 = vmatpush1.msra.mxu0 0.0
    %2939 = vmatprep.subr.mxu0 0.0
    %2940 = vmatpush1.msra.mxu0 0.0
    %2941 = vmatprep.subr.mxu0 0.0
    %2942 = vmatpush1.msra.mxu0 0.0
    %2943 = vmatprep.subr.mxu0 0.0
    %2944 = vmatpush1.msra.mxu0 0.0
    %2945 = vmatprep.subr.mxu0 0.0
    %2946 = vmatpush1.msra.mxu0 0.0
    %2947 = vmatprep.subr.mxu0 0.0
    %2948 = vmatpush1.msra.mxu0 0.0
    %2949 = vmatprep.subr.mxu0 0.0
    %2950 = vmatpush1.msra.mxu0 0.0
    %2951 = vmatprep.subr.mxu0 0.0
    %2952 = vmatpush1.msra.mxu0 %v2843
    %2953 = vmatprep.subr.mxu0 0.0
    %2954 = vmatpush2.msra.mxu0 0.0
    %2955 = vmatprep.subr.mxu0 0.0
    %2956 = vmatpush2.msra.mxu0 0.0
    %2957 = vmatprep.subr.mxu0 0.0
    %2958 = vmatpush2.msra.mxu0 0.0
    %2959 = vmatprep.subr.mxu0 0.0
    %2960 = vmatpush2.msra.mxu0 0.0
    %2961 = vmatprep.subr.mxu0 0.0
    %2962 = vmatpush2.msra.mxu0 0.0
    %2963 = vmatprep.subr.mxu0 0.0
    %2964 = vmatpush2.msra.mxu0 0.0
    %2965 = vmatprep.subr.mxu0 0.0
    %2966 = vmatpush2.msra.mxu0 0.0
    %2967 = vmatprep.subr.mxu0 0.0
    %2968 = vmatpush2.msra.mxu0 0.0
    %2969 = vmatprep.subr.mxu0 0.0
    %2970 = vmatpush2.msra.mxu0 0.0
    %2971 = vmatprep.subr.mxu0 0.0
    %2972 = vmatpush2.msra.mxu0 0.0
    %2973 = vmatprep.subr.mxu0 0.0
    %2974 = vmatpush2.msra.mxu0 0.0
    %2975 = vmatprep.subr.mxu0 0.0
    %2976 = vmatpush2.msra.mxu0 0.0
    %2977 = vmatprep.subr.mxu0 0.0
    %2978 = vmatpush2.msra.mxu0 0.0
    %2979 = vmatprep.subr.mxu0 0.0
    %2980 = vmatpush2.msra.mxu0 0.0
    %2981 = vmatprep.subr.mxu0 0.0
    %2982 = vmatpush2.msra.mxu0 0.0
    %2983 = vmatprep.subr.mxu0 0.0
    %2984 = vmatpush2.msra.mxu0 0.0
    %2985 = vmatprep.mubr.f32.mxu0 0.0
    %2986 = vmatmul.mubr.f32.gmra.mxu0 %v2848
    %v2987 = vpop.f32.mrf.mxu0
    %v2988 = vadd.f32 0.0, %v2987
    %v2989 = vpop.f32.mrf.mxu0
    %2990 = vdwg.mxu0
    %v2991 = vadd.f32 %v2828, %v2917
    %v2992 = vadd.f32 %v2829, %v2919
    %v2993 = vadd.f32 %v2830, %v2988
    %v2994 = vld [vmem:[%s0 + $0x8] sm:$0xff]
    %v2995 = vld [vmem:[%s0 + $0x10] sm:$0xff]
    %v2996 = vld [vmem:[%s0 + $0x18] sm:$0xff]
    %v2997 = vld [vmem:[%s5] sm:$0xff]
    %2999 = vset.pattern.permute.xlu0 0
    %3000 = vperm.xlu0 %2999, %v2997
    %v3001 = vpop.permute.xlu0 %3000
    %v3003 = vadd.f32 %v2991, %v3001
    %v3004 = vadd.f32 %v2992, %v3001
    %v3005 = vadd.f32 %v2993, %v3001
    %v3006 = vadd.f32 %v3003, %v2994
    %v3007 = vadd.f32 %v3004, %v2995
    %v3008 = vadd.f32 %v3005, %v2996
    %v3009 = vmax.f32 %v3006, 0.0
    %v3010 = vmax.f32 %v3007, 0.0
    %v3011 = vmax.f32 %v3008, 0.0
    %3012 = vst [vmem:[#allocation3] sm:$0xff] %v3009
    %3013 = vst [vmem:[#allocation3 + $0x8] sm:$0xff] %v3010
    %3014 = vst [vmem:[#allocation3 + $0x10] sm:$0xff] %v3011
    // Predicated region
    $region26: #{tpu_custom_call.1} parent=1 // pred_check
      _
    $region27: #{tpu_custom_call.1} parent=1 // pred_check_branch
      %3016 = sbr.rel (0) target = $region29
    $region28: #{tpu_custom_call.1} parent=1 // pred_region
      %s3018 = ssub.s32 384, 384
      %3019 = vsyncadd [#allocation4], %s3018
      %s3021 = sshll.u32 [#allocation3], 4
      %s3022 = int_to_ptr.vmem [resolvable:$true] %s3021
      %3024 = dma.vmem_to_hbm [thread:$0]  %s3022, 384, %s6, [#allocation4]
    $region29: #{tpu_custom_call.1} parent=1 // pred_fallthru
      _
    // Predicated region
    $region30: #{tpu_custom_call.1} parent=1 // pred_check
      _
    $region31: #{tpu_custom_call.1} parent=1 // pred_check_branch
      %3026 = sbr.rel (0) target = $region33
    $region32: #{tpu_custom_call.1} parent=1 // pred_region
      %3027 = dma.done [#allocation4], 384
    $region33: #{tpu_custom_call.1} parent=1 // pred_fallthru
      _
    %3028 = vsyncpa [#allocation4], 1

</llo_original>
